<compile_context>
chip_gen: v7x
topology: tpu7x:2x2x1
jax: 0.10.0
libtpu: 0.0.40
codegen_flags: <defaults>
</compile_context>

<pallas_src>
import functools

import jax
import jax.numpy as jnp
from jax.experimental import pallas as pl
from jax.experimental.pallas import tpu as pltpu

_VMEM_LIMIT = 64 * 1024 * 1024        # scoped VMEM limit (v5e/v6e: 128 MiB phys, v7x: 64)
_VMEM_BAND_BUDGET = 40 * 1024 * 1024  # working-set budget used to size the band height


def _round_up(x, m):
    return ((x + m - 1) // m) * m


# ---------------------------------------------------------------------------
# Kernel 1: matmul + bias + ReLU  (the 1x1 "shuf" conv before PixelShuffle)
# ---------------------------------------------------------------------------
def _mm_bias_relu_kernel(x_ref, w_ref, b_ref, o_ref):
    acc = jnp.dot(x_ref[...], w_ref[...], preferred_element_type=jnp.float32)
    o_ref[...] = jnp.maximum(acc + b_ref[...], 0.0).astype(o_ref.dtype)


def _pick_tm(M, target):
    tm = max(8, min(_round_up(M, 8), _round_up(target, 8)))
    # Prefer >=2 grid steps so both v7x TensorCores get work.
    if M >= 16 and pl.cdiv(M, tm) < 2:
        tm = max(8, ((M // 2) // 8) * 8)
    return tm


def matmul_bias_relu(x, w, b, *, out_dtype=jnp.float32, tm=512):
    """relu(x @ w + b). x:(M,K), w:(K,N), b:(N,) f32. Handles ragged M by padding."""
    M, K = x.shape
    N = w.shape[1]
    tm = _pick_tm(M, tm)
    Mp = pl.cdiv(M, tm) * tm
    if Mp != M:
        x = jnp.pad(x, ((0, Mp - M), (0, 0)))
    out = pl.pallas_call(
        _mm_bias_relu_kernel,
        out_shape=jax.ShapeDtypeStruct((Mp, N), out_dtype),
        grid=(Mp // tm,),
        in_specs=[
            pl.BlockSpec((tm, K), lambda i: (i, 0)),
            pl.BlockSpec((K, N), lambda i: (0, 0)),
            pl.BlockSpec((1, N), lambda i: (0, 0)),
        ],
        out_specs=pl.BlockSpec((tm, N), lambda i: (i, 0)),
        compiler_params=pltpu.CompilerParams(
            dimension_semantics=("parallel",),
            vmem_limit_bytes=_VMEM_LIMIT),
    )(x, w, b.reshape(1, N))
    return out[:M] if Mp != M else out


# ---------------------------------------------------------------------------
# Kernel 2: fused  conv3x3 + ReLU + conv3x3 + ReLU  over bands of output rows.
#
# The concatenated/BN'd/ReLU'd input (cat_x) is prepared host-side, zero-padded
# to a sublane-aligned width Wp and flattened to (B*Hp*Wp, ni) in HBM.  Each
# grid step DMAs one band (bh+8 whole padded rows, incl. both conv halos) into
# VMEM, builds a K-folded im2col slab and runs ONE MXU matmul per conv.
# h1 never touches HBM; the halo/padding invalidity of h1 is handled by an
# iota-generated mask (conv2's SAME zero padding).
# ---------------------------------------------------------------------------
def _fused_double_conv_kernel(x_hbm, w1_ref, b1_ref, w2_ref, b2_ref, o_ref,
                              xin_scr, slab1_scr, h1_scr, slab2_scr, dma_sem,
                              *, Wp, bh, W2, H2, ni, nf, Q):
    b = pl.program_id(0)
    t = pl.program_id(1)
    Mb = (bh + 8) * Wp   # staged input rows this band (whole rows, conv1+conv2 halo)
    M1 = (bh + 4) * Wp   # h1 rows computed this band
    M2 = bh * Wp         # conv2 output rows this band

    # --- band DMA: HBM -> VMEM (VMEM scales with bh, not the full image) ---
    g0 = b * Q + t * (bh * Wp)
    cp = pltpu.make_async_copy(x_hbm.at[pl.ds(g0, Mb)], xin_scr, dma_sem.at[0])
    cp.start()
    cp.wait()
    # TODO(synk): double-buffer this band DMA (prefetch band t+1) to overlap it
    # with compute; currently the copy is synchronous per band.

    # --- conv1: K-folded im2col (K = 9*ni), ONE MXU matmul, no per-tap accumulator ---
    for k in range(9):
        s = (k // 3 + 1) * Wp + (k % 3) - 1          # static tap offset
        slab1_scr[:, k * ni:(k + 1) * ni] = xin_scr[s:s + M1, :]
    h1 = jnp.dot(slab1_scr[...], w1_ref[...], preferred_element_type=jnp.float32)
    h1 = jnp.maximum(h1 + b1_ref[...], 0.0).reshape(bh + 4, Wp, nf)

    # Zero h1 outside the valid H2 x W2 box (== conv2's SAME zero padding).
    # Masks are generated in-kernel from iotas; nothing mask-shaped is DMA'd.
    a_ids = jax.lax.broadcasted_iota(jnp.int32, (bh + 4, Wp, 1), 0) + t * bh
    c_ids = jax.lax.broadcasted_iota(jnp.int32, (bh + 4, Wp, 1), 1)
    valid = (a_ids >= 2) & (a_ids < H2 + 2) & (c_ids >= 2) & (c_ids < W2 + 2)
    h1_scr[...] = jnp.where(valid, h1, 0.0).reshape(M1, nf).astype(h1_scr.dtype)

    # --- conv2: K-folded im2col (K = 9*nf), ONE MXU matmul ---
    for k in range(9):
        s = (k // 3 + 1) * Wp + (k % 3) - 1
        slab2_scr[:, k * nf:(k + 1) * nf] = h1_scr[s:s + M2, :]
    out = jnp.dot(slab2_scr[...], w2_ref[...], preferred_element_type=jnp.float32)
    out = jnp.maximum(out + b2_ref[...], 0.0).reshape(bh, Wp, nf)

    # Strip the pad columns with one static slice and store the whole band at once.
    o_ref[...] = out[:, 2:2 + W2, :].astype(o_ref.dtype)


def fused_double_conv(cat_x, w1, b1, w2, b2, *, band_h=16, out_dtype=jnp.float32):
    """relu(conv3x3(relu(conv3x3(cat_x; w1,b1)); w2,b2)), SAME padding, fused."""
    B, H2, W2, ni = cat_x.shape
    nf = b1.shape[-1]
    assert w1.shape == (3, 3, ni, nf) and w2.shape == (3, 3, nf, nf)

    Wp = _round_up(W2 + 4, 8)          # sublane-aligned padded width (>= W2 + 4)

    # Band height: biggest that fits the VMEM budget, capped at H2.
    bh = max(1, min(band_h, H2))

    def _vmem_bytes(bh_):
        Mb_, M1_, M2_ = (bh_ + 8) * Wp, (bh_ + 4) * Wp, bh_ * Wp
        lane = lambda c: _round_up(c, 128)
        scr = 2 * (Mb_ * lane(ni) + M1_ * lane(9 * ni)
                   + M1_ * lane(nf) + M2_ * lane(9 * nf))
        out_blk = 2 * bh_ * W2 * lane(nf) * 4
        wts = 2 * (9 * ni + 9 * nf) * lane(nf)
        return scr + out_blk + wts

    while bh > 1 and _vmem_bytes(bh) > _VMEM_BAND_BUDGET:
        bh = max(1, bh // 2)
    # Guarantee >=2 parallel grid steps when B == 1 (v7x megacore).
    if B == 1 and H2 >= 2 and pl.cdiv(H2, bh) < 2:
        bh = (H2 + 1) // 2

    n_bands = pl.cdiv(H2, bh)
    H2p = n_bands * bh                 # ragged last band: masked + sliced off below
    Hp = H2p + 8                       # 4 zero rows on top, >=4 of band-halo slack below
    Q = Hp * Wp

    # Zero-pad (top=4, left=2, right/bottom to the aligned sizes) and flatten (H,W).
    xpad = jnp.pad(cat_x.astype(jnp.bfloat16),
                   ((0, 0), (4, Hp - H2 - 4), (2, Wp - W2 - 2), (0, 0)))
    x_flat = xpad.reshape(B * Q, ni)

    # Fold the 3x3 taps into the contraction dim (tap-major, channel-minor).
    w1f = w1.reshape(9 * ni, nf).astype(jnp.bfloat16)
    w2f = w2.reshape(9 * nf, nf).astype(jnp.bfloat16)

    kernel = functools.partial(_fused_double_conv_kernel, Wp=Wp, bh=bh, W2=W2,
                               H2=H2, ni=ni, nf=nf, Q=Q)
    Mb, M1, M2 = (bh + 8) * Wp, (bh + 4) * Wp, bh * Wp
    out = pl.pallas_call(
        kernel,
        out_shape=jax.ShapeDtypeStruct((B, H2p, W2, nf), out_dtype),
        grid=(B, n_bands),
        in_specs=[
            pl.BlockSpec(memory_space=pl.ANY),                   # cat_x, flat, stays in HBM
            pl.BlockSpec((9 * ni, nf), lambda b, t: (0, 0)),     # w1 (K-folded)
            pl.BlockSpec((1, nf), lambda b, t: (0, 0)),          # b1
            pl.BlockSpec((9 * nf, nf), lambda b, t: (0, 0)),     # w2 (K-folded)
            pl.BlockSpec((1, nf), lambda b, t: (0, 0)),          # b2
        ],
        out_specs=pl.BlockSpec((None, bh, W2, nf), lambda b, t: (b, t, 0, 0)),
        scratch_shapes=[
            pltpu.VMEM((Mb, ni), jnp.bfloat16),        # staged input band (+halo)
            pltpu.VMEM((M1, 9 * ni), jnp.bfloat16),    # conv1 im2col slab
            pltpu.VMEM((M1, nf), jnp.bfloat16),        # masked h1 (never leaves VMEM)
            pltpu.VMEM((M2, 9 * nf), jnp.bfloat16),    # conv2 im2col slab
            pltpu.SemaphoreType.DMA((1,)),             # band-DMA completion
        ],
        compiler_params=pltpu.CompilerParams(
            dimension_semantics=("parallel", "parallel"),
            vmem_limit_bytes=_VMEM_LIMIT),
    )(x_flat, w1f, b1.reshape(1, nf).astype(jnp.float32),
      w2f, b2.reshape(1, nf).astype(jnp.float32))
    return out[:, :H2] if H2p != H2 else out


# ---------------------------------------------------------------------------
# Forward pass (PyTorch-facing NCHW in / NCHW out)
# ---------------------------------------------------------------------------
def unet_block_forward(up_in_nchw, left_in_nchw, params, band_h=16):
    B, Cu, H, W = up_in_nchw.shape
    c_half = Cu // 2
    H2, W2 = 2 * H, 2 * W
    bf16, f32 = jnp.bfloat16, jnp.float32

    # --- shuf: 1x1 conv + bias + ReLU (Pallas matmul, bf16 on the MXU) ---
    up_nhwc = jnp.transpose(up_in_nchw, (0, 2, 3, 1)).astype(bf16)        # (B,H,W,Cu)
    y = matmul_bias_relu(up_nhwc.reshape(B * H * W, Cu),
                         params["shuf_w"].astype(bf16),
                         params["shuf_b"].astype(f32),
                         out_dtype=bf16)                                  # (B*H*W, 4*c_half)
    # PixelShuffle(2): pure layout permutation on the small upsampled tensor.
    # TODO(synk): fold this permutation into the Pallas matmul out_specs (or into
    # conv1's tap gather) to remove this HBM round trip of up_out.
    y = y.reshape(B, H, W, c_half, 2, 2)
    up_out = jnp.transpose(y, (0, 1, 4, 2, 5, 3)).reshape(B, H2, W2, c_half)

    # --- BatchNorm (inference) + ReLU on the skip connection, concat with up_out ---
    # relu(cat([up_out, bn(left)])) == cat([up_out, relu(bn(left))]) because up_out
    # is already post-ReLU (>= 0).  This stays as one fused XLA elementwise pass.
    left_nhwc = jnp.transpose(left_in_nchw, (0, 2, 3, 1)).astype(f32)     # (B,H2,W2,Cx)
    left_bn = jnp.maximum(left_nhwc * params["bn_scale"] + params["bn_shift"], 0.0)
    cat_x = jnp.concatenate([up_out, left_bn.astype(bf16)], axis=-1)      # (B,H2,W2,ni)

    # --- fused conv1 + conv2 (single Pallas kernel, banded, K-folded im2col) ---
    out_nhwc = fused_double_conv(cat_x, params["w1"], params["b1"].astype(f32),
                                 params["w2"], params["b2"].astype(f32),
                                 band_h=band_h, out_dtype=f32)
    return jnp.transpose(out_nhwc, (0, 3, 1, 2))                          # back to NCHW


# ---------------------------------------------------------------------------
# Pure-JAX reference mirroring the same bf16 quantization points
# ---------------------------------------------------------------------------
def _reference_forward(up_in, left_in, params):
    bf16, f32 = jnp.bfloat16, jnp.float32
    B, Cu, H, W = up_in.shape
    c_half = Cu // 2
    H2, W2 = 2 * H, 2 * W

    up_nhwc = jnp.transpose(up_in, (0, 2, 3, 1)).astype(bf16)
    y = jnp.dot(up_nhwc.reshape(-1, Cu), params["shuf_w"].astype(bf16),
                preferred_element_type=f32) + params["shuf_b"]
    y = jnp.maximum(y, 0.0).astype(bf16)
    up_out = jnp.transpose(y.reshape(B, H, W, c_half, 2, 2),
                           (0, 1, 4, 2, 5, 3)).reshape(B, H2, W2, c_half)

    s = jnp.transpose(left_in, (0, 2, 3, 1)).astype(f32)
    s_bn = jnp.maximum(s * params["bn_scale"] + params["bn_shift"], 0.0)
    cat = jnp.concatenate([up_out.astype(f32), s_bn], axis=-1).astype(bf16)

    def conv3x3(x_bf16, w, b):
        out = jax.lax.conv_general_dilated(
            x_bf16, w.astype(bf16), (1, 1), "SAME",
            dimension_numbers=("NHWC", "HWIO", "NHWC"),
            preferred_element_type=f32)
        return jnp.maximum(out + b, 0.0)

    h1 = conv3x3(cat, params["w1"], params["b1"]).astype(bf16)
    h2 = conv3x3(h1, params["w2"], params["b2"])
    return jnp.transpose(h2, (0, 3, 1, 2))


# ---------------------------------------------------------------------------
# Main
# ---------------------------------------------------------------------------
if __name__ == "__main__":
    key = jax.random.PRNGKey(0)
    ks = jax.random.split(key, 12)

    # Small, module-consistent shapes.
    B, up_in_c, x_in_c, H, W = 2, 8, 4, 8, 8
    c_half = up_in_c // 2                      # 4
    ni = c_half + x_in_c                       # 8
    nf = max(c_half, 32)                       # 32
    eps = 1e-5

    params = {
        # shuf: Conv1x1 (up_in_c -> c_half*4), (Cin, Cout), column order (c, i, j)
        "shuf_w": 0.1 * jax.random.normal(ks[0], (up_in_c, c_half * 4), jnp.float32),
        "shuf_b": 0.1 * jax.random.normal(ks[1], (c_half * 4,), jnp.float32),
        # conv weights in HWIO layout; w1's input-channel order is [up_out, bn(left)]
        "w1": 0.1 * jax.random.normal(ks[2], (3, 3, ni, nf), jnp.float32),
        "b1": 0.1 * jax.random.normal(ks[3], (nf,), jnp.float32),
        "w2": 0.1 * jax.random.normal(ks[4], (3, 3, nf, nf), jnp.float32),
        "b2": 0.1 * jax.random.normal(ks[5], (nf,), jnp.float32),
    }
    # BatchNorm2d(x_in_c) inference-mode folded into per-channel scale/shift.
    bn_gamma = 1.0 + 0.1 * jax.random.normal(ks[6], (x_in_c,), jnp.float32)
    bn_beta = 0.1 * jax.random.normal(ks[7], (x_in_c,), jnp.float32)
    bn_mean = 0.1 * jax.random.normal(ks[8], (x_in_c,), jnp.float32)
    bn_var = jnp.abs(1.0 + 0.1 * jax.random.normal(ks[9], (x_in_c,), jnp.float32))
    params["bn_scale"] = bn_gamma / jnp.sqrt(bn_var + eps)
    params["bn_shift"] = bn_beta - bn_mean * params["bn_scale"]

    # Inputs (NCHW, like PyTorch): left_in has 2x the spatial size of up_in.
    up_in = jax.random.normal(ks[10], (B, up_in_c, H, W), jnp.float32)
    left_in = jax.random.normal(ks[11], (B, x_in_c, 2 * H, 2 * W), jnp.float32)

    # band_h=8 -> 2 bands per image here, exercising the band halo/mask offsets.
    fwd = jax.jit(functools.partial(unet_block_forward, band_h=8))
    out = jax.block_until_ready(fwd(up_in, left_in, params))
    assert out.shape == (B, nf, 2 * H, 2 * W), out.shape

    ref = jax.block_until_ready(_reference_forward(up_in, left_in, params))
    max_err = float(jnp.max(jnp.abs(out - ref)))
    assert jnp.allclose(out, ref, atol=2e-2, rtol=2e-2), \
        f"mismatch vs reference (max err {max_err})"

    print("KERNEL_OK")
</pallas_src>

<mosaic_0001>
module attributes {stable_mosaic.version = 11 : i64} {
  func.func @_mm_bias_relu_kernel(%arg0: i32, %arg1: memref<64x8xbf16, #tpu.memory_space<vmem>>, %arg2: memref<8x16xbf16, #tpu.memory_space<vmem>>, %arg3: memref<1x16xf32, #tpu.memory_space<vmem>>, %arg4: memref<64x16xbf16, #tpu.memory_space<vmem>>) attributes {dimension_semantics = [#tpu.dimension_semantics<parallel>], iteration_bounds = array<i64: 2>, scalar_prefetch = 0 : i64, scratch_operands = 0 : i64, tpu.core_type = #tpu.core_type<tc>, window_params = [{transform_indices = @transform_0, window_bounds = array<i64: 64, 8>}, {pipeline_mode = #tpu.pipeline_mode<synchronous>, transform_indices = @transform_1, window_bounds = array<i64: 8, 16>}, {pipeline_mode = #tpu.pipeline_mode<synchronous>, transform_indices = @transform_2, window_bounds = array<i64: 1, 16>}, {transform_indices = @transform_3, window_bounds = array<i64: 64, 16>}]} {
    %c0 = arith.constant 0 : index
    %c0_0 = arith.constant 0 : index
    %0 = vector.load %arg1[%c0, %c0_0] : memref<64x8xbf16, #tpu.memory_space<vmem>>, vector<64x8xbf16>
    %c0_1 = arith.constant 0 : index
    %c0_2 = arith.constant 0 : index
    %1 = vector.load %arg2[%c0_1, %c0_2] : memref<8x16xbf16, #tpu.memory_space<vmem>>, vector<8x16xbf16>
    %cst = arith.constant dense<0.000000e+00> : vector<64x16xf32>
    %2 = tpu.matmul %0, %1, %cst {dimension_numbers = #tpu.dot_dimension_numbers<[1], [0], [0], [1], [0, 0, 1, 1], [], []>} : vector<64x8xbf16>, vector<8x16xbf16>, vector<64x16xf32> -> vector<64x16xf32>
    %c0_3 = arith.constant 0 : index
    %c0_4 = arith.constant 0 : index
    %3 = vector.load %arg3[%c0_3, %c0_4] : memref<1x16xf32, #tpu.memory_space<vmem>>, vector<1x16xf32>
    %4 = vector.broadcast %3 : vector<1x16xf32> to vector<64x16xf32>
    %5 = arith.addf %2, %4 : vector<64x16xf32>
    %cst_5 = arith.constant 0.000000e+00 : f32
    %6 = vector.broadcast %cst_5 : f32 to vector<64x16xf32>
    %7 = arith.maximumf %5, %6 : vector<64x16xf32>
    %8 = arith.truncf %7 : vector<64x16xf32> to vector<64x16xbf16>
    %c0_6 = arith.constant 0 : index
    %c0_7 = arith.constant 0 : index
    %9 = vector.load %arg4[%c0_6, %c0_7] : memref<64x16xbf16, #tpu.memory_space<vmem>>, vector<64x16xbf16>
    tpu.vector_store %arg4[%c0_6, %c0_7], %8 {strides = array<i32>} : memref<64x16xbf16, #tpu.memory_space<vmem>>, vector<64x16xbf16>,
    return
  }
  func.func @transform_0(%arg0: i32) -> (i32, i32) {
    %c0_i32 = arith.constant 0 : i32
    %c0_i32_0 = arith.constant 0 : i32
    return %arg0, %c0_i32 : i32, i32
  }
  func.func @transform_1(%arg0: i32) -> (i32, i32) {
    %c0_i32 = arith.constant 0 : i32
    %c0_i32_0 = arith.constant 0 : i32
    %c0_i32_1 = arith.constant 0 : i32
    return %c0_i32, %c0_i32_0 : i32, i32
  }
  func.func @transform_2(%arg0: i32) -> (i32, i32) {
    %c0_i32 = arith.constant 0 : i32
    %c0_i32_0 = arith.constant 0 : i32
    %c0_i32_1 = arith.constant 0 : i32
    return %c0_i32, %c0_i32_0 : i32, i32
  }
  func.func @transform_3(%arg0: i32) -> (i32, i32) {
    %c0_i32 = arith.constant 0 : i32
    %c0_i32_0 = arith.constant 0 : i32
    return %arg0, %c0_i32 : i32, i32
  }
}

module attributes {stable_mosaic.version = 11 : i64} {
  func.func @_fused_double_conv_kernel(%arg0: i32, %arg1: i32, %arg2: memref<1152x8xbf16, #tpu.memory_space<any>>, %arg3: memref<72x32xbf16, #tpu.memory_space<vmem>>, %arg4: memref<1x32xf32, #tpu.memory_space<vmem>>, %arg5: memref<288x32xbf16, #tpu.memory_space<vmem>>, %arg6: memref<1x32xf32, #tpu.memory_space<vmem>>, %arg7: memref<1x8x16x32xf32, #tpu.memory_space<vmem>>, %arg8: memref<384x8xbf16, #tpu.memory_space<vmem>>, %arg9: memref<288x72xbf16, #tpu.memory_space<vmem>>, %arg10: memref<288x32xbf16, #tpu.memory_space<vmem>>, %arg11: memref<192x288xbf16, #tpu.memory_space<vmem>>, %arg12: memref<1x!tpu.dma_semaphore, #tpu.memory_space<semaphore_mem>>) attributes {dimension_semantics = [#tpu.dimension_semantics<parallel>, #tpu.dimension_semantics<parallel>], iteration_bounds = array<i64: 2, 2>, scalar_prefetch = 0 : i64, scratch_operands = 5 : i64, tpu.core_type = #tpu.core_type<tc>, window_params = [{}, {pipeline_mode = #tpu.pipeline_mode<synchronous>, transform_indices = @transform_1, window_bounds = array<i64: 72, 32>}, {pipeline_mode = #tpu.pipeline_mode<synchronous>, transform_indices = @transform_2, window_bounds = array<i64: 1, 32>}, {pipeline_mode = #tpu.pipeline_mode<synchronous>, transform_indices = @transform_3, window_bounds = array<i64: 288, 32>}, {pipeline_mode = #tpu.pipeline_mode<synchronous>, transform_indices = @transform_4, window_bounds = array<i64: 1, 32>}, {transform_indices = @transform_5, window_bounds = array<i64: 1, 8, 16, 32>}]} {
    %c576_i32 = arith.constant 576 : i32
    %0 = arith.muli %arg0, %c576_i32 : i32
    %c192_i32 = arith.constant 192 : i32
    %1 = arith.muli %arg1, %c192_i32 : i32
    %2 = arith.addi %0, %1 : i32
    %c0_i32 = arith.constant 0 : i32
    %c0_i32_0 = arith.constant 0 : i32
    %3 = tpu.memref_slice %arg2[%2, %c0_i32_0] : memref<1152x8xbf16, #tpu.memory_space<any>> -> memref<384x8xbf16, #tpu.memory_space<any>>
    %4 = tpu.memref_slice %arg12[%c0_i32] : memref<1x!tpu.dma_semaphore, #tpu.memory_space<semaphore_mem>> -> memref<1x!tpu.dma_semaphore, #tpu.memory_space<semaphore_mem>>
    %5 = tpu.memref_squeeze %4 : memref<1x!tpu.dma_semaphore, #tpu.memory_space<semaphore_mem>> -> memref<!tpu.dma_semaphore, #tpu.memory_space<semaphore_mem>>
    tpu.enqueue_dma source(%3 : memref<384x8xbf16, #tpu.memory_space<any>>) target(%arg8 : memref<384x8xbf16, #tpu.memory_space<vmem>>) target_semaphore(%5 : memref<!tpu.dma_semaphore, #tpu.memory_space<semaphore_mem>>)
    %c0_i32_1 = arith.constant 0 : i32
    %c0_i32_2 = arith.constant 0 : i32
    %6 = tpu.memref_slice %arg2[%2, %c0_i32_2] : memref<1152x8xbf16, #tpu.memory_space<any>> -> memref<384x8xbf16, #tpu.memory_space<any>>
    %7 = tpu.memref_slice %arg12[%c0_i32_1] : memref<1x!tpu.dma_semaphore, #tpu.memory_space<semaphore_mem>> -> memref<1x!tpu.dma_semaphore, #tpu.memory_space<semaphore_mem>>
    %8 = tpu.memref_squeeze %7 : memref<1x!tpu.dma_semaphore, #tpu.memory_space<semaphore_mem>> -> memref<!tpu.dma_semaphore, #tpu.memory_space<semaphore_mem>>
    tpu.wait_dma2 semaphore(%8 : memref<!tpu.dma_semaphore, #tpu.memory_space<semaphore_mem>>) src(%6 : memref<384x8xbf16, #tpu.memory_space<any>>) dst(%arg8 : memref<384x8xbf16, #tpu.memory_space<vmem>>)
    %c23 = arith.constant 23 : index
    %c0 = arith.constant 0 : index
    %9 = vector.load %arg8[%c23, %c0] : memref<384x8xbf16, #tpu.memory_space<vmem>>, vector<288x8xbf16>
    %c0_3 = arith.constant 0 : index
    %c0_4 = arith.constant 0 : index
    %10 = vector.load %arg9[%c0_3, %c0_4] : memref<288x72xbf16, #tpu.memory_space<vmem>>, vector<288x8xbf16>
    tpu.vector_store %arg9[%c0_3, %c0_4], %9 {strides = array<i32>} : memref<288x72xbf16, #tpu.memory_space<vmem>>, vector<288x8xbf16>,
    %c24 = arith.constant 24 : index
    %c0_5 = arith.constant 0 : index
    %11 = vector.load %arg8[%c24, %c0_5] : memref<384x8xbf16, #tpu.memory_space<vmem>>, vector<288x8xbf16>
    %c0_6 = arith.constant 0 : index
    %c8 = arith.constant 8 : index
    %12 = vector.load %arg9[%c0_6, %c8] : memref<288x72xbf16, #tpu.memory_space<vmem>>, vector<288x8xbf16>
    tpu.vector_store %arg9[%c0_6, %c8], %11 {strides = array<i32>} : memref<288x72xbf16, #tpu.memory_space<vmem>>, vector<288x8xbf16>,
    %c25 = arith.constant 25 : index
    %c0_7 = arith.constant 0 : index
    %13 = vector.load %arg8[%c25, %c0_7] : memref<384x8xbf16, #tpu.memory_space<vmem>>, vector<288x8xbf16>
    %c0_8 = arith.constant 0 : index
    %c16 = arith.constant 16 : index
    %14 = vector.load %arg9[%c0_8, %c16] : memref<288x72xbf16, #tpu.memory_space<vmem>>, vector<288x8xbf16>
    tpu.vector_store %arg9[%c0_8, %c16], %13 {strides = array<i32>} : memref<288x72xbf16, #tpu.memory_space<vmem>>, vector<288x8xbf16>,
    %c47 = arith.constant 47 : index
    %c0_9 = arith.constant 0 : index
    %15 = vector.load %arg8[%c47, %c0_9] : memref<384x8xbf16, #tpu.memory_space<vmem>>, vector<288x8xbf16>
    %c0_10 = arith.constant 0 : index
    %c24_11 = arith.constant 24 : index
    %16 = vector.load %arg9[%c0_10, %c24_11] : memref<288x72xbf16, #tpu.memory_space<vmem>>, vector<288x8xbf16>
    tpu.vector_store %arg9[%c0_10, %c24_11], %15 {strides = array<i32>} : memref<288x72xbf16, #tpu.memory_space<vmem>>, vector<288x8xbf16>,
    %c48 = arith.constant 48 : index
    %c0_12 = arith.constant 0 : index
    %17 = vector.load %arg8[%c48, %c0_12] : memref<384x8xbf16, #tpu.memory_space<vmem>>, vector<288x8xbf16>
    %c0_13 = arith.constant 0 : index
    %c32 = arith.constant 32 : index
    %18 = vector.load %arg9[%c0_13, %c32] : memref<288x72xbf16, #tpu.memory_space<vmem>>, vector<288x8xbf16>
    tpu.vector_store %arg9[%c0_13, %c32], %17 {strides = array<i32>} : memref<288x72xbf16, #tpu.memory_space<vmem>>, vector<288x8xbf16>,
    %c49 = arith.constant 49 : index
    %c0_14 = arith.constant 0 : index
    %19 = vector.load %arg8[%c49, %c0_14] : memref<384x8xbf16, #tpu.memory_space<vmem>>, vector<288x8xbf16>
    %c0_15 = arith.constant 0 : index
    %c40 = arith.constant 40 : index
    %20 = vector.load %arg9[%c0_15, %c40] : memref<288x72xbf16, #tpu.memory_space<vmem>>, vector<288x8xbf16>
    tpu.vector_store %arg9[%c0_15, %c40], %19 {strides = array<i32>} : memref<288x72xbf16, #tpu.memory_space<vmem>>, vector<288x8xbf16>,
    %c71 = arith.constant 71 : index
    %c0_16 = arith.constant 0 : index
    %21 = vector.load %arg8[%c71, %c0_16] : memref<384x8xbf16, #tpu.memory_space<vmem>>, vector<288x8xbf16>
    %c0_17 = arith.constant 0 : index
    %c48_18 = arith.constant 48 : index
    %22 = vector.load %arg9[%c0_17, %c48_18] : memref<288x72xbf16, #tpu.memory_space<vmem>>, vector<288x8xbf16>
    tpu.vector_store %arg9[%c0_17, %c48_18], %21 {strides = array<i32>} : memref<288x72xbf16, #tpu.memory_space<vmem>>, vector<288x8xbf16>,
    %c72 = arith.constant 72 : index
    %c0_19 = arith.constant 0 : index
    %23 = vector.load %arg8[%c72, %c0_19] : memref<384x8xbf16, #tpu.memory_space<vmem>>, vector<288x8xbf16>
    %c0_20 = arith.constant 0 : index
    %c56 = arith.constant 56 : index
    %24 = vector.load %arg9[%c0_20, %c56] : memref<288x72xbf16, #tpu.memory_space<vmem>>, vector<288x8xbf16>
    tpu.vector_store %arg9[%c0_20, %c56], %23 {strides = array<i32>} : memref<288x72xbf16, #tpu.memory_space<vmem>>, vector<288x8xbf16>,
    %c73 = arith.constant 73 : index
    %c0_21 = arith.constant 0 : index
    %25 = vector.load %arg8[%c73, %c0_21] : memref<384x8xbf16, #tpu.memory_space<vmem>>, vector<288x8xbf16>
    %c0_22 = arith.constant 0 : index
    %c64 = arith.constant 64 : index
    %26 = vector.load %arg9[%c0_22, %c64] : memref<288x72xbf16, #tpu.memory_space<vmem>>, vector<288x8xbf16>
    tpu.vector_store %arg9[%c0_22, %c64], %25 {strides = array<i32>} : memref<288x72xbf16, #tpu.memory_space<vmem>>, vector<288x8xbf16>,
    %c0_23 = arith.constant 0 : index
    %c0_24 = arith.constant 0 : index
    %27 = vector.load %arg9[%c0_23, %c0_24] : memref<288x72xbf16, #tpu.memory_space<vmem>>, vector<288x72xbf16>
    %c0_25 = arith.constant 0 : index
    %c0_26 = arith.constant 0 : index
    %28 = vector.load %arg3[%c0_25, %c0_26] : memref<72x32xbf16, #tpu.memory_space<vmem>>, vector<72x32xbf16>
    %cst = arith.constant dense<0.000000e+00> : vector<288x32xf32>
    %29 = tpu.matmul %27, %28, %cst {dimension_numbers = #tpu.dot_dimension_numbers<[1], [0], [0], [1], [0, 0, 1, 1], [], []>} : vector<288x72xbf16>, vector<72x32xbf16>, vector<288x32xf32> -> vector<288x32xf32>
    %c0_27 = arith.constant 0 : index
    %c0_28 = arith.constant 0 : index
    %30 = vector.load %arg4[%c0_27, %c0_28] : memref<1x32xf32, #tpu.memory_space<vmem>>, vector<1x32xf32>
    %31 = vector.broadcast %30 : vector<1x32xf32> to vector<288x32xf32>
    %32 = arith.addf %29, %31 : vector<288x32xf32>
    %cst_29 = arith.constant 0.000000e+00 : f32
    %33 = vector.broadcast %cst_29 : f32 to vector<288x32xf32>
    %34 = arith.maximumf %32, %33 : vector<288x32xf32>
    %35 = vector.shape_cast %34 : vector<288x32xf32> to vector<12x24x32xf32>
    %36 = tpu.iota {dimensions = array<i32: 0>} : vector<12x24x1xi32>
    %c8_i32 = arith.constant 8 : i32
    %37 = arith.muli %arg1, %c8_i32 : i32
    %38 = vector.broadcast %37 : i32 to vector<12x24x1xi32>
    %39 = arith.addi %36, %38 : vector<12x24x1xi32>
    %40 = tpu.iota {dimensions = array<i32: 1>} : vector<12x24x1xi32>
    %c2_i32 = arith.constant 2 : i32
    %41 = vector.broadcast %c2_i32 : i32 to vector<12x24x1xi32>
    %42 = arith.cmpi sge, %39, %41 : vector<12x24x1xi32>
    %c18_i32 = arith.constant 18 : i32
    %43 = vector.broadcast %c18_i32 : i32 to vector<12x24x1xi32>
    %44 = arith.cmpi slt, %39, %43 : vector<12x24x1xi32>
    %45 = arith.andi %42, %44 : vector<12x24x1xi1>
    %c2_i32_30 = arith.constant 2 : i32
    %46 = vector.broadcast %c2_i32_30 : i32 to vector<12x24x1xi32>
    %47 = arith.cmpi sge, %40, %46 : vector<12x24x1xi32>
    %48 = arith.andi %45, %47 : vector<12x24x1xi1>
    %c18_i32_31 = arith.constant 18 : i32
    %49 = vector.broadcast %c18_i32_31 : i32 to vector<12x24x1xi32>
    %50 = arith.cmpi slt, %40, %49 : vector<12x24x1xi32>
    %51 = arith.andi %48, %50 : vector<12x24x1xi1>
    %cst_32 = arith.constant 0.000000e+00 : f32
    %52 = vector.shape_cast %51 : vector<12x24x1xi1> to vector<12x24x1xi1>
    %53 = vector.broadcast %52 : vector<12x24x1xi1> to vector<12x24x32xi1>
    %54 = vector.broadcast %cst_32 : f32 to vector<12x24x32xf32>
    %55 = arith.select %53, %35, %54 : vector<12x24x32xi1>, vector<12x24x32xf32>
    %56 = vector.shape_cast %55 : vector<12x24x32xf32> to vector<288x32xf32>
    %57 = arith.truncf %56 : vector<288x32xf32> to vector<288x32xbf16>
    %c0_33 = arith.constant 0 : index
    %c0_34 = arith.constant 0 : index
    %58 = vector.load %arg10[%c0_33, %c0_34] : memref<288x32xbf16, #tpu.memory_space<vmem>>, vector<288x32xbf16>
    tpu.vector_store %arg10[%c0_33, %c0_34], %57 {strides = array<i32>} : memref<288x32xbf16, #tpu.memory_space<vmem>>, vector<288x32xbf16>,
    %c23_35 = arith.constant 23 : index
    %c0_36 = arith.constant 0 : index
    %59 = vector.load %arg10[%c23_35, %c0_36] : memref<288x32xbf16, #tpu.memory_space<vmem>>, vector<192x32xbf16>
    %c0_37 = arith.constant 0 : index
    %c0_38 = arith.constant 0 : index
    %60 = vector.load %arg11[%c0_37, %c0_38] : memref<192x288xbf16, #tpu.memory_space<vmem>>, vector<192x32xbf16>
    tpu.vector_store %arg11[%c0_37, %c0_38], %59 {strides = array<i32>} : memref<192x288xbf16, #tpu.memory_space<vmem>>, vector<192x32xbf16>,
    %c24_39 = arith.constant 24 : index
    %c0_40 = arith.constant 0 : index
    %61 = vector.load %arg10[%c24_39, %c0_40] : memref<288x32xbf16, #tpu.memory_space<vmem>>, vector<192x32xbf16>
    %c0_41 = arith.constant 0 : index
    %c32_42 = arith.constant 32 : index
    %62 = vector.load %arg11[%c0_41, %c32_42] : memref<192x288xbf16, #tpu.memory_space<vmem>>, vector<192x32xbf16>
    tpu.vector_store %arg11[%c0_41, %c32_42], %61 {strides = array<i32>} : memref<192x288xbf16, #tpu.memory_space<vmem>>, vector<192x32xbf16>,
    %c25_43 = arith.constant 25 : index
    %c0_44 = arith.constant 0 : index
    %63 = vector.load %arg10[%c25_43, %c0_44] : memref<288x32xbf16, #tpu.memory_space<vmem>>, vector<192x32xbf16>
    %c0_45 = arith.constant 0 : index
    %c64_46 = arith.constant 64 : index
    %64 = vector.load %arg11[%c0_45, %c64_46] : memref<192x288xbf16, #tpu.memory_space<vmem>>, vector<192x32xbf16>
    tpu.vector_store %arg11[%c0_45, %c64_46], %63 {strides = array<i32>} : memref<192x288xbf16, #tpu.memory_space<vmem>>, vector<192x32xbf16>,
    %c47_47 = arith.constant 47 : index
    %c0_48 = arith.constant 0 : index
    %65 = vector.load %arg10[%c47_47, %c0_48] : memref<288x32xbf16, #tpu.memory_space<vmem>>, vector<192x32xbf16>
    %c0_49 = arith.constant 0 : index
    %c96 = arith.constant 96 : index
    %66 = vector.load %arg11[%c0_49, %c96] : memref<192x288xbf16, #tpu.memory_space<vmem>>, vector<192x32xbf16>
    tpu.vector_store %arg11[%c0_49, %c96], %65 {strides = array<i32>} : memref<192x288xbf16, #tpu.memory_space<vmem>>, vector<192x32xbf16>,
    %c48_50 = arith.constant 48 : index
    %c0_51 = arith.constant 0 : index
    %67 = vector.load %arg10[%c48_50, %c0_51] : memref<288x32xbf16, #tpu.memory_space<vmem>>, vector<192x32xbf16>
    %c0_52 = arith.constant 0 : index
    %c128 = arith.constant 128 : index
    %68 = vector.load %arg11[%c0_52, %c128] : memref<192x288xbf16, #tpu.memory_space<vmem>>, vector<192x32xbf16>
    tpu.vector_store %arg11[%c0_52, %c128], %67 {strides = array<i32>} : memref<192x288xbf16, #tpu.memory_space<vmem>>, vector<192x32xbf16>,
    %c49_53 = arith.constant 49 : index
    %c0_54 = arith.constant 0 : index
    %69 = vector.load %arg10[%c49_53, %c0_54] : memref<288x32xbf16, #tpu.memory_space<vmem>>, vector<192x32xbf16>
    %c0_55 = arith.constant 0 : index
    %c160 = arith.constant 160 : index
    %70 = vector.load %arg11[%c0_55, %c160] : memref<192x288xbf16, #tpu.memory_space<vmem>>, vector<192x32xbf16>
    tpu.vector_store %arg11[%c0_55, %c160], %69 {strides = array<i32>} : memref<192x288xbf16, #tpu.memory_space<vmem>>, vector<192x32xbf16>,
    %c71_56 = arith.constant 71 : index
    %c0_57 = arith.constant 0 : index
    %71 = vector.load %arg10[%c71_56, %c0_57] : memref<288x32xbf16, #tpu.memory_space<vmem>>, vector<192x32xbf16>
    %c0_58 = arith.constant 0 : index
    %c192 = arith.constant 192 : index
    %72 = vector.load %arg11[%c0_58, %c192] : memref<192x288xbf16, #tpu.memory_space<vmem>>, vector<192x32xbf16>
    tpu.vector_store %arg11[%c0_58, %c192], %71 {strides = array<i32>} : memref<192x288xbf16, #tpu.memory_space<vmem>>, vector<192x32xbf16>,
    %c72_59 = arith.constant 72 : index
    %c0_60 = arith.constant 0 : index
    %73 = vector.load %arg10[%c72_59, %c0_60] : memref<288x32xbf16, #tpu.memory_space<vmem>>, vector<192x32xbf16>
    %c0_61 = arith.constant 0 : index
    %c224 = arith.constant 224 : index
    %74 = vector.load %arg11[%c0_61, %c224] : memref<192x288xbf16, #tpu.memory_space<vmem>>, vector<192x32xbf16>
    tpu.vector_store %arg11[%c0_61, %c224], %73 {strides = array<i32>} : memref<192x288xbf16, #tpu.memory_space<vmem>>, vector<192x32xbf16>,
    %c73_62 = arith.constant 73 : index
    %c0_63 = arith.constant 0 : index
    %75 = vector.load %arg10[%c73_62, %c0_63] : memref<288x32xbf16, #tpu.memory_space<vmem>>, vector<192x32xbf16>
    %c0_64 = arith.constant 0 : index
    %c256 = arith.constant 256 : index
    %76 = vector.load %arg11[%c0_64, %c256] : memref<192x288xbf16, #tpu.memory_space<vmem>>, vector<192x32xbf16>
    tpu.vector_store %arg11[%c0_64, %c256], %75 {strides = array<i32>} : memref<192x288xbf16, #tpu.memory_space<vmem>>, vector<192x32xbf16>,
    %c0_65 = arith.constant 0 : index
    %c0_66 = arith.constant 0 : index
    %77 = vector.load %arg11[%c0_65, %c0_66] : memref<192x288xbf16, #tpu.memory_space<vmem>>, vector<192x288xbf16>
    %c0_67 = arith.constant 0 : index
    %c0_68 = arith.constant 0 : index
    %78 = vector.load %arg5[%c0_67, %c0_68] : memref<288x32xbf16, #tpu.memory_space<vmem>>, vector<288x32xbf16>
    %cst_69 = arith.constant dense<0.000000e+00> : vector<192x32xf32>
    %79 = tpu.matmul %77, %78, %cst_69 {dimension_numbers = #tpu.dot_dimension_numbers<[1], [0], [0], [1], [0, 0, 1, 1], [], []>} : vector<192x288xbf16>, vector<288x32xbf16>, vector<192x32xf32> -> vector<192x32xf32>
    %c0_70 = arith.constant 0 : index
    %c0_71 = arith.constant 0 : index
    %80 = vector.load %arg6[%c0_70, %c0_71] : memref<1x32xf32, #tpu.memory_space<vmem>>, vector<1x32xf32>
    %81 = vector.broadcast %80 : vector<1x32xf32> to vector<192x32xf32>
    %82 = arith.addf %79, %81 : vector<192x32xf32>
    %cst_72 = arith.constant 0.000000e+00 : f32
    %83 = vector.broadcast %cst_72 : f32 to vector<192x32xf32>
    %84 = arith.maximumf %82, %83 : vector<192x32xf32>
    %85 = vector.shape_cast %84 : vector<192x32xf32> to vector<8x24x32xf32>
    %86 = vector.extract_strided_slice %85 {offsets = [0, 2, 0], sizes = [8, 16, 32], strides = [1, 1, 1]} : vector<8x24x32xf32> to vector<8x16x32xf32>
    %c0_73 = arith.constant 0 : index
    %c0_74 = arith.constant 0 : index
    %c0_75 = arith.constant 0 : index
    %c0_76 = arith.constant 0 : index
    %87 = vector.load %arg7[%c0_73, %c0_74, %c0_75, %c0_76] : memref<1x8x16x32xf32, #tpu.memory_space<vmem>>, vector<1x8x16x32xf32>
    %88 = vector.shape_cast %87 : vector<1x8x16x32xf32> to vector<8x16x32xf32>
    %89 = vector.shape_cast %86 : vector<8x16x32xf32> to vector<1x8x16x32xf32>
    tpu.vector_store %arg7[%c0_73, %c0_74, %c0_75, %c0_76], %89 {strides = array<i32>} : memref<1x8x16x32xf32, #tpu.memory_space<vmem>>, vector<1x8x16x32xf32>,
    return
  }
  func.func @transform_1(%arg0: i32, %arg1: i32) -> (i32, i32) {
    %c0_i32 = arith.constant 0 : i32
    %c0_i32_0 = arith.constant 0 : i32
    %c0_i32_1 = arith.constant 0 : i32
    return %c0_i32, %c0_i32_0 : i32, i32
  }
  func.func @transform_2(%arg0: i32, %arg1: i32) -> (i32, i32) {
    %c0_i32 = arith.constant 0 : i32
    %c0_i32_0 = arith.constant 0 : i32
    %c0_i32_1 = arith.constant 0 : i32
    return %c0_i32, %c0_i32_0 : i32, i32
  }
  func.func @transform_3(%arg0: i32, %arg1: i32) -> (i32, i32) {
    %c0_i32 = arith.constant 0 : i32
    %c0_i32_0 = arith.constant 0 : i32
    %c0_i32_1 = arith.constant 0 : i32
    return %c0_i32, %c0_i32_0 : i32, i32
  }
  func.func @transform_4(%arg0: i32, %arg1: i32) -> (i32, i32) {
    %c0_i32 = arith.constant 0 : i32
    %c0_i32_0 = arith.constant 0 : i32
    %c0_i32_1 = arith.constant 0 : i32
    return %c0_i32, %c0_i32_0 : i32, i32
  }
  func.func @transform_5(%arg0: i32, %arg1: i32) -> (i32, i32, i32, i32) {
    %c0_i32 = arith.constant 0 : i32
    %c0_i32_0 = arith.constant 0 : i32
    %c0_i32_1 = arith.constant 0 : i32
    return %arg0, %arg1, %c0_i32, %c0_i32_0 : i32, i32, i32, i32
  }
}

</mosaic_0001>

<llo_original>
// kernel: unet_block_forward.2
$region0: #{unet_block_forward.2}
  #allocation0 [shape = 'u32[]', space=smem, size = 0x4, offset = 0x4, fixed_abs, tag = 'smem constant byte address 0x4 - core index']
  #allocation1 [shape = 'u32[144,128]{1,0:T(1,128)}', space=vmem, size = 0x12000, scoped, tag = 'internal scratch']
  %s0 = inlined_call_operand.hbm [shape: bf16[128,8], index: 0, kind: input, shape index: {}]
  %s1 = inlined_call_operand.hbm [shape: bf16[8,16], index: 1, kind: input, shape index: {}]
  %s2 = inlined_call_operand.hbm [shape: f32[1,16], index: 2, kind: input, shape index: {}]
  %s3 = inlined_call_operand.hbm [shape: bf16[128,16], index: 3, kind: output, shape index: {}]
  %s4 = sld [smem:[#allocation0]]
  $region57: #{unet_block_forward.2} parent=0
    _
  %s6 = ssub.s32 1, %s4
  %s7 = scalar_select 0, %s6, %s4
  $region1: #{unet_block_forward.2} parent=0
    #allocation2 [shape = 'u8[32768]{0}', space=vmem, size = 0x8000, scoped, tag = 'input window, operand 0']
    #allocation3 [shape = 's32[2]{0}', space=sflag, size = 0x8, scoped, tag = 'scoped memory for unet_block_forward.2']
    #allocation4 [shape = 's32[2]{0}', space=sflag, size = 0x8, scoped, tag = 'scoped memory for unet_block_forward.2']
    #allocation5 [shape = 'u8[2048]{0}', space=vmem, size = 0x800, scoped, tag = 'input window, operand 1, single buffered']
    #allocation6 [shape = 's32[1]{0}', space=sflag, size = 0x4, scoped, tag = 'scoped memory for unet_block_forward.2']
    #allocation7 [shape = 'u8[512]{0}', space=vmem, size = 0x400, scoped, tag = 'input window, operand 2, single buffered']
    #allocation8 [shape = 'u8[32768]{0}', space=vmem, size = 0x8000, scoped, tag = 'output window, operand 0']
    %8 = vsyncpa [#allocation3], 0
    %s9 = scalar_lea.sflag [#allocation3], 1
    %10 = vsyncpa %s9, 0
    %11 = vsyncpa [#allocation6], 0
    %12 = vsyncpa [#allocation4], 0
    %s13 = scalar_lea.sflag [#allocation4], 1
    %14 = vsyncpa %s13, 0
    loop: start=0, step=1, limit=4
    $region2: #{unet_block_forward.2} parent=1 // loop_pre_header
      _
    $region3: #{unet_block_forward.2} parent=1 // loop_header
      %s16 = sphi 0, %s20
      %p17 = scmp.ge.s32.totalorder %s16, 4
      %s26 = sphi 0, %s28
      %s29 = sphi 0, %s26
      %s30 = sphi 0, %s29
      %s46 = sphi 0, %s30
      %s50 = sphi 0, %s50
      %s52 = sphi 0, %s50
      %s53 = sphi 0, %s52
      %s67 = sphi 0, %s53
      %s71 = sphi 0, %s71
      %s73 = sphi 0, %s71
      %s74 = sphi 0, %s73
      %s88 = sphi 0, %s74
      %s94 = sphi 0, %s96
      %s97 = sphi 0, %s94
      %s98 = sphi 0, %s97
      %s114 = sphi 0, %s98
    $region4: #{unet_block_forward.2} parent=1 // loop_header_branch
      %19 = sbr.rel (%p17) target = $region8
    $region5: #{unet_block_forward.2} parent=1 // loop_body
      %s21 = ssub.s32 %s16, 1
      %s22 = ssub.s32 %s16, 2
      %s23 = sadd.s32 %s16, 1
      %s24 = ssub.s32 %s16, %s23
      %p25 = scmp.eq.s32.totalorder %s24, 0
      %s27 = sadd.s32 %s26, 1
      %s28 = scalar_select %p25, %s26, %s27
      %p31 = pneg %p25
      %p32 = scmp.eq.s32.totalorder %s16, 1
      %p33 = por %p31, %p32
      %p34 = scmp.ne.s32.totalorder %s26, %s29
      %p35 = scmp.eq.s32.totalorder %s16, 0
      %p36 = por %p34, %p35
      %p37 = scmp.ne.s32.totalorder %s26, %s29
      %p38 = scmp.eq.s32.totalorder %s21, 1
      %p39 = por %p37, %p38
      %p40 = scmp.ne.s32.totalorder %s29, %s30
      %p41 = scmp.eq.s32.totalorder %s21, 0
      %p42 = por %p40, %p41
      %p43 = scmp.ne.s32.totalorder %s29, %s30
      %p44 = scmp.eq.s32.totalorder %s22, 1
      %p45 = por %p43, %p44
      %p47 = scmp.ne.s32.totalorder %s30, %s46
      %p48 = scmp.eq.s32.totalorder %s22, 0
      %p49 = por %p47, %p48
      %s51 = sadd.s32 %s50, 1
      %p54 = scmp.eq.s32.totalorder %s16, 1
      %p55 = scmp.ne.s32.totalorder %s50, %s52
      %p56 = scmp.eq.s32.totalorder %s16, 0
      %p57 = por %p55, %p56
      %p58 = scmp.ne.s32.totalorder %s50, %s52
      %p59 = scmp.eq.s32.totalorder %s21, 1
      %p60 = por %p58, %p59
      %p61 = scmp.ne.s32.totalorder %s52, %s53
      %p62 = scmp.eq.s32.totalorder %s21, 0
      %p63 = por %p61, %p62
      %p64 = scmp.ne.s32.totalorder %s52, %s53
      %p65 = scmp.eq.s32.totalorder %s22, 1
      %p66 = por %p64, %p65
      %p68 = scmp.ne.s32.totalorder %s53, %s67
      %p69 = scmp.eq.s32.totalorder %s22, 0
      %p70 = por %p68, %p69
      %s72 = sadd.s32 %s71, 1
      %p75 = scmp.eq.s32.totalorder %s16, 1
      %p76 = scmp.ne.s32.totalorder %s71, %s73
      %p77 = scmp.eq.s32.totalorder %s16, 0
      %p78 = por %p76, %p77
      %p79 = scmp.ne.s32.totalorder %s71, %s73
      %p80 = scmp.eq.s32.totalorder %s21, 1
      %p81 = por %p79, %p80
      %p82 = scmp.ne.s32.totalorder %s73, %s74
      %p83 = scmp.eq.s32.totalorder %s21, 0
      %p84 = por %p82, %p83
      %p85 = scmp.ne.s32.totalorder %s73, %s74
      %p86 = scmp.eq.s32.totalorder %s22, 1
      %p87 = por %p85, %p86
      %p89 = scmp.ne.s32.totalorder %s74, %s88
      %p90 = scmp.eq.s32.totalorder %s22, 0
      %p91 = por %p89, %p90
      %s92 = ssub.s32 %s16, %s23
      %p93 = scmp.eq.s32.totalorder %s92, 0
      %s95 = sadd.s32 %s94, 1
      %s96 = scalar_select %p93, %s94, %s95
      %p99 = pneg %p93
      %p100 = scmp.eq.s32.totalorder %s16, 1
      %p101 = por %p99, %p100
      %p102 = scmp.ne.s32.totalorder %s94, %s97
      %p103 = scmp.eq.s32.totalorder %s16, 0
      %p104 = por %p102, %p103
      %p105 = scmp.ne.s32.totalorder %s94, %s97
      %p106 = scmp.eq.s32.totalorder %s21, 1
      %p107 = por %p105, %p106
      %p108 = scmp.ne.s32.totalorder %s97, %s98
      %p109 = scmp.eq.s32.totalorder %s21, 0
      %p110 = por %p108, %p109
      %p111 = scmp.ne.s32.totalorder %s97, %s98
      %p112 = scmp.eq.s32.totalorder %s22, 1
      %p113 = por %p111, %p112
      %p115 = scmp.ne.s32.totalorder %s98, %s114
      %p116 = scmp.eq.s32.totalorder %s22, 0
      %p117 = por %p115, %p116
      %p118 = scmp.le.s32.totalorder 1, %s16
      %p119 = scmp.lt.s32.totalorder %s16, 3
      %p120 = pnand %p118, %p119
      %p121 = pneg %p120
      // Predicated region
      $region9: #{unet_block_forward.2} parent=5 // pred_check
        _
      $region10: #{unet_block_forward.2} parent=5 // pred_check_branch
        %123 = sbr.rel (%p120) target = $region12
      $region11: #{unet_block_forward.2} parent=5 // pred_region
        %s124 = ssub.s32 %s16, 1
        // Predicated region
        $region13: #{unet_block_forward.2} parent=11 // pred_check
          %p125 = pneg %p63
        $region14: #{unet_block_forward.2} parent=11 // pred_check_branch
          %127 = sbr.rel (%p125) target = $region16
        $region15: #{unet_block_forward.2} parent=11 // pred_region
          %s129 = ssub.s32 64, 64
          %130 = vsyncadd [#allocation6], %s129
          %s132 = sshll.u32 [#allocation5], 4
          %s133 = int_to_ptr.vmem [resolvable:$true] %s132
          %135 = dma.hbm_to_vmem [thread:$0]  %s1, 64, %s133, [#allocation6]
        $region16: #{unet_block_forward.2} parent=11 // pred_fallthru
          _
        // Predicated region
        $region17: #{unet_block_forward.2} parent=11 // pred_check
          %p136 = pneg %p84
        $region18: #{unet_block_forward.2} parent=11 // pred_check_branch
          %138 = sbr.rel (%p136) target = $region20
        $region19: #{unet_block_forward.2} parent=11 // pred_region
          %s140 = ssub.s32 16, 16
          %141 = vsyncadd [#allocation6], %s140
          %s143 = sshll.u32 [#allocation7], 4
          %s144 = int_to_ptr.vmem [resolvable:$true] %s143
          %146 = dma.hbm_to_vmem [thread:$0]  %s2, 16, %s144, [#allocation6]
        $region20: #{unet_block_forward.2} parent=11 // pred_fallthru
          _
      $region12: #{unet_block_forward.2} parent=5 // pred_fallthru
        _
      %p147 = scmp.lt.s32.totalorder %s16, 2
      // Predicated region
      $region21: #{unet_block_forward.2} parent=5 // pred_check
        %p148 = pneg %p147
      $region22: #{unet_block_forward.2} parent=5 // pred_check_branch
        %150 = sbr.rel (%p148) target = $region24
      $region23: #{unet_block_forward.2} parent=5 // pred_region
        // Predicated region
        $region25: #{unet_block_forward.2} parent=23 // pred_check
          %p151 = pneg %p36
        $region26: #{unet_block_forward.2} parent=23 // pred_check_branch
          %153 = sbr.rel (%p151) target = $region28
        $region27: #{unet_block_forward.2} parent=23 // pred_region
          %s154 = sand.u32 %s26, 1
          %s155 = scalar_lea.sflag [#allocation3], %s154
          %s156 = sand.u32 %s26, 1
          %s157 = smul.addr %s156, 32
          %s158 = scalar_lea.vmem [#allocation2], %s157
          %s159 = smul.u32 8, %s16
          %s161 = ssub.s32 512, 512
          %162 = vsyncadd %s155, %s161
          %s163 = smul.addr %s159, 64
          %s164 = scalar_lea.hbm %s0, %s163
          %s165 = sshll.u32 %s158, 4
          %s166 = int_to_ptr.vmem [resolvable:$true] %s165
          %171 = dma.hbm_to_vmem [thread:$0]  %s164, 512, %s166, %s155, 64, 64, 4
        $region28: #{unet_block_forward.2} parent=23 // pred_fallthru
          _
      $region24: #{unet_block_forward.2} parent=5 // pred_fallthru
        _
      %p172 = scmp.le.s32.totalorder 1, %s16
      %p173 = scmp.lt.s32.totalorder %s16, 3
      %p174 = pnand %p172, %p173
      %p175 = pneg %p174
      // Predicated region
      $region29: #{unet_block_forward.2} parent=5 // pred_check
        _
      $region30: #{unet_block_forward.2} parent=5 // pred_check_branch
        %177 = sbr.rel (%p174) target = $region32
      $region31: #{unet_block_forward.2} parent=5 // pred_region
        %s178 = ssub.s32 %s16, 1
        %s179 = sand.u32 %s29, 1
        %s180 = scalar_lea.sflag [#allocation3], %s179
        %s181 = sand.u32 %s29, 1
        %s182 = smul.addr %s181, 32
        %s183 = scalar_lea.vmem [#allocation2], %s182
        // Predicated region
        $region33: #{unet_block_forward.2} parent=31 // pred_check
          %p184 = pneg %p42
        $region34: #{unet_block_forward.2} parent=31 // pred_check_branch
          %186 = sbr.rel (%p184) target = $region36
        $region35: #{unet_block_forward.2} parent=31 // pred_region
          %187 = dma.done %s180, 512
        $region36: #{unet_block_forward.2} parent=31 // pred_fallthru
          _
        // Predicated region
        $region37: #{unet_block_forward.2} parent=31 // pred_check
          %p188 = pneg %p63
        $region38: #{unet_block_forward.2} parent=31 // pred_check_branch
          %190 = sbr.rel (%p188) target = $region40
        $region39: #{unet_block_forward.2} parent=31 // pred_region
          %191 = dma.done [#allocation6], 64
        $region40: #{unet_block_forward.2} parent=31 // pred_fallthru
          _
        // Predicated region
        $region41: #{unet_block_forward.2} parent=31 // pred_check
          %p192 = pneg %p84
        $region42: #{unet_block_forward.2} parent=31 // pred_check_branch
          %194 = sbr.rel (%p192) target = $region44
        $region43: #{unet_block_forward.2} parent=31 // pred_region
          %195 = dma.done [#allocation6], 16
        $region44: #{unet_block_forward.2} parent=31 // pred_fallthru
          _
        %s196 = sand.u32 %s29, 1
        %s197 = scalar_lea.sflag [#allocation3], %s196
        %s198 = sand.u32 %s29, 1
        %s199 = smul.addr %s198, 32
        %s200 = scalar_lea.vmem [#allocation2], %s199
        %p201 = pneg %p42
        %p202 = pneg %p39
        %p203 = pneg %p63
        %p204 = pneg %p60
        %p205 = pneg %p84
        %p206 = pneg %p81
        %p207 = pneg %p110
        %p208 = pneg %p107
        %s209 = sand.u32 %s97, 1
        %s210 = scalar_lea.sflag [#allocation4], %s209
        %s211 = sand.u32 %s97, 1
        %s212 = smul.addr %s211, 32
        %s213 = scalar_lea.vmem [#allocation8], %s212
        %s214 = smul.u32 8, %s21
        %s215 = smul.u32 8, %s21
        %v217 = vld [vmem:[%s183] sm:$0xf]
        %v218 = vld [vmem:[%s183 + $0x4] sm:$0xf]
        %v219 = vld [vmem:[%s183 + $0x8] sm:$0xf]
        %v220 = vld [vmem:[%s183 + $0xc] sm:$0xf]
        %v221 = vld [vmem:[%s183 + $0x10] sm:$0xf]
        %v222 = vld [vmem:[%s183 + $0x14] sm:$0xf]
        %v223 = vld [vmem:[%s183 + $0x18] sm:$0xf]
        %v224 = vld [vmem:[%s183 + $0x1c] sm:$0xf]
        %v225 = vld [vmem:[#allocation5] sm:$0xf]
        %v226 = vld [vmem:[#allocation7] sm:$0x1]
        %v228 = vlaneseq
        %v229 = vshrl.u32 %v228, 7
        %v230 = vsub.s32 0, %v229
        %v231 = vrot.slane %v226, %v230
        %v241 = vunpack.c.l.b16 %v217
        %v242 = vunpack.c.l.b16 %v218
        %v243 = vunpack.c.l.b16 %v219
        %v244 = vunpack.c.l.b16 %v220
        %v245 = vunpack.c.l.b16 %v221
        %v246 = vunpack.c.l.b16 %v222
        %v247 = vunpack.c.l.b16 %v223
        %v248 = vunpack.c.l.b16 %v224
        %v249 = vpack.c.b16 %v242, %v241
        %v250 = vpack.c.b16 %v244, %v243
        %v251 = vpack.c.b16 %v246, %v245
        %v252 = vpack.c.b16 %v248, %v247
        %vm253 = vcmask 64512
        %v255 = vsel %vm253, %v249, 0
        %v258 = vsel %vm253, %v250, 0
        %v261 = vsel %vm253, %v251, 0
        %v264 = vsel %vm253, %v252, 0
        %vm266 = vcmask 1043456
        %v268 = vsel %vm266, %v225, 0
        %270 = vmatprep.subr.bf16.mxu0 0
        %271 = vmatpush1.bf16.msra.mxu0 %v268
        %272 = vmatprep.subr.bf16.mxu0 0
        %273 = vmatpush1.bf16.msra.mxu0 0
        %274 = vmatprep.subr.bf16.mxu0 0
        %275 = vmatpush1.bf16.msra.mxu0 0
        %276 = vmatprep.subr.bf16.mxu0 0
        %277 = vmatpush1.bf16.msra.mxu0 0
        %278 = vmatprep.subr.bf16.mxu0 0
        %279 = vmatpush1.bf16.msra.mxu0 0
        %280 = vmatprep.subr.bf16.mxu0 0
        %281 = vmatpush1.bf16.msra.mxu0 0
        %282 = vmatprep.subr.bf16.mxu0 0
        %283 = vmatpush1.bf16.msra.mxu0 0
        %284 = vmatprep.subr.bf16.mxu0 0
        %285 = vmatpush1.bf16.msra.mxu0 0
        %286 = vmatprep.subr.bf16.mxu0 0
        %287 = vmatpush1.bf16.msra.mxu0 0
        %288 = vmatprep.subr.bf16.mxu0 0
        %289 = vmatpush1.bf16.msra.mxu0 0
        %290 = vmatprep.subr.bf16.mxu0 0
        %291 = vmatpush1.bf16.msra.mxu0 0
        %292 = vmatprep.subr.bf16.mxu0 0
        %293 = vmatpush1.bf16.msra.mxu0 0
        %294 = vmatprep.subr.bf16.mxu0 0
        %295 = vmatpush1.bf16.msra.mxu0 0
        %296 = vmatprep.subr.bf16.mxu0 0
        %297 = vmatpush1.bf16.msra.mxu0 0
        %298 = vmatprep.subr.bf16.mxu0 0
        %299 = vmatpush1.bf16.msra.mxu0 0
        %300 = vmatprep.subr.bf16.mxu0 0
        %301 = vmatpush1.bf16.msra.mxu0 0
        %302 = vmatprep.mubr.bf16.mxu0 0
        %303 = vmatmul.mubr.bf16.gmra.mrb[0].mxu0 %v255
        %v304 = vpop.f32.mrb[0].mxu0
        %v305 = vadd.f32 %v231, %v304
        %v306 = vpop.f32.mrb[0].mxu0
        %v307 = vpop.f32.mrb[0].mxu0
        %v308 = vadd.f32 %v231, %v307
        %v309 = vpop.f32.mrb[0].mxu0
        %310 = vmatprep.mubr.bf16.mxu0 0
        %311 = vmatmul.mubr.bf16.gmra.mrb[0].mxu0 %v258
        %v312 = vpop.f32.mrb[0].mxu0
        %v313 = vadd.f32 %v231, %v312
        %v314 = vpop.f32.mrb[0].mxu0
        %v315 = vpop.f32.mrb[0].mxu0
        %v316 = vadd.f32 %v231, %v315
        %v317 = vpop.f32.mrb[0].mxu0
        %318 = vmatprep.mubr.bf16.mxu0 0
        %319 = vmatmul.mubr.bf16.gmra.mrb[0].mxu0 %v261
        %v320 = vpop.f32.mrb[0].mxu0
        %v321 = vadd.f32 %v231, %v320
        %v322 = vpop.f32.mrb[0].mxu0
        %v323 = vpop.f32.mrb[0].mxu0
        %v324 = vadd.f32 %v231, %v323
        %v325 = vpop.f32.mrb[0].mxu0
        %326 = vmatprep.mubr.bf16.mxu0 0
        %327 = vmatmul.mubr.bf16.gmra.mrb[0].mxu0 %v264
        %v328 = vpop.f32.mrb[0].mxu0
        %v329 = vadd.f32 %v231, %v328
        %v330 = vpop.f32.mrb[0].mxu0
        %v331 = vpop.f32.mrb[0].mxu0
        %v332 = vadd.f32 %v231, %v331
        %v333 = vpop.f32.mrb[0].mxu0
        %334 = vdwg.mxu0
        %v335 = vmax.f32 %v305, 0.0
        %v336 = vmax.f32 %v308, 0.0
        %v337 = vmax.f32 %v313, 0.0
        %v338 = vmax.f32 %v316, 0.0
        %v339 = vmax.f32 %v321, 0.0
        %v340 = vmax.f32 %v324, 0.0
        %v341 = vmax.f32 %v329, 0.0
        %v342 = vmax.f32 %v332, 0.0
        %v343 = vpack.c.bf16 %v336, %v335
        %v344 = vpack.c.bf16 %v338, %v337
        %v345 = vpack.c.bf16 %v340, %v339
        %v346 = vpack.c.bf16 %v342, %v341
        %v351 = vunpack.c.l.b16 %v343
        %v352 = vunpack.c.h.b16 %v343
        %v353 = vunpack.c.l.b16 %v344
        %v354 = vunpack.c.h.b16 %v344
        %v355 = vunpack.c.l.b16 %v345
        %v356 = vunpack.c.h.b16 %v345
        %v357 = vunpack.c.l.b16 %v346
        %v358 = vunpack.c.h.b16 %v346
        %v359 = vpack.c.b16 %v351, %v351
        %v360 = vpack.c.b16 %v352, %v352
        %v361 = vpack.c.b16 %v353, %v353
        %v362 = vpack.c.b16 %v354, %v354
        %v363 = vpack.c.b16 %v355, %v355
        %v364 = vpack.c.b16 %v356, %v356
        %v365 = vpack.c.b16 %v357, %v357
        %v366 = vpack.c.b16 %v358, %v358
        %vm375 = vcmask 125952
        %376 = vst.msk [vmem:[%s213] sm:$0xf] %vm375, %v359
        %377 = vst.msk [vmem:[%s213 + $0x4] sm:$0xf] %vm375, %v360
        %378 = vst.msk [vmem:[%s213 + $0x8] sm:$0xf] %vm375, %v361
        %379 = vst.msk [vmem:[%s213 + $0xc] sm:$0xf] %vm375, %v362
        %380 = vst.msk [vmem:[%s213 + $0x10] sm:$0xf] %vm375, %v363
        %381 = vst.msk [vmem:[%s213 + $0x14] sm:$0xf] %vm375, %v364
        %382 = vst.msk [vmem:[%s213 + $0x18] sm:$0xf] %vm375, %v365
        %383 = vst.msk [vmem:[%s213 + $0x1c] sm:$0xf] %vm375, %v366
        %s384 = sand.u32 %s97, 1
        %s385 = scalar_lea.sflag [#allocation4], %s384
        %s386 = sand.u32 %s97, 1
        %s387 = smul.addr %s386, 32
        %s388 = scalar_lea.vmem [#allocation8], %s387
        // Predicated region
        $region45: #{unet_block_forward.2} parent=31 // pred_check
          %p389 = pneg %p107
        $region46: #{unet_block_forward.2} parent=31 // pred_check_branch
          %391 = sbr.rel (%p389) target = $region48
        $region47: #{unet_block_forward.2} parent=31 // pred_region
          %s392 = smul.u32 8, %s21
          %s394 = ssub.s32 512, 512
          %395 = vsyncadd %s385, %s394
          %s396 = smul.addr %s392, 64
          %s397 = scalar_lea.hbm %s3, %s396
          %s398 = sshll.u32 %s388, 4
          %s399 = int_to_ptr.vmem [resolvable:$true] %s398
          %404 = dma.vmem_to_hbm [thread:$0]  %s399, 512, %s397, %s385, 64, 64, 4
        $region48: #{unet_block_forward.2} parent=31 // pred_fallthru
          _
      $region32: #{unet_block_forward.2} parent=5 // pred_fallthru
        _
      %p405 = scmp.le.s32.totalorder 2, %s16
      // Predicated region
      $region49: #{unet_block_forward.2} parent=5 // pred_check
        %p406 = pneg %p405
      $region50: #{unet_block_forward.2} parent=5 // pred_check_branch
        %408 = sbr.rel (%p406) target = $region52
      $region51: #{unet_block_forward.2} parent=5 // pred_region
        %s409 = ssub.s32 %s16, 2
        // Predicated region
        $region53: #{unet_block_forward.2} parent=51 // pred_check
          %p410 = pneg %p113
        $region54: #{unet_block_forward.2} parent=51 // pred_check_branch
          %412 = sbr.rel (%p410) target = $region56
        $region55: #{unet_block_forward.2} parent=51 // pred_region
          %s413 = sand.u32 %s98, 1
          %s414 = scalar_lea.sflag [#allocation4], %s413
          %s415 = sand.u32 %s98, 1
          %s416 = smul.addr %s415, 32
          %s417 = scalar_lea.vmem [#allocation8], %s416
          %418 = dma.done %s414, 512
        $region56: #{unet_block_forward.2} parent=51 // pred_fallthru
          _
      $region52: #{unet_block_forward.2} parent=5 // pred_fallthru
        _
    $region6: #{unet_block_forward.2} parent=1 // loop_footer
      %s20 = sadd.s32 1, %s16
    $region7: #{unet_block_forward.2} parent=1 // loop_footer_branch
      %15 = sbr.rel target = $region3
    $region8: #{unet_block_forward.2} parent=1 // loop_exit
      _
    %419 = vsyncpa [#allocation3], 1
    %s420 = scalar_lea.sflag [#allocation3], 1
    %421 = vsyncpa %s420, 1
    %422 = vsyncpa [#allocation6], 1
    %423 = vsyncpa [#allocation4], 1
    %s424 = scalar_lea.sflag [#allocation4], 1
    %425 = vsyncpa %s424, 1

// kernel: unet_block_forward.3
$region0: #{unet_block_forward.3}
  #allocation0 [shape = 'u32[]', space=smem, size = 0x4, offset = 0x4, fixed_abs, tag = 'smem constant byte address 0x4 - core index']
  #allocation1 [shape = 'u32[144,128]{1,0:T(1,128)}', space=vmem, size = 0x12000, scoped, tag = 'internal scratch']
  #allocation2 [shape = 'bf16[384,8]{1,0:T(16,128)(2,1)}', space=vmem, size = 0x18000, scoped, tag = 'scratch operand']
  #allocation3 [shape = 'bf16[288,72]{1,0:T(16,128)(2,1)}', space=vmem, size = 0x12000, scoped, tag = 'scratch operand']
  #allocation4 [shape = 'bf16[288,32]{1,0:T(16,128)(2,1)}', space=vmem, size = 0x12000, scoped, tag = 'scratch operand']
  #allocation5 [shape = 'bf16[192,288]{1,0:T(16,128)(2,1)}', space=vmem, size = 0x24000, scoped, tag = 'scratch operand']
  #allocation6 [shape = 's32[1]{0}', space=sflag, size = 0x4, scoped, tag = 'scratch operand']
  #allocation16 [shape = 's32[]', space=sflag, size = 0x4, offset = 0, fixed_abs, tag = 'sflag constant byte address 0x0 - dummy sync flag']
  #allocation17 [shape = 's32[]', space=sflag, size = 0x4, offset = 0, fixed_abs, tag = 'sflag constant byte address 0x0 - dummy sync flag']
  #allocation18 [shape = 'u32[]', space=smem, size = 0x4, offset = 0x44, fixed_abs, tag = 'smem constant byte address 0x44 - assertion arg 0']
  #allocation19 [shape = 'u32[]', space=smem, size = 0x4, offset = 0x48, fixed_abs, tag = 'smem constant byte address 0x48 - assertion arg 1']
  %s0 = inlined_call_operand.hbm [shape: bf16[1152,8], index: 0, kind: input, shape index: {}]
  %s1 = inlined_call_operand.hbm [shape: bf16[72,32], index: 1, kind: input, shape index: {}]
  %s2 = inlined_call_operand.hbm [shape: f32[1,32], index: 2, kind: input, shape index: {}]
  %s3 = inlined_call_operand.hbm [shape: bf16[288,32], index: 3, kind: input, shape index: {}]
  %s4 = inlined_call_operand.hbm [shape: f32[1,32], index: 4, kind: input, shape index: {}]
  %s5 = inlined_call_operand.hbm [shape: f32[2,16,16,32], index: 5, kind: output, shape index: {}]
  %s6 = sld [smem:[#allocation0]]
  $region69: #{unet_block_forward.3} parent=0
    _
  %s8 = ssub.s32 1, %s6
  %s9 = scalar_select 0, %s8, %s6
  $region1: #{unet_block_forward.3} parent=0
    #allocation7 [shape = 'u8[18432]{0}', space=vmem, size = 0x4800, scoped, tag = 'input window, operand 1, single buffered']
    #allocation8 [shape = 's32[2]{0}', space=sflag, size = 0x8, scoped, tag = 'scoped memory for unet_block_forward.3']
    #allocation9 [shape = 's32[2]{0}', space=sflag, size = 0x8, scoped, tag = 'scoped memory for unet_block_forward.3']
    #allocation10 [shape = 'u8[512]{0}', space=vmem, size = 0x400, scoped, tag = 'input window, operand 2, single buffered']
    #allocation11 [shape = 's32[1]{0}', space=sflag, size = 0x4, scoped, tag = 'scoped memory for unet_block_forward.3']
    #allocation12 [shape = 'u8[73728]{0}', space=vmem, size = 0x12000, scoped, tag = 'input window, operand 3, single buffered']
    #allocation13 [shape = 'u8[512]{0}', space=vmem, size = 0x400, scoped, tag = 'input window, operand 4, single buffered']
    #allocation14 [shape = 's32[1]{0}', space=sflag, size = 0x4, scoped, tag = 'scoped memory for unet_block_forward.3']
    #allocation15 [shape = 'u8[131072]{0}', space=vmem, size = 0x20000, scoped, tag = 'output window, operand 0']
    %10 = vsyncpa [#allocation8], 0
    %11 = vsyncpa [#allocation11], 0
    %12 = vsyncpa [#allocation14], 0
    %13 = vsyncpa [#allocation9], 0
    %s14 = scalar_lea.sflag [#allocation9], 1
    %15 = vsyncpa %s14, 0
    loop: start=0, step=1, limit=6
    $region2: #{unet_block_forward.3} parent=1 // loop_pre_header
      _
    $region3: #{unet_block_forward.3} parent=1 // loop_header
      %s17 = sphi 0, %s21
      %p18 = scmp.ge.s32.totalorder %s17, 6
      %s24 = sphi 0, %s36
      %s25 = sphi 0, %s32
      %s26 = sphi 0, %s24
      %s27 = sphi 0, %s25
      %s28 = sphi 0, %s26
      %s29 = sphi 0, %s27
      %s37 = sphi 0, %s37
      %s39 = sphi 0, %s37
      %s40 = sphi 0, %s39
      %s54 = sphi 0, %s40
      %s58 = sphi 0, %s58
      %s60 = sphi 0, %s58
      %s61 = sphi 0, %s60
      %s75 = sphi 0, %s61
      %s79 = sphi 0, %s79
      %s81 = sphi 0, %s79
      %s82 = sphi 0, %s81
      %s96 = sphi 0, %s82
      %s100 = sphi 0, %s100
      %s102 = sphi 0, %s100
      %s103 = sphi 0, %s102
      %s117 = sphi 0, %s103
      %s125 = sphi 0, %s127
      %s128 = sphi 0, %s125
      %s129 = sphi 0, %s128
      %s145 = sphi 0, %s129
    $region4: #{unet_block_forward.3} parent=1 // loop_header_branch
      %20 = sbr.rel (%p18) target = $region8
    $region5: #{unet_block_forward.3} parent=1 // loop_body
      %s22 = ssub.s32 %s17, 1
      %s23 = ssub.s32 %s17, 2
      %s30 = sadd.s32 1, %s25
      %p31 = scmp.ge.s32.totalorder %s30, 2
      %s32 = scalar_select %p31, 0, %s30
      %s33 = sadd.s32 1, %s24
      %s34 = scalar_select %p31, %s33, %s24
      %p35 = scmp.ge.s32.totalorder %s34, 2
      %s36 = scalar_select %p35, 0, %s34
      %s38 = sadd.s32 %s37, 1
      %p41 = scmp.eq.s32.totalorder %s17, 3
      %p42 = scmp.ne.s32.totalorder %s37, %s39
      %p43 = scmp.eq.s32.totalorder %s17, 0
      %p44 = por %p42, %p43
      %p45 = scmp.ne.s32.totalorder %s37, %s39
      %p46 = scmp.eq.s32.totalorder %s22, 3
      %p47 = por %p45, %p46
      %p48 = scmp.ne.s32.totalorder %s39, %s40
      %p49 = scmp.eq.s32.totalorder %s22, 0
      %p50 = por %p48, %p49
      %p51 = scmp.ne.s32.totalorder %s39, %s40
      %p52 = scmp.eq.s32.totalorder %s23, 3
      %p53 = por %p51, %p52
      %p55 = scmp.ne.s32.totalorder %s40, %s54
      %p56 = scmp.eq.s32.totalorder %s23, 0
      %p57 = por %p55, %p56
      %s59 = sadd.s32 %s58, 1
      %p62 = scmp.eq.s32.totalorder %s17, 3
      %p63 = scmp.ne.s32.totalorder %s58, %s60
      %p64 = scmp.eq.s32.totalorder %s17, 0
      %p65 = por %p63, %p64
      %p66 = scmp.ne.s32.totalorder %s58, %s60
      %p67 = scmp.eq.s32.totalorder %s22, 3
      %p68 = por %p66, %p67
      %p69 = scmp.ne.s32.totalorder %s60, %s61
      %p70 = scmp.eq.s32.totalorder %s22, 0
      %p71 = por %p69, %p70
      %p72 = scmp.ne.s32.totalorder %s60, %s61
      %p73 = scmp.eq.s32.totalorder %s23, 3
      %p74 = por %p72, %p73
      %p76 = scmp.ne.s32.totalorder %s61, %s75
      %p77 = scmp.eq.s32.totalorder %s23, 0
      %p78 = por %p76, %p77
      %s80 = sadd.s32 %s79, 1
      %p83 = scmp.eq.s32.totalorder %s17, 3
      %p84 = scmp.ne.s32.totalorder %s79, %s81
      %p85 = scmp.eq.s32.totalorder %s17, 0
      %p86 = por %p84, %p85
      %p87 = scmp.ne.s32.totalorder %s79, %s81
      %p88 = scmp.eq.s32.totalorder %s22, 3
      %p89 = por %p87, %p88
      %p90 = scmp.ne.s32.totalorder %s81, %s82
      %p91 = scmp.eq.s32.totalorder %s22, 0
      %p92 = por %p90, %p91
      %p93 = scmp.ne.s32.totalorder %s81, %s82
      %p94 = scmp.eq.s32.totalorder %s23, 3
      %p95 = por %p93, %p94
      %p97 = scmp.ne.s32.totalorder %s82, %s96
      %p98 = scmp.eq.s32.totalorder %s23, 0
      %p99 = por %p97, %p98
      %s101 = sadd.s32 %s100, 1
      %p104 = scmp.eq.s32.totalorder %s17, 3
      %p105 = scmp.ne.s32.totalorder %s100, %s102
      %p106 = scmp.eq.s32.totalorder %s17, 0
      %p107 = por %p105, %p106
      %p108 = scmp.ne.s32.totalorder %s100, %s102
      %p109 = scmp.eq.s32.totalorder %s22, 3
      %p110 = por %p108, %p109
      %p111 = scmp.ne.s32.totalorder %s102, %s103
      %p112 = scmp.eq.s32.totalorder %s22, 0
      %p113 = por %p111, %p112
      %p114 = scmp.ne.s32.totalorder %s102, %s103
      %p115 = scmp.eq.s32.totalorder %s23, 3
      %p116 = por %p114, %p115
      %p118 = scmp.ne.s32.totalorder %s103, %s117
      %p119 = scmp.eq.s32.totalorder %s23, 0
      %p120 = por %p118, %p119
      %s121 = ssub.s32 %s24, %s36
      %s122 = ssub.s32 %s25, %s32
      %s123 = sor.u32 %s121, %s122
      %p124 = scmp.eq.s32.totalorder %s123, 0
      %s126 = sadd.s32 %s125, 1
      %s127 = scalar_select %p124, %s125, %s126
      %p130 = pneg %p124
      %p131 = scmp.eq.s32.totalorder %s17, 3
      %p132 = por %p130, %p131
      %p133 = scmp.ne.s32.totalorder %s125, %s128
      %p134 = scmp.eq.s32.totalorder %s17, 0
      %p135 = por %p133, %p134
      %p136 = scmp.ne.s32.totalorder %s125, %s128
      %p137 = scmp.eq.s32.totalorder %s22, 3
      %p138 = por %p136, %p137
      %p139 = scmp.ne.s32.totalorder %s128, %s129
      %p140 = scmp.eq.s32.totalorder %s22, 0
      %p141 = por %p139, %p140
      %p142 = scmp.ne.s32.totalorder %s128, %s129
      %p143 = scmp.eq.s32.totalorder %s23, 3
      %p144 = por %p142, %p143
      %p146 = scmp.ne.s32.totalorder %s129, %s145
      %p147 = scmp.eq.s32.totalorder %s23, 0
      %p148 = por %p146, %p147
      %p149 = scmp.le.s32.totalorder 1, %s17
      %p150 = scmp.lt.s32.totalorder %s17, 5
      %p151 = pnand %p149, %p150
      %p152 = pneg %p151
      // Predicated region
      $region9: #{unet_block_forward.3} parent=5 // pred_check
        _
      $region10: #{unet_block_forward.3} parent=5 // pred_check_branch
        %154 = sbr.rel (%p151) target = $region12
      $region11: #{unet_block_forward.3} parent=5 // pred_region
        %s155 = ssub.s32 %s17, 1
        // Predicated region
        $region13: #{unet_block_forward.3} parent=11 // pred_check
          %p156 = pneg %p50
        $region14: #{unet_block_forward.3} parent=11 // pred_check_branch
          %158 = sbr.rel (%p156) target = $region16
        $region15: #{unet_block_forward.3} parent=11 // pred_region
          %s160 = ssub.s32 576, 576
          %161 = vsyncadd [#allocation8], %s160
          %s162 = sshll.u32 [#allocation7], 4
          %s163 = int_to_ptr.vmem [resolvable:$true] %s162
          %168 = dma.hbm_to_vmem [thread:$0]  %s1, 576, %s163, [#allocation8], 64, 64, 4
        $region16: #{unet_block_forward.3} parent=11 // pred_fallthru
          _
        // Predicated region
        $region17: #{unet_block_forward.3} parent=11 // pred_check
          %p169 = pneg %p71
        $region18: #{unet_block_forward.3} parent=11 // pred_check_branch
          %171 = sbr.rel (%p169) target = $region20
        $region19: #{unet_block_forward.3} parent=11 // pred_region
          %s173 = ssub.s32 16, 16
          %174 = vsyncadd [#allocation11], %s173
          %s176 = sshll.u32 [#allocation10], 4
          %s177 = int_to_ptr.vmem [resolvable:$true] %s176
          %179 = dma.hbm_to_vmem [thread:$0]  %s2, 16, %s177, [#allocation11]
        $region20: #{unet_block_forward.3} parent=11 // pred_fallthru
          _
        // Predicated region
        $region21: #{unet_block_forward.3} parent=11 // pred_check
          %p180 = pneg %p92
        $region22: #{unet_block_forward.3} parent=11 // pred_check_branch
          %182 = sbr.rel (%p180) target = $region24
        $region23: #{unet_block_forward.3} parent=11 // pred_region
          %s184 = ssub.s32 2304, 2304
          %185 = vsyncadd [#allocation11], %s184
          %s186 = sshll.u32 [#allocation12], 4
          %s187 = int_to_ptr.vmem [resolvable:$true] %s186
          %192 = dma.hbm_to_vmem [thread:$0]  %s3, 2304, %s187, [#allocation11], 64, 64, 4
        $region24: #{unet_block_forward.3} parent=11 // pred_fallthru
          _
        // Predicated region
        $region25: #{unet_block_forward.3} parent=11 // pred_check
          %p193 = pneg %p113
        $region26: #{unet_block_forward.3} parent=11 // pred_check_branch
          %195 = sbr.rel (%p193) target = $region28
        $region27: #{unet_block_forward.3} parent=11 // pred_region
          %s197 = ssub.s32 16, 16
          %198 = vsyncadd [#allocation14], %s197
          %s200 = sshll.u32 [#allocation13], 4
          %s201 = int_to_ptr.vmem [resolvable:$true] %s200
          %203 = dma.hbm_to_vmem [thread:$0]  %s4, 16, %s201, [#allocation14]
        $region28: #{unet_block_forward.3} parent=11 // pred_fallthru
          _
      $region12: #{unet_block_forward.3} parent=5 // pred_fallthru
        _
      %p204 = scmp.lt.s32.totalorder %s17, 4
      // Predicated region
      $region29: #{unet_block_forward.3} parent=5 // pred_check
        %p205 = pneg %p204
      $region30: #{unet_block_forward.3} parent=5 // pred_check_branch
        %207 = sbr.rel (%p205) target = $region32
      $region31: #{unet_block_forward.3} parent=5 // pred_region
        _
      $region32: #{unet_block_forward.3} parent=5 // pred_fallthru
        _
      %p208 = scmp.le.s32.totalorder 1, %s17
      %p209 = scmp.lt.s32.totalorder %s17, 5
      %p210 = pnand %p208, %p209
      %p211 = pneg %p210
      // Predicated region
      $region33: #{unet_block_forward.3} parent=5 // pred_check
        _
      $region34: #{unet_block_forward.3} parent=5 // pred_check_branch
        %213 = sbr.rel (%p210) target = $region36
      $region35: #{unet_block_forward.3} parent=5 // pred_region
        %s214 = ssub.s32 %s17, 1
        // Predicated region
        $region37: #{unet_block_forward.3} parent=35 // pred_check
          %p215 = pneg %p50
        $region38: #{unet_block_forward.3} parent=35 // pred_check_branch
          %217 = sbr.rel (%p215) target = $region40
        $region39: #{unet_block_forward.3} parent=35 // pred_region
          %218 = dma.done [#allocation8], 576
        $region40: #{unet_block_forward.3} parent=35 // pred_fallthru
          _
        // Predicated region
        $region41: #{unet_block_forward.3} parent=35 // pred_check
          %p219 = pneg %p71
        $region42: #{unet_block_forward.3} parent=35 // pred_check_branch
          %221 = sbr.rel (%p219) target = $region44
        $region43: #{unet_block_forward.3} parent=35 // pred_region
          %222 = dma.done [#allocation11], 16
        $region44: #{unet_block_forward.3} parent=35 // pred_fallthru
          _
        // Predicated region
        $region45: #{unet_block_forward.3} parent=35 // pred_check
          %p223 = pneg %p92
        $region46: #{unet_block_forward.3} parent=35 // pred_check_branch
          %225 = sbr.rel (%p223) target = $region48
        $region47: #{unet_block_forward.3} parent=35 // pred_region
          %226 = dma.done [#allocation11], 2304
        $region48: #{unet_block_forward.3} parent=35 // pred_fallthru
          _
        // Predicated region
        $region49: #{unet_block_forward.3} parent=35 // pred_check
          %p227 = pneg %p113
        $region50: #{unet_block_forward.3} parent=35 // pred_check_branch
          %229 = sbr.rel (%p227) target = $region52
        $region51: #{unet_block_forward.3} parent=35 // pred_region
          %230 = dma.done [#allocation14], 16
        $region52: #{unet_block_forward.3} parent=35 // pred_fallthru
          _
        %p231 = pneg %p50
        %p232 = pneg %p47
        %p233 = pneg %p71
        %p234 = pneg %p68
        %p235 = pneg %p92
        %p236 = pneg %p89
        %p237 = pneg %p113
        %p238 = pneg %p110
        %p239 = pneg %p141
        %p240 = pneg %p138
        %s241 = sand.u32 %s128, 1
        %s242 = scalar_lea.sflag [#allocation9], %s241
        %s243 = sand.u32 %s128, 1
        %s244 = smul.addr %s243, 128
        %s245 = scalar_lea.vmem [#allocation15], %s244
        %s246 = smul.u32 8, %s27
        %s248 = smul.u32 %s26, 576
        %s249 = smul.u32 %s27, 192
        %s250 = sadd.s32 %s248, %s249
        %s251 = sshra.s32 %s250, 3
        %s252 = sand.u32 %s250, 7
        %s253 = smul.addr %s251, 64
        %s254 = scalar_lea.hbm %s0, %s253
        // Predicated region
        $region53: #{unet_block_forward.3} parent=35 // pred_check
          _
        $region54: #{unet_block_forward.3} parent=35 // pred_check_branch
          %256 = sbr.rel target = $region56
        $region55: #{unet_block_forward.3} parent=35 // pred_region
          %257 = sst [smem:[#allocation18]] [#allocation17]
          %258 = sst [smem:[#allocation19]] [#allocation16]
        $region56: #{unet_block_forward.3} parent=35 // pred_fallthru
          _
        %260 = shalt.err (0)
        %s262 = sshll.u32 [#allocation2], 4
        %s263 = int_to_ptr.vmem [resolvable:$true] %s262
        %265 = dma.hbm_to_vmem [thread:$0]  %s254, 3072, %s263, [#allocation6]
        %s266 = smul.u32 4, 48
        %s267 = smul.u32 %s266, 1
        %s268 = sshll.u32 %s267, 4
        %269 = dma.done [#allocation6], %s268
        %v270 = vld [vmem:[#allocation2 + $0x8] sm:$0xf8]
        %v271 = vld [vmem:[#allocation2 + $0x10] sm:$0xff]
        %v272 = vld [vmem:[#allocation2 + $0x18] sm:$0xff]
        %v273 = vld [vmem:[#allocation2 + $0x20] sm:$0xff]
        %v274 = vld [vmem:[#allocation2 + $0x28] sm:$0xff]
        %v275 = vld [vmem:[#allocation2 + $0x30] sm:$0xff]
        %v276 = vld [vmem:[#allocation2 + $0x38] sm:$0xff]
        %v277 = vld [vmem:[#allocation2 + $0x40] sm:$0xff]
        %v278 = vld [vmem:[#allocation2 + $0x48] sm:$0xff]
        %v279 = vld [vmem:[#allocation2 + $0x50] sm:$0xff]
        %v280 = vld [vmem:[#allocation2 + $0x58] sm:$0xff]
        %v281 = vld [vmem:[#allocation2 + $0x60] sm:$0xff]
        %v282 = vld [vmem:[#allocation2 + $0x68] sm:$0xff]
        %v283 = vld [vmem:[#allocation2 + $0x70] sm:$0xff]
        %v284 = vld [vmem:[#allocation2 + $0x78] sm:$0xff]
        %v285 = vld [vmem:[#allocation2 + $0x80] sm:$0xff]
        %v286 = vld [vmem:[#allocation2 + $0x88] sm:$0xff]
        %v287 = vld [vmem:[#allocation2 + $0x90] sm:$0xff]
        %v288 = vld [vmem:[#allocation2 + $0x98] sm:$0xf]
        %vm289 = vsmask.f32 4352
        %v291 = vshrl.u32 %v270, 16
        %v293 = vrot.slane %v291, 3
        %v294 = vshll.u32 %v270, 16
        %v296 = vrot.slane %v294, 4
        %v297 = vor.u32 %v293, %v296
        %v299 = vshrl.u32 %v271, 16
        %v301 = vrot.slane %v299, 3
        %v302 = vshll.u32 %v271, 16
        %v304 = vrot.slane %v302, 4
        %v305 = vor.u32 %v301, %v304
        %v306 = vsel %vm289, %v297, %v305
        %v308 = vshrl.u32 %v272, 16
        %v310 = vrot.slane %v308, 3
        %v311 = vshll.u32 %v272, 16
        %v313 = vrot.slane %v311, 4
        %v314 = vor.u32 %v310, %v313
        %v315 = vsel %vm289, %v305, %v314
        %v317 = vshrl.u32 %v273, 16
        %v319 = vrot.slane %v317, 3
        %v320 = vshll.u32 %v273, 16
        %v322 = vrot.slane %v320, 4
        %v323 = vor.u32 %v319, %v322
        %v324 = vsel %vm289, %v314, %v323
        %v326 = vshrl.u32 %v274, 16
        %v328 = vrot.slane %v326, 3
        %v329 = vshll.u32 %v274, 16
        %v331 = vrot.slane %v329, 4
        %v332 = vor.u32 %v328, %v331
        %v333 = vsel %vm289, %v323, %v332
        %v335 = vshrl.u32 %v275, 16
        %v337 = vrot.slane %v335, 3
        %v338 = vshll.u32 %v275, 16
        %v340 = vrot.slane %v338, 4
        %v341 = vor.u32 %v337, %v340
        %v342 = vsel %vm289, %v332, %v341
        %v344 = vshrl.u32 %v276, 16
        %v346 = vrot.slane %v344, 3
        %v347 = vshll.u32 %v276, 16
        %v349 = vrot.slane %v347, 4
        %v350 = vor.u32 %v346, %v349
        %v351 = vsel %vm289, %v341, %v350
        %v353 = vshrl.u32 %v277, 16
        %v355 = vrot.slane %v353, 3
        %v356 = vshll.u32 %v277, 16
        %v358 = vrot.slane %v356, 4
        %v359 = vor.u32 %v355, %v358
        %v360 = vsel %vm289, %v350, %v359
        %v362 = vshrl.u32 %v278, 16
        %v364 = vrot.slane %v362, 3
        %v365 = vshll.u32 %v278, 16
        %v367 = vrot.slane %v365, 4
        %v368 = vor.u32 %v364, %v367
        %v369 = vsel %vm289, %v359, %v368
        %v371 = vshrl.u32 %v279, 16
        %v373 = vrot.slane %v371, 3
        %v374 = vshll.u32 %v279, 16
        %v376 = vrot.slane %v374, 4
        %v377 = vor.u32 %v373, %v376
        %v378 = vsel %vm289, %v368, %v377
        %v380 = vshrl.u32 %v280, 16
        %v382 = vrot.slane %v380, 3
        %v383 = vshll.u32 %v280, 16
        %v385 = vrot.slane %v383, 4
        %v386 = vor.u32 %v382, %v385
        %v387 = vsel %vm289, %v377, %v386
        %v389 = vshrl.u32 %v281, 16
        %v391 = vrot.slane %v389, 3
        %v392 = vshll.u32 %v281, 16
        %v394 = vrot.slane %v392, 4
        %v395 = vor.u32 %v391, %v394
        %v396 = vsel %vm289, %v386, %v395
        %v398 = vshrl.u32 %v282, 16
        %v400 = vrot.slane %v398, 3
        %v401 = vshll.u32 %v282, 16
        %v403 = vrot.slane %v401, 4
        %v404 = vor.u32 %v400, %v403
        %v405 = vsel %vm289, %v395, %v404
        %v407 = vshrl.u32 %v283, 16
        %v409 = vrot.slane %v407, 3
        %v410 = vshll.u32 %v283, 16
        %v412 = vrot.slane %v410, 4
        %v413 = vor.u32 %v409, %v412
        %v414 = vsel %vm289, %v404, %v413
        %v416 = vshrl.u32 %v284, 16
        %v418 = vrot.slane %v416, 3
        %v419 = vshll.u32 %v284, 16
        %v421 = vrot.slane %v419, 4
        %v422 = vor.u32 %v418, %v421
        %v423 = vsel %vm289, %v413, %v422
        %v425 = vshrl.u32 %v285, 16
        %v427 = vrot.slane %v425, 3
        %v428 = vshll.u32 %v285, 16
        %v430 = vrot.slane %v428, 4
        %v431 = vor.u32 %v427, %v430
        %v432 = vsel %vm289, %v422, %v431
        %v434 = vshrl.u32 %v286, 16
        %v436 = vrot.slane %v434, 3
        %v437 = vshll.u32 %v286, 16
        %v439 = vrot.slane %v437, 4
        %v440 = vor.u32 %v436, %v439
        %v441 = vsel %vm289, %v431, %v440
        %v443 = vshrl.u32 %v287, 16
        %v445 = vrot.slane %v443, 3
        %v446 = vshll.u32 %v287, 16
        %v448 = vrot.slane %v446, 4
        %v449 = vor.u32 %v445, %v448
        %v450 = vsel %vm289, %v440, %v449
        %v452 = vshrl.u32 %v288, 16
        %v454 = vrot.slane %v452, 3
        %v455 = vshll.u32 %v288, 16
        %v457 = vrot.slane %v455, 4
        %v458 = vor.u32 %v454, %v457
        %v459 = vsel %vm289, %v449, %v458
        %vm478 = vcmask 64512
        %479 = vst.msk [vmem:[#allocation3] sm:$0xff] %vm478, %v306
        %480 = vst.msk [vmem:[#allocation3 + $0x8] sm:$0xff] %vm478, %v315
        %481 = vst.msk [vmem:[#allocation3 + $0x10] sm:$0xff] %vm478, %v324
        %482 = vst.msk [vmem:[#allocation3 + $0x18] sm:$0xff] %vm478, %v333
        %483 = vst.msk [vmem:[#allocation3 + $0x20] sm:$0xff] %vm478, %v342
        %484 = vst.msk [vmem:[#allocation3 + $0x28] sm:$0xff] %vm478, %v351
        %485 = vst.msk [vmem:[#allocation3 + $0x30] sm:$0xff] %vm478, %v360
        %486 = vst.msk [vmem:[#allocation3 + $0x38] sm:$0xff] %vm478, %v369
        %487 = vst.msk [vmem:[#allocation3 + $0x40] sm:$0xff] %vm478, %v378
        %488 = vst.msk [vmem:[#allocation3 + $0x48] sm:$0xff] %vm478, %v387
        %489 = vst.msk [vmem:[#allocation3 + $0x50] sm:$0xff] %vm478, %v396
        %490 = vst.msk [vmem:[#allocation3 + $0x58] sm:$0xff] %vm478, %v405
        %491 = vst.msk [vmem:[#allocation3 + $0x60] sm:$0xff] %vm478, %v414
        %492 = vst.msk [vmem:[#allocation3 + $0x68] sm:$0xff] %vm478, %v423
        %493 = vst.msk [vmem:[#allocation3 + $0x70] sm:$0xff] %vm478, %v432
        %494 = vst.msk [vmem:[#allocation3 + $0x78] sm:$0xff] %vm478, %v441
        %495 = vst.msk [vmem:[#allocation3 + $0x80] sm:$0xff] %vm478, %v450
        %496 = vst.msk [vmem:[#allocation3 + $0x88] sm:$0xff] %vm478, %v459
        %v497 = vld [vmem:[#allocation2 + $0x8] sm:$0xf0]
        %v498 = vld [vmem:[#allocation2 + $0x10] sm:$0xff]
        %v499 = vld [vmem:[#allocation2 + $0x18] sm:$0xff]
        %v500 = vld [vmem:[#allocation2 + $0x20] sm:$0xff]
        %v501 = vld [vmem:[#allocation2 + $0x28] sm:$0xff]
        %v502 = vld [vmem:[#allocation2 + $0x30] sm:$0xff]
        %v503 = vld [vmem:[#allocation2 + $0x38] sm:$0xff]
        %v504 = vld [vmem:[#allocation2 + $0x40] sm:$0xff]
        %v505 = vld [vmem:[#allocation2 + $0x48] sm:$0xff]
        %v506 = vld [vmem:[#allocation2 + $0x50] sm:$0xff]
        %v507 = vld [vmem:[#allocation2 + $0x58] sm:$0xff]
        %v508 = vld [vmem:[#allocation2 + $0x60] sm:$0xff]
        %v509 = vld [vmem:[#allocation2 + $0x68] sm:$0xff]
        %v510 = vld [vmem:[#allocation2 + $0x70] sm:$0xff]
        %v511 = vld [vmem:[#allocation2 + $0x78] sm:$0xff]
        %v512 = vld [vmem:[#allocation2 + $0x80] sm:$0xff]
        %v513 = vld [vmem:[#allocation2 + $0x88] sm:$0xff]
        %v514 = vld [vmem:[#allocation2 + $0x90] sm:$0xff]
        %v515 = vld [vmem:[#allocation2 + $0x98] sm:$0xf]
        %vm535 = vcmask 1043456
        %v536 = vrot.slane %v497, 4
        %v537 = vrot.slane %v498, 4
        %v538 = vsel %vm535, %v536, %v537
        %v539 = vrot.slane %v499, 4
        %v540 = vsel %vm535, %v537, %v539
        %v541 = vrot.slane %v500, 4
        %v542 = vsel %vm535, %v539, %v541
        %v543 = vrot.slane %v501, 4
        %v544 = vsel %vm535, %v541, %v543
        %v545 = vrot.slane %v502, 4
        %v546 = vsel %vm535, %v543, %v545
        %v547 = vrot.slane %v503, 4
        %v548 = vsel %vm535, %v545, %v547
        %v549 = vrot.slane %v504, 4
        %v550 = vsel %vm535, %v547, %v549
        %v551 = vrot.slane %v505, 4
        %v552 = vsel %vm535, %v549, %v551
        %v553 = vrot.slane %v506, 4
        %v554 = vsel %vm535, %v551, %v553
        %v555 = vrot.slane %v507, 4
        %v556 = vsel %vm535, %v553, %v555
        %v557 = vrot.slane %v508, 4
        %v558 = vsel %vm535, %v555, %v557
        %v559 = vrot.slane %v509, 4
        %v560 = vsel %vm535, %v557, %v559
        %v561 = vrot.slane %v510, 4
        %v562 = vsel %vm535, %v559, %v561
        %v563 = vrot.slane %v511, 4
        %v564 = vsel %vm535, %v561, %v563
        %v565 = vrot.slane %v512, 4
        %v566 = vsel %vm535, %v563, %v565
        %v567 = vrot.slane %v513, 4
        %v568 = vsel %vm535, %v565, %v567
        %v569 = vrot.slane %v514, 4
        %v570 = vsel %vm535, %v567, %v569
        %v571 = vrot.slane %v515, 4
        %v572 = vsel %vm535, %v569, %v571
        %573 = vrot.lane.b32.xlu0 %v538, 8
        %v574 = vpop.permute.xlu0 %573
        %575 = vrot.lane.b32.xlu0 %v540, 8
        %v576 = vpop.permute.xlu0 %575
        %577 = vrot.lane.b32.xlu0 %v542, 8
        %v578 = vpop.permute.xlu0 %577
        %579 = vrot.lane.b32.xlu0 %v544, 8
        %v580 = vpop.permute.xlu0 %579
        %581 = vrot.lane.b32.xlu0 %v546, 8
        %v582 = vpop.permute.xlu0 %581
        %583 = vrot.lane.b32.xlu0 %v548, 8
        %v584 = vpop.permute.xlu0 %583
        %585 = vrot.lane.b32.xlu0 %v550, 8
        %v586 = vpop.permute.xlu0 %585
        %587 = vrot.lane.b32.xlu0 %v552, 8
        %v588 = vpop.permute.xlu0 %587
        %589 = vrot.lane.b32.xlu0 %v554, 8
        %v590 = vpop.permute.xlu0 %589
        %591 = vrot.lane.b32.xlu0 %v556, 8
        %v592 = vpop.permute.xlu0 %591
        %593 = vrot.lane.b32.xlu0 %v558, 8
        %v594 = vpop.permute.xlu0 %593
        %595 = vrot.lane.b32.xlu0 %v560, 8
        %v596 = vpop.permute.xlu0 %595
        %597 = vrot.lane.b32.xlu0 %v562, 8
        %v598 = vpop.permute.xlu0 %597
        %599 = vrot.lane.b32.xlu0 %v564, 8
        %v600 = vpop.permute.xlu0 %599
        %601 = vrot.lane.b32.xlu0 %v566, 8
        %v602 = vpop.permute.xlu0 %601
        %603 = vrot.lane.b32.xlu0 %v568, 8
        %v604 = vpop.permute.xlu0 %603
        %605 = vrot.lane.b32.xlu0 %v570, 8
        %v606 = vpop.permute.xlu0 %605
        %607 = vrot.lane.b32.xlu0 %v572, 8
        %v608 = vpop.permute.xlu0 %607
        %vm627 = vcmask 130112
        %628 = vst.msk [vmem:[#allocation3] sm:$0xff] %vm627, %v574
        %629 = vst.msk [vmem:[#allocation3 + $0x8] sm:$0xff] %vm627, %v576
        %630 = vst.msk [vmem:[#allocation3 + $0x10] sm:$0xff] %vm627, %v578
        %631 = vst.msk [vmem:[#allocation3 + $0x18] sm:$0xff] %vm627, %v580
        %632 = vst.msk [vmem:[#allocation3 + $0x20] sm:$0xff] %vm627, %v582
        %633 = vst.msk [vmem:[#allocation3 + $0x28] sm:$0xff] %vm627, %v584
        %634 = vst.msk [vmem:[#allocation3 + $0x30] sm:$0xff] %vm627, %v586
        %635 = vst.msk [vmem:[#allocation3 + $0x38] sm:$0xff] %vm627, %v588
        %636 = vst.msk [vmem:[#allocation3 + $0x40] sm:$0xff] %vm627, %v590
        %637 = vst.msk [vmem:[#allocation3 + $0x48] sm:$0xff] %vm627, %v592
        %638 = vst.msk [vmem:[#allocation3 + $0x50] sm:$0xff] %vm627, %v594
        %639 = vst.msk [vmem:[#allocation3 + $0x58] sm:$0xff] %vm627, %v596
        %640 = vst.msk [vmem:[#allocation3 + $0x60] sm:$0xff] %vm627, %v598
        %641 = vst.msk [vmem:[#allocation3 + $0x68] sm:$0xff] %vm627, %v600
        %642 = vst.msk [vmem:[#allocation3 + $0x70] sm:$0xff] %vm627, %v602
        %643 = vst.msk [vmem:[#allocation3 + $0x78] sm:$0xff] %vm627, %v604
        %644 = vst.msk [vmem:[#allocation3 + $0x80] sm:$0xff] %vm627, %v606
        %645 = vst.msk [vmem:[#allocation3 + $0x88] sm:$0xff] %vm627, %v608
        %v646 = vld [vmem:[#allocation2 + $0x8] sm:$0xf0]
        %v647 = vld [vmem:[#allocation2 + $0x10] sm:$0xff]
        %v648 = vld [vmem:[#allocation2 + $0x18] sm:$0xff]
        %v649 = vld [vmem:[#allocation2 + $0x20] sm:$0xff]
        %v650 = vld [vmem:[#allocation2 + $0x28] sm:$0xff]
        %v651 = vld [vmem:[#allocation2 + $0x30] sm:$0xff]
        %v652 = vld [vmem:[#allocation2 + $0x38] sm:$0xff]
        %v653 = vld [vmem:[#allocation2 + $0x40] sm:$0xff]
        %v654 = vld [vmem:[#allocation2 + $0x48] sm:$0xff]
        %v655 = vld [vmem:[#allocation2 + $0x50] sm:$0xff]
        %v656 = vld [vmem:[#allocation2 + $0x58] sm:$0xff]
        %v657 = vld [vmem:[#allocation2 + $0x60] sm:$0xff]
        %v658 = vld [vmem:[#allocation2 + $0x68] sm:$0xff]
        %v659 = vld [vmem:[#allocation2 + $0x70] sm:$0xff]
        %v660 = vld [vmem:[#allocation2 + $0x78] sm:$0xff]
        %v661 = vld [vmem:[#allocation2 + $0x80] sm:$0xff]
        %v662 = vld [vmem:[#allocation2 + $0x88] sm:$0xff]
        %v663 = vld [vmem:[#allocation2 + $0x90] sm:$0xff]
        %v664 = vld [vmem:[#allocation2 + $0x98] sm:$0x1f]
        %vm665 = vsmask.f32 3328
        %v667 = vshrl.u32 %v646, 16
        %v669 = vrot.slane %v667, 4
        %v670 = vshll.u32 %v646, 16
        %v672 = vrot.slane %v670, 5
        %v673 = vor.u32 %v669, %v672
        %v675 = vshrl.u32 %v647, 16
        %v677 = vrot.slane %v675, 4
        %v678 = vshll.u32 %v647, 16
        %v680 = vrot.slane %v678, 5
        %v681 = vor.u32 %v677, %v680
        %v682 = vsel %vm665, %v673, %v681
        %v684 = vshrl.u32 %v648, 16
        %v686 = vrot.slane %v684, 4
        %v687 = vshll.u32 %v648, 16
        %v689 = vrot.slane %v687, 5
        %v690 = vor.u32 %v686, %v689
        %v691 = vsel %vm665, %v681, %v690
        %v693 = vshrl.u32 %v649, 16
        %v695 = vrot.slane %v693, 4
        %v696 = vshll.u32 %v649, 16
        %v698 = vrot.slane %v696, 5
        %v699 = vor.u32 %v695, %v698
        %v700 = vsel %vm665, %v690, %v699
        %v702 = vshrl.u32 %v650, 16
        %v704 = vrot.slane %v702, 4
        %v705 = vshll.u32 %v650, 16
        %v707 = vrot.slane %v705, 5
        %v708 = vor.u32 %v704, %v707
        %v709 = vsel %vm665, %v699, %v708
        %v711 = vshrl.u32 %v651, 16
        %v713 = vrot.slane %v711, 4
        %v714 = vshll.u32 %v651, 16
        %v716 = vrot.slane %v714, 5
        %v717 = vor.u32 %v713, %v716
        %v718 = vsel %vm665, %v708, %v717
        %v720 = vshrl.u32 %v652, 16
        %v722 = vrot.slane %v720, 4
        %v723 = vshll.u32 %v652, 16
        %v725 = vrot.slane %v723, 5
        %v726 = vor.u32 %v722, %v725
        %v727 = vsel %vm665, %v717, %v726
        %v729 = vshrl.u32 %v653, 16
        %v731 = vrot.slane %v729, 4
        %v732 = vshll.u32 %v653, 16
        %v734 = vrot.slane %v732, 5
        %v735 = vor.u32 %v731, %v734
        %v736 = vsel %vm665, %v726, %v735
        %v738 = vshrl.u32 %v654, 16
        %v740 = vrot.slane %v738, 4
        %v741 = vshll.u32 %v654, 16
        %v743 = vrot.slane %v741, 5
        %v744 = vor.u32 %v740, %v743
        %v745 = vsel %vm665, %v735, %v744
        %v747 = vshrl.u32 %v655, 16
        %v749 = vrot.slane %v747, 4
        %v750 = vshll.u32 %v655, 16
        %v752 = vrot.slane %v750, 5
        %v753 = vor.u32 %v749, %v752
        %v754 = vsel %vm665, %v744, %v753
        %v756 = vshrl.u32 %v656, 16
        %v758 = vrot.slane %v756, 4
        %v759 = vshll.u32 %v656, 16
        %v761 = vrot.slane %v759, 5
        %v762 = vor.u32 %v758, %v761
        %v763 = vsel %vm665, %v753, %v762
        %v765 = vshrl.u32 %v657, 16
        %v767 = vrot.slane %v765, 4
        %v768 = vshll.u32 %v657, 16
        %v770 = vrot.slane %v768, 5
        %v771 = vor.u32 %v767, %v770
        %v772 = vsel %vm665, %v762, %v771
        %v774 = vshrl.u32 %v658, 16
        %v776 = vrot.slane %v774, 4
        %v777 = vshll.u32 %v658, 16
        %v779 = vrot.slane %v777, 5
        %v780 = vor.u32 %v776, %v779
        %v781 = vsel %vm665, %v771, %v780
        %v783 = vshrl.u32 %v659, 16
        %v785 = vrot.slane %v783, 4
        %v786 = vshll.u32 %v659, 16
        %v788 = vrot.slane %v786, 5
        %v789 = vor.u32 %v785, %v788
        %v790 = vsel %vm665, %v780, %v789
        %v792 = vshrl.u32 %v660, 16
        %v794 = vrot.slane %v792, 4
        %v795 = vshll.u32 %v660, 16
        %v797 = vrot.slane %v795, 5
        %v798 = vor.u32 %v794, %v797
        %v799 = vsel %vm665, %v789, %v798
        %v801 = vshrl.u32 %v661, 16
        %v803 = vrot.slane %v801, 4
        %v804 = vshll.u32 %v661, 16
        %v806 = vrot.slane %v804, 5
        %v807 = vor.u32 %v803, %v806
        %v808 = vsel %vm665, %v798, %v807
        %v810 = vshrl.u32 %v662, 16
        %v812 = vrot.slane %v810, 4
        %v813 = vshll.u32 %v662, 16
        %v815 = vrot.slane %v813, 5
        %v816 = vor.u32 %v812, %v815
        %v817 = vsel %vm665, %v807, %v816
        %v819 = vshrl.u32 %v663, 16
        %v821 = vrot.slane %v819, 4
        %v822 = vshll.u32 %v663, 16
        %v824 = vrot.slane %v822, 5
        %v825 = vor.u32 %v821, %v824
        %v826 = vsel %vm665, %v816, %v825
        %v828 = vshrl.u32 %v664, 16
        %v830 = vrot.slane %v828, 4
        %v831 = vshll.u32 %v664, 16
        %v833 = vrot.slane %v831, 5
        %v834 = vor.u32 %v830, %v833
        %v835 = vsel %vm665, %v825, %v834
        %836 = vrot.lane.b32.xlu0 %v682, 16
        %v837 = vpop.permute.xlu0 %836
        %838 = vrot.lane.b32.xlu0 %v691, 16
        %v839 = vpop.permute.xlu0 %838
        %840 = vrot.lane.b32.xlu0 %v700, 16
        %v841 = vpop.permute.xlu0 %840
        %842 = vrot.lane.b32.xlu0 %v709, 16
        %v843 = vpop.permute.xlu0 %842
        %844 = vrot.lane.b32.xlu0 %v718, 16
        %v845 = vpop.permute.xlu0 %844
        %846 = vrot.lane.b32.xlu0 %v727, 16
        %v847 = vpop.permute.xlu0 %846
        %848 = vrot.lane.b32.xlu0 %v736, 16
        %v849 = vpop.permute.xlu0 %848
        %850 = vrot.lane.b32.xlu0 %v745, 16
        %v851 = vpop.permute.xlu0 %850
        %852 = vrot.lane.b32.xlu0 %v754, 16
        %v853 = vpop.permute.xlu0 %852
        %854 = vrot.lane.b32.xlu0 %v763, 16
        %v855 = vpop.permute.xlu0 %854
        %856 = vrot.lane.b32.xlu0 %v772, 16
        %v857 = vpop.permute.xlu0 %856
        %858 = vrot.lane.b32.xlu0 %v781, 16
        %v859 = vpop.permute.xlu0 %858
        %860 = vrot.lane.b32.xlu0 %v790, 16
        %v861 = vpop.permute.xlu0 %860
        %862 = vrot.lane.b32.xlu0 %v799, 16
        %v863 = vpop.permute.xlu0 %862
        %864 = vrot.lane.b32.xlu0 %v808, 16
        %v865 = vpop.permute.xlu0 %864
        %866 = vrot.lane.b32.xlu0 %v817, 16
        %v867 = vpop.permute.xlu0 %866
        %868 = vrot.lane.b32.xlu0 %v826, 16
        %v869 = vpop.permute.xlu0 %868
        %870 = vrot.lane.b32.xlu0 %v835, 16
        %v871 = vpop.permute.xlu0 %870
        %vm890 = vcmask 195712
        %891 = vst.msk [vmem:[#allocation3] sm:$0xff] %vm890, %v837
        %892 = vst.msk [vmem:[#allocation3 + $0x8] sm:$0xff] %vm890, %v839
        %893 = vst.msk [vmem:[#allocation3 + $0x10] sm:$0xff] %vm890, %v841
        %894 = vst.msk [vmem:[#allocation3 + $0x18] sm:$0xff] %vm890, %v843
        %895 = vst.msk [vmem:[#allocation3 + $0x20] sm:$0xff] %vm890, %v845
        %896 = vst.msk [vmem:[#allocation3 + $0x28] sm:$0xff] %vm890, %v847
        %897 = vst.msk [vmem:[#allocation3 + $0x30] sm:$0xff] %vm890, %v849
        %898 = vst.msk [vmem:[#allocation3 + $0x38] sm:$0xff] %vm890, %v851
        %899 = vst.msk [vmem:[#allocation3 + $0x40] sm:$0xff] %vm890, %v853
        %900 = vst.msk [vmem:[#allocation3 + $0x48] sm:$0xff] %vm890, %v855
        %901 = vst.msk [vmem:[#allocation3 + $0x50] sm:$0xff] %vm890, %v857
        %902 = vst.msk [vmem:[#allocation3 + $0x58] sm:$0xff] %vm890, %v859
        %903 = vst.msk [vmem:[#allocation3 + $0x60] sm:$0xff] %vm890, %v861
        %904 = vst.msk [vmem:[#allocation3 + $0x68] sm:$0xff] %vm890, %v863
        %905 = vst.msk [vmem:[#allocation3 + $0x70] sm:$0xff] %vm890, %v865
        %906 = vst.msk [vmem:[#allocation3 + $0x78] sm:$0xff] %vm890, %v867
        %907 = vst.msk [vmem:[#allocation3 + $0x80] sm:$0xff] %vm890, %v869
        %908 = vst.msk [vmem:[#allocation3 + $0x88] sm:$0xff] %vm890, %v871
        %v909 = vld [vmem:[#allocation2 + $0x10] sm:$0x80]
        %v910 = vld [vmem:[#allocation2 + $0x18] sm:$0xff]
        %v911 = vld [vmem:[#allocation2 + $0x20] sm:$0xff]
        %v912 = vld [vmem:[#allocation2 + $0x28] sm:$0xff]
        %v913 = vld [vmem:[#allocation2 + $0x30] sm:$0xff]
        %v914 = vld [vmem:[#allocation2 + $0x38] sm:$0xff]
        %v915 = vld [vmem:[#allocation2 + $0x40] sm:$0xff]
        %v916 = vld [vmem:[#allocation2 + $0x48] sm:$0xff]
        %v917 = vld [vmem:[#allocation2 + $0x50] sm:$0xff]
        %v918 = vld [vmem:[#allocation2 + $0x58] sm:$0xff]
        %v919 = vld [vmem:[#allocation2 + $0x60] sm:$0xff]
        %v920 = vld [vmem:[#allocation2 + $0x68] sm:$0xff]
        %v921 = vld [vmem:[#allocation2 + $0x70] sm:$0xff]
        %v922 = vld [vmem:[#allocation2 + $0x78] sm:$0xff]
        %v923 = vld [vmem:[#allocation2 + $0x80] sm:$0xff]
        %v924 = vld [vmem:[#allocation2 + $0x88] sm:$0xff]
        %v925 = vld [vmem:[#allocation2 + $0x90] sm:$0xff]
        %v926 = vld [vmem:[#allocation2 + $0x98] sm:$0xff]
        %v927 = vld [vmem:[#allocation2 + $0xa0] sm:$0xff]
        %vm928 = vsmask.f32 256
        %v930 = vshrl.u32 %v909, 16
        %v932 = vrot.slane %v930, 7
        %v934 = vshrl.u32 %v910, 16
        %v936 = vrot.slane %v934, 7
        %v937 = vshll.u32 %v910, 16
        %v939 = vor.u32 %v936, %v937
        %v940 = vsel %vm928, %v932, %v939
        %v942 = vshrl.u32 %v911, 16
        %v944 = vrot.slane %v942, 7
        %v945 = vshll.u32 %v911, 16
        %v947 = vor.u32 %v944, %v945
        %v948 = vsel %vm928, %v936, %v947
        %v950 = vshrl.u32 %v912, 16
        %v952 = vrot.slane %v950, 7
        %v953 = vshll.u32 %v912, 16
        %v955 = vor.u32 %v952, %v953
        %v956 = vsel %vm928, %v944, %v955
        %v958 = vshrl.u32 %v913, 16
        %v960 = vrot.slane %v958, 7
        %v961 = vshll.u32 %v913, 16
        %v963 = vor.u32 %v960, %v961
        %v964 = vsel %vm928, %v952, %v963
        %v966 = vshrl.u32 %v914, 16
        %v968 = vrot.slane %v966, 7
        %v969 = vshll.u32 %v914, 16
        %v971 = vor.u32 %v968, %v969
        %v972 = vsel %vm928, %v960, %v971
        %v974 = vshrl.u32 %v915, 16
        %v976 = vrot.slane %v974, 7
        %v977 = vshll.u32 %v915, 16
        %v979 = vor.u32 %v976, %v977
        %v980 = vsel %vm928, %v968, %v979
        %v982 = vshrl.u32 %v916, 16
        %v984 = vrot.slane %v982, 7
        %v985 = vshll.u32 %v916, 16
        %v987 = vor.u32 %v984, %v985
        %v988 = vsel %vm928, %v976, %v987
        %v990 = vshrl.u32 %v917, 16
        %v992 = vrot.slane %v990, 7
        %v993 = vshll.u32 %v917, 16
        %v995 = vor.u32 %v992, %v993
        %v996 = vsel %vm928, %v984, %v995
        %v998 = vshrl.u32 %v918, 16
        %v1000 = vrot.slane %v998, 7
        %v1001 = vshll.u32 %v918, 16
        %v1003 = vor.u32 %v1000, %v1001
        %v1004 = vsel %vm928, %v992, %v1003
        %v1006 = vshrl.u32 %v919, 16
        %v1008 = vrot.slane %v1006, 7
        %v1009 = vshll.u32 %v919, 16
        %v1011 = vor.u32 %v1008, %v1009
        %v1012 = vsel %vm928, %v1000, %v1011
        %v1014 = vshrl.u32 %v920, 16
        %v1016 = vrot.slane %v1014, 7
        %v1017 = vshll.u32 %v920, 16
        %v1019 = vor.u32 %v1016, %v1017
        %v1020 = vsel %vm928, %v1008, %v1019
        %v1022 = vshrl.u32 %v921, 16
        %v1024 = vrot.slane %v1022, 7
        %v1025 = vshll.u32 %v921, 16
        %v1027 = vor.u32 %v1024, %v1025
        %v1028 = vsel %vm928, %v1016, %v1027
        %v1030 = vshrl.u32 %v922, 16
        %v1032 = vrot.slane %v1030, 7
        %v1033 = vshll.u32 %v922, 16
        %v1035 = vor.u32 %v1032, %v1033
        %v1036 = vsel %vm928, %v1024, %v1035
        %v1038 = vshrl.u32 %v923, 16
        %v1040 = vrot.slane %v1038, 7
        %v1041 = vshll.u32 %v923, 16
        %v1043 = vor.u32 %v1040, %v1041
        %v1044 = vsel %vm928, %v1032, %v1043
        %v1046 = vshrl.u32 %v924, 16
        %v1048 = vrot.slane %v1046, 7
        %v1049 = vshll.u32 %v924, 16
        %v1051 = vor.u32 %v1048, %v1049
        %v1052 = vsel %vm928, %v1040, %v1051
        %v1054 = vshrl.u32 %v925, 16
        %v1056 = vrot.slane %v1054, 7
        %v1057 = vshll.u32 %v925, 16
        %v1059 = vor.u32 %v1056, %v1057
        %v1060 = vsel %vm928, %v1048, %v1059
        %v1062 = vshrl.u32 %v926, 16
        %v1064 = vrot.slane %v1062, 7
        %v1065 = vshll.u32 %v926, 16
        %v1067 = vor.u32 %v1064, %v1065
        %v1068 = vsel %vm928, %v1056, %v1067
        %v1070 = vshrl.u32 %v927, 16
        %v1072 = vrot.slane %v1070, 7
        %v1073 = vshll.u32 %v927, 16
        %v1075 = vor.u32 %v1072, %v1073
        %v1076 = vsel %vm928, %v1064, %v1075
        %1077 = vrot.lane.b32.xlu0 %v940, 24
        %v1078 = vpop.permute.xlu0 %1077
        %1079 = vrot.lane.b32.xlu0 %v948, 24
        %v1080 = vpop.permute.xlu0 %1079
        %1081 = vrot.lane.b32.xlu0 %v956, 24
        %v1082 = vpop.permute.xlu0 %1081
        %1083 = vrot.lane.b32.xlu0 %v964, 24
        %v1084 = vpop.permute.xlu0 %1083
        %1085 = vrot.lane.b32.xlu0 %v972, 24
        %v1086 = vpop.permute.xlu0 %1085
        %1087 = vrot.lane.b32.xlu0 %v980, 24
        %v1088 = vpop.permute.xlu0 %1087
        %1089 = vrot.lane.b32.xlu0 %v988, 24
        %v1090 = vpop.permute.xlu0 %1089
        %1091 = vrot.lane.b32.xlu0 %v996, 24
        %v1092 = vpop.permute.xlu0 %1091
        %1093 = vrot.lane.b32.xlu0 %v1004, 24
        %v1094 = vpop.permute.xlu0 %1093
        %1095 = vrot.lane.b32.xlu0 %v1012, 24
        %v1096 = vpop.permute.xlu0 %1095
        %1097 = vrot.lane.b32.xlu0 %v1020, 24
        %v1098 = vpop.permute.xlu0 %1097
        %1099 = vrot.lane.b32.xlu0 %v1028, 24
        %v1100 = vpop.permute.xlu0 %1099
        %1101 = vrot.lane.b32.xlu0 %v1036, 24
        %v1102 = vpop.permute.xlu0 %1101
        %1103 = vrot.lane.b32.xlu0 %v1044, 24
        %v1104 = vpop.permute.xlu0 %1103
        %1105 = vrot.lane.b32.xlu0 %v1052, 24
        %v1106 = vpop.permute.xlu0 %1105
        %1107 = vrot.lane.b32.xlu0 %v1060, 24
        %v1108 = vpop.permute.xlu0 %1107
        %1109 = vrot.lane.b32.xlu0 %v1068, 24
        %v1110 = vpop.permute.xlu0 %1109
        %1111 = vrot.lane.b32.xlu0 %v1076, 24
        %v1112 = vpop.permute.xlu0 %1111
        %vm1131 = vcmask 261312
        %1132 = vst.msk [vmem:[#allocation3] sm:$0xff] %vm1131, %v1078
        %1133 = vst.msk [vmem:[#allocation3 + $0x8] sm:$0xff] %vm1131, %v1080
        %1134 = vst.msk [vmem:[#allocation3 + $0x10] sm:$0xff] %vm1131, %v1082
        %1135 = vst.msk [vmem:[#allocation3 + $0x18] sm:$0xff] %vm1131, %v1084
        %1136 = vst.msk [vmem:[#allocation3 + $0x20] sm:$0xff] %vm1131, %v1086
        %1137 = vst.msk [vmem:[#allocation3 + $0x28] sm:$0xff] %vm1131, %v1088
        %1138 = vst.msk [vmem:[#allocation3 + $0x30] sm:$0xff] %vm1131, %v1090
        %1139 = vst.msk [vmem:[#allocation3 + $0x38] sm:$0xff] %vm1131, %v1092
        %1140 = vst.msk [vmem:[#allocation3 + $0x40] sm:$0xff] %vm1131, %v1094
        %1141 = vst.msk [vmem:[#allocation3 + $0x48] sm:$0xff] %vm1131, %v1096
        %1142 = vst.msk [vmem:[#allocation3 + $0x50] sm:$0xff] %vm1131, %v1098
        %1143 = vst.msk [vmem:[#allocation3 + $0x58] sm:$0xff] %vm1131, %v1100
        %1144 = vst.msk [vmem:[#allocation3 + $0x60] sm:$0xff] %vm1131, %v1102
        %1145 = vst.msk [vmem:[#allocation3 + $0x68] sm:$0xff] %vm1131, %v1104
        %1146 = vst.msk [vmem:[#allocation3 + $0x70] sm:$0xff] %vm1131, %v1106
        %1147 = vst.msk [vmem:[#allocation3 + $0x78] sm:$0xff] %vm1131, %v1108
        %1148 = vst.msk [vmem:[#allocation3 + $0x80] sm:$0xff] %vm1131, %v1110
        %1149 = vst.msk [vmem:[#allocation3 + $0x88] sm:$0xff] %vm1131, %v1112
        %v1150 = vld [vmem:[#allocation2 + $0x18] sm:$0xff]
        %v1151 = vld [vmem:[#allocation2 + $0x20] sm:$0xff]
        %v1152 = vld [vmem:[#allocation2 + $0x28] sm:$0xff]
        %v1153 = vld [vmem:[#allocation2 + $0x30] sm:$0xff]
        %v1154 = vld [vmem:[#allocation2 + $0x38] sm:$0xff]
        %v1155 = vld [vmem:[#allocation2 + $0x40] sm:$0xff]
        %v1156 = vld [vmem:[#allocation2 + $0x48] sm:$0xff]
        %v1157 = vld [vmem:[#allocation2 + $0x50] sm:$0xff]
        %v1158 = vld [vmem:[#allocation2 + $0x58] sm:$0xff]
        %v1159 = vld [vmem:[#allocation2 + $0x60] sm:$0xff]
        %v1160 = vld [vmem:[#allocation2 + $0x68] sm:$0xff]
        %v1161 = vld [vmem:[#allocation2 + $0x70] sm:$0xff]
        %v1162 = vld [vmem:[#allocation2 + $0x78] sm:$0xff]
        %v1163 = vld [vmem:[#allocation2 + $0x80] sm:$0xff]
        %v1164 = vld [vmem:[#allocation2 + $0x88] sm:$0xff]
        %v1165 = vld [vmem:[#allocation2 + $0x90] sm:$0xff]
        %v1166 = vld [vmem:[#allocation2 + $0x98] sm:$0xff]
        %v1167 = vld [vmem:[#allocation2 + $0xa0] sm:$0xff]
        %1186 = vrot.lane.b32.xlu0 %v1150, 32
        %v1187 = vpop.permute.xlu0 %1186
        %1188 = vrot.lane.b32.xlu0 %v1151, 32
        %v1189 = vpop.permute.xlu0 %1188
        %1190 = vrot.lane.b32.xlu0 %v1152, 32
        %v1191 = vpop.permute.xlu0 %1190
        %1192 = vrot.lane.b32.xlu0 %v1153, 32
        %v1193 = vpop.permute.xlu0 %1192
        %1194 = vrot.lane.b32.xlu0 %v1154, 32
        %v1195 = vpop.permute.xlu0 %1194
        %1196 = vrot.lane.b32.xlu0 %v1155, 32
        %v1197 = vpop.permute.xlu0 %1196
        %1198 = vrot.lane.b32.xlu0 %v1156, 32
        %v1199 = vpop.permute.xlu0 %1198
        %1200 = vrot.lane.b32.xlu0 %v1157, 32
        %v1201 = vpop.permute.xlu0 %1200
        %1202 = vrot.lane.b32.xlu0 %v1158, 32
        %v1203 = vpop.permute.xlu0 %1202
        %1204 = vrot.lane.b32.xlu0 %v1159, 32
        %v1205 = vpop.permute.xlu0 %1204
        %1206 = vrot.lane.b32.xlu0 %v1160, 32
        %v1207 = vpop.permute.xlu0 %1206
        %1208 = vrot.lane.b32.xlu0 %v1161, 32
        %v1209 = vpop.permute.xlu0 %1208
        %1210 = vrot.lane.b32.xlu0 %v1162, 32
        %v1211 = vpop.permute.xlu0 %1210
        %1212 = vrot.lane.b32.xlu0 %v1163, 32
        %v1213 = vpop.permute.xlu0 %1212
        %1214 = vrot.lane.b32.xlu0 %v1164, 32
        %v1215 = vpop.permute.xlu0 %1214
        %1216 = vrot.lane.b32.xlu0 %v1165, 32
        %v1217 = vpop.permute.xlu0 %1216
        %1218 = vrot.lane.b32.xlu0 %v1166, 32
        %v1219 = vpop.permute.xlu0 %1218
        %1220 = vrot.lane.b32.xlu0 %v1167, 32
        %v1221 = vpop.permute.xlu0 %1220
        %vm1240 = vcmask 326912
        %1241 = vst.msk [vmem:[#allocation3] sm:$0xff] %vm1240, %v1187
        %1242 = vst.msk [vmem:[#allocation3 + $0x8] sm:$0xff] %vm1240, %v1189
        %1243 = vst.msk [vmem:[#allocation3 + $0x10] sm:$0xff] %vm1240, %v1191
        %1244 = vst.msk [vmem:[#allocation3 + $0x18] sm:$0xff] %vm1240, %v1193
        %1245 = vst.msk [vmem:[#allocation3 + $0x20] sm:$0xff] %vm1240, %v1195
        %1246 = vst.msk [vmem:[#allocation3 + $0x28] sm:$0xff] %vm1240, %v1197
        %1247 = vst.msk [vmem:[#allocation3 + $0x30] sm:$0xff] %vm1240, %v1199
        %1248 = vst.msk [vmem:[#allocation3 + $0x38] sm:$0xff] %vm1240, %v1201
        %1249 = vst.msk [vmem:[#allocation3 + $0x40] sm:$0xff] %vm1240, %v1203
        %1250 = vst.msk [vmem:[#allocation3 + $0x48] sm:$0xff] %vm1240, %v1205
        %1251 = vst.msk [vmem:[#allocation3 + $0x50] sm:$0xff] %vm1240, %v1207
        %1252 = vst.msk [vmem:[#allocation3 + $0x58] sm:$0xff] %vm1240, %v1209
        %1253 = vst.msk [vmem:[#allocation3 + $0x60] sm:$0xff] %vm1240, %v1211
        %1254 = vst.msk [vmem:[#allocation3 + $0x68] sm:$0xff] %vm1240, %v1213
        %1255 = vst.msk [vmem:[#allocation3 + $0x70] sm:$0xff] %vm1240, %v1215
        %1256 = vst.msk [vmem:[#allocation3 + $0x78] sm:$0xff] %vm1240, %v1217
        %1257 = vst.msk [vmem:[#allocation3 + $0x80] sm:$0xff] %vm1240, %v1219
        %1258 = vst.msk [vmem:[#allocation3 + $0x88] sm:$0xff] %vm1240, %v1221
        %v1259 = vld [vmem:[#allocation2 + $0x18] sm:$0xff]
        %v1260 = vld [vmem:[#allocation2 + $0x20] sm:$0xff]
        %v1261 = vld [vmem:[#allocation2 + $0x28] sm:$0xff]
        %v1262 = vld [vmem:[#allocation2 + $0x30] sm:$0xff]
        %v1263 = vld [vmem:[#allocation2 + $0x38] sm:$0xff]
        %v1264 = vld [vmem:[#allocation2 + $0x40] sm:$0xff]
        %v1265 = vld [vmem:[#allocation2 + $0x48] sm:$0xff]
        %v1266 = vld [vmem:[#allocation2 + $0x50] sm:$0xff]
        %v1267 = vld [vmem:[#allocation2 + $0x58] sm:$0xff]
        %v1268 = vld [vmem:[#allocation2 + $0x60] sm:$0xff]
        %v1269 = vld [vmem:[#allocation2 + $0x68] sm:$0xff]
        %v1270 = vld [vmem:[#allocation2 + $0x70] sm:$0xff]
        %v1271 = vld [vmem:[#allocation2 + $0x78] sm:$0xff]
        %v1272 = vld [vmem:[#allocation2 + $0x80] sm:$0xff]
        %v1273 = vld [vmem:[#allocation2 + $0x88] sm:$0xff]
        %v1274 = vld [vmem:[#allocation2 + $0x90] sm:$0xff]
        %v1275 = vld [vmem:[#allocation2 + $0x98] sm:$0xff]
        %v1276 = vld [vmem:[#allocation2 + $0xa0] sm:$0xff]
        %v1277 = vld [vmem:[#allocation2 + $0xa8] sm:$0x1]
        %vm1278 = vsmask.f32 7424
        %v1280 = vshrl.u32 %v1259, 16
        %v1282 = vshll.u32 %v1259, 16
        %v1284 = vrot.slane %v1282, 1
        %v1285 = vor.u32 %v1280, %v1284
        %v1287 = vshll.u32 %v1260, 16
        %v1289 = vrot.slane %v1287, 1
        %v1290 = vsel %vm1278, %v1285, %v1289
        %v1291 = vshrl.u32 %v1260, 16
        %v1293 = vor.u32 %v1291, %v1289
        %v1295 = vshll.u32 %v1261, 16
        %v1297 = vrot.slane %v1295, 1
        %v1298 = vsel %vm1278, %v1293, %v1297
        %v1299 = vshrl.u32 %v1261, 16
        %v1301 = vor.u32 %v1299, %v1297
        %v1303 = vshll.u32 %v1262, 16
        %v1305 = vrot.slane %v1303, 1
        %v1306 = vsel %vm1278, %v1301, %v1305
        %v1307 = vshrl.u32 %v1262, 16
        %v1309 = vor.u32 %v1307, %v1305
        %v1311 = vshll.u32 %v1263, 16
        %v1313 = vrot.slane %v1311, 1
        %v1314 = vsel %vm1278, %v1309, %v1313
        %v1315 = vshrl.u32 %v1263, 16
        %v1317 = vor.u32 %v1315, %v1313
        %v1319 = vshll.u32 %v1264, 16
        %v1321 = vrot.slane %v1319, 1
        %v1322 = vsel %vm1278, %v1317, %v1321
        %v1323 = vshrl.u32 %v1264, 16
        %v1325 = vor.u32 %v1323, %v1321
        %v1327 = vshll.u32 %v1265, 16
        %v1329 = vrot.slane %v1327, 1
        %v1330 = vsel %vm1278, %v1325, %v1329
        %v1331 = vshrl.u32 %v1265, 16
        %v1333 = vor.u32 %v1331, %v1329
        %v1335 = vshll.u32 %v1266, 16
        %v1337 = vrot.slane %v1335, 1
        %v1338 = vsel %vm1278, %v1333, %v1337
        %v1339 = vshrl.u32 %v1266, 16
        %v1341 = vor.u32 %v1339, %v1337
        %v1343 = vshll.u32 %v1267, 16
        %v1345 = vrot.slane %v1343, 1
        %v1346 = vsel %vm1278, %v1341, %v1345
        %v1347 = vshrl.u32 %v1267, 16
        %v1349 = vor.u32 %v1347, %v1345
        %v1351 = vshll.u32 %v1268, 16
        %v1353 = vrot.slane %v1351, 1
        %v1354 = vsel %vm1278, %v1349, %v1353
        %v1355 = vshrl.u32 %v1268, 16
        %v1357 = vor.u32 %v1355, %v1353
        %v1359 = vshll.u32 %v1269, 16
        %v1361 = vrot.slane %v1359, 1
        %v1362 = vsel %vm1278, %v1357, %v1361
        %v1363 = vshrl.u32 %v1269, 16
        %v1365 = vor.u32 %v1363, %v1361
        %v1367 = vshll.u32 %v1270, 16
        %v1369 = vrot.slane %v1367, 1
        %v1370 = vsel %vm1278, %v1365, %v1369
        %v1371 = vshrl.u32 %v1270, 16
        %v1373 = vor.u32 %v1371, %v1369
        %v1375 = vshll.u32 %v1271, 16
        %v1377 = vrot.slane %v1375, 1
        %v1378 = vsel %vm1278, %v1373, %v1377
        %v1379 = vshrl.u32 %v1271, 16
        %v1381 = vor.u32 %v1379, %v1377
        %v1383 = vshll.u32 %v1272, 16
        %v1385 = vrot.slane %v1383, 1
        %v1386 = vsel %vm1278, %v1381, %v1385
        %v1387 = vshrl.u32 %v1272, 16
        %v1389 = vor.u32 %v1387, %v1385
        %v1391 = vshll.u32 %v1273, 16
        %v1393 = vrot.slane %v1391, 1
        %v1394 = vsel %vm1278, %v1389, %v1393
        %v1395 = vshrl.u32 %v1273, 16
        %v1397 = vor.u32 %v1395, %v1393
        %v1399 = vshll.u32 %v1274, 16
        %v1401 = vrot.slane %v1399, 1
        %v1402 = vsel %vm1278, %v1397, %v1401
        %v1403 = vshrl.u32 %v1274, 16
        %v1405 = vor.u32 %v1403, %v1401
        %v1407 = vshll.u32 %v1275, 16
        %v1409 = vrot.slane %v1407, 1
        %v1410 = vsel %vm1278, %v1405, %v1409
        %v1411 = vshrl.u32 %v1275, 16
        %v1413 = vor.u32 %v1411, %v1409
        %v1415 = vshll.u32 %v1276, 16
        %v1417 = vrot.slane %v1415, 1
        %v1418 = vsel %vm1278, %v1413, %v1417
        %v1419 = vshrl.u32 %v1276, 16
        %v1421 = vor.u32 %v1419, %v1417
        %v1423 = vshll.u32 %v1277, 16
        %v1425 = vrot.slane %v1423, 1
        %v1426 = vsel %vm1278, %v1421, %v1425
        %1427 = vrot.lane.b32.xlu0 %v1290, 40
        %v1428 = vpop.permute.xlu0 %1427
        %1429 = vrot.lane.b32.xlu0 %v1298, 40
        %v1430 = vpop.permute.xlu0 %1429
        %1431 = vrot.lane.b32.xlu0 %v1306, 40
        %v1432 = vpop.permute.xlu0 %1431
        %1433 = vrot.lane.b32.xlu0 %v1314, 40
        %v1434 = vpop.permute.xlu0 %1433
        %1435 = vrot.lane.b32.xlu0 %v1322, 40
        %v1436 = vpop.permute.xlu0 %1435
        %1437 = vrot.lane.b32.xlu0 %v1330, 40
        %v1438 = vpop.permute.xlu0 %1437
        %1439 = vrot.lane.b32.xlu0 %v1338, 40
        %v1440 = vpop.permute.xlu0 %1439
        %1441 = vrot.lane.b32.xlu0 %v1346, 40
        %v1442 = vpop.permute.xlu0 %1441
        %1443 = vrot.lane.b32.xlu0 %v1354, 40
        %v1444 = vpop.permute.xlu0 %1443
        %1445 = vrot.lane.b32.xlu0 %v1362, 40
        %v1446 = vpop.permute.xlu0 %1445
        %1447 = vrot.lane.b32.xlu0 %v1370, 40
        %v1448 = vpop.permute.xlu0 %1447
        %1449 = vrot.lane.b32.xlu0 %v1378, 40
        %v1450 = vpop.permute.xlu0 %1449
        %1451 = vrot.lane.b32.xlu0 %v1386, 40
        %v1452 = vpop.permute.xlu0 %1451
        %1453 = vrot.lane.b32.xlu0 %v1394, 40
        %v1454 = vpop.permute.xlu0 %1453
        %1455 = vrot.lane.b32.xlu0 %v1402, 40
        %v1456 = vpop.permute.xlu0 %1455
        %1457 = vrot.lane.b32.xlu0 %v1410, 40
        %v1458 = vpop.permute.xlu0 %1457
        %1459 = vrot.lane.b32.xlu0 %v1418, 40
        %v1460 = vpop.permute.xlu0 %1459
        %1461 = vrot.lane.b32.xlu0 %v1426, 40
        %v1462 = vpop.permute.xlu0 %1461
        %vm1481 = vcmask 392512
        %1482 = vst.msk [vmem:[#allocation3] sm:$0xff] %vm1481, %v1428
        %1483 = vst.msk [vmem:[#allocation3 + $0x8] sm:$0xff] %vm1481, %v1430
        %1484 = vst.msk [vmem:[#allocation3 + $0x10] sm:$0xff] %vm1481, %v1432
        %1485 = vst.msk [vmem:[#allocation3 + $0x18] sm:$0xff] %vm1481, %v1434
        %1486 = vst.msk [vmem:[#allocation3 + $0x20] sm:$0xff] %vm1481, %v1436
        %1487 = vst.msk [vmem:[#allocation3 + $0x28] sm:$0xff] %vm1481, %v1438
        %1488 = vst.msk [vmem:[#allocation3 + $0x30] sm:$0xff] %vm1481, %v1440
        %1489 = vst.msk [vmem:[#allocation3 + $0x38] sm:$0xff] %vm1481, %v1442
        %1490 = vst.msk [vmem:[#allocation3 + $0x40] sm:$0xff] %vm1481, %v1444
        %1491 = vst.msk [vmem:[#allocation3 + $0x48] sm:$0xff] %vm1481, %v1446
        %1492 = vst.msk [vmem:[#allocation3 + $0x50] sm:$0xff] %vm1481, %v1448
        %1493 = vst.msk [vmem:[#allocation3 + $0x58] sm:$0xff] %vm1481, %v1450
        %1494 = vst.msk [vmem:[#allocation3 + $0x60] sm:$0xff] %vm1481, %v1452
        %1495 = vst.msk [vmem:[#allocation3 + $0x68] sm:$0xff] %vm1481, %v1454
        %1496 = vst.msk [vmem:[#allocation3 + $0x70] sm:$0xff] %vm1481, %v1456
        %1497 = vst.msk [vmem:[#allocation3 + $0x78] sm:$0xff] %vm1481, %v1458
        %1498 = vst.msk [vmem:[#allocation3 + $0x80] sm:$0xff] %vm1481, %v1460
        %1499 = vst.msk [vmem:[#allocation3 + $0x88] sm:$0xff] %vm1481, %v1462
        %v1500 = vld [vmem:[#allocation2 + $0x20] sm:$0xf8]
        %v1501 = vld [vmem:[#allocation2 + $0x28] sm:$0xff]
        %v1502 = vld [vmem:[#allocation2 + $0x30] sm:$0xff]
        %v1503 = vld [vmem:[#allocation2 + $0x38] sm:$0xff]
        %v1504 = vld [vmem:[#allocation2 + $0x40] sm:$0xff]
        %v1505 = vld [vmem:[#allocation2 + $0x48] sm:$0xff]
        %v1506 = vld [vmem:[#allocation2 + $0x50] sm:$0xff]
        %v1507 = vld [vmem:[#allocation2 + $0x58] sm:$0xff]
        %v1508 = vld [vmem:[#allocation2 + $0x60] sm:$0xff]
        %v1509 = vld [vmem:[#allocation2 + $0x68] sm:$0xff]
        %v1510 = vld [vmem:[#allocation2 + $0x70] sm:$0xff]
        %v1511 = vld [vmem:[#allocation2 + $0x78] sm:$0xff]
        %v1512 = vld [vmem:[#allocation2 + $0x80] sm:$0xff]
        %v1513 = vld [vmem:[#allocation2 + $0x88] sm:$0xff]
        %v1514 = vld [vmem:[#allocation2 + $0x90] sm:$0xff]
        %v1515 = vld [vmem:[#allocation2 + $0x98] sm:$0xff]
        %v1516 = vld [vmem:[#allocation2 + $0xa0] sm:$0xff]
        %v1517 = vld [vmem:[#allocation2 + $0xa8] sm:$0xff]
        %v1518 = vld [vmem:[#allocation2 + $0xb0] sm:$0xf]
        %v1520 = vshrl.u32 %v1500, 16
        %v1522 = vrot.slane %v1520, 3
        %v1523 = vshll.u32 %v1500, 16
        %v1525 = vrot.slane %v1523, 4
        %v1526 = vor.u32 %v1522, %v1525
        %v1528 = vshrl.u32 %v1501, 16
        %v1530 = vrot.slane %v1528, 3
        %v1531 = vshll.u32 %v1501, 16
        %v1533 = vrot.slane %v1531, 4
        %v1534 = vor.u32 %v1530, %v1533
        %v1535 = vsel %vm289, %v1526, %v1534
        %v1537 = vshrl.u32 %v1502, 16
        %v1539 = vrot.slane %v1537, 3
        %v1540 = vshll.u32 %v1502, 16
        %v1542 = vrot.slane %v1540, 4
        %v1543 = vor.u32 %v1539, %v1542
        %v1544 = vsel %vm289, %v1534, %v1543
        %v1546 = vshrl.u32 %v1503, 16
        %v1548 = vrot.slane %v1546, 3
        %v1549 = vshll.u32 %v1503, 16
        %v1551 = vrot.slane %v1549, 4
        %v1552 = vor.u32 %v1548, %v1551
        %v1553 = vsel %vm289, %v1543, %v1552
        %v1555 = vshrl.u32 %v1504, 16
        %v1557 = vrot.slane %v1555, 3
        %v1558 = vshll.u32 %v1504, 16
        %v1560 = vrot.slane %v1558, 4
        %v1561 = vor.u32 %v1557, %v1560
        %v1562 = vsel %vm289, %v1552, %v1561
        %v1564 = vshrl.u32 %v1505, 16
        %v1566 = vrot.slane %v1564, 3
        %v1567 = vshll.u32 %v1505, 16
        %v1569 = vrot.slane %v1567, 4
        %v1570 = vor.u32 %v1566, %v1569
        %v1571 = vsel %vm289, %v1561, %v1570
        %v1573 = vshrl.u32 %v1506, 16
        %v1575 = vrot.slane %v1573, 3
        %v1576 = vshll.u32 %v1506, 16
        %v1578 = vrot.slane %v1576, 4
        %v1579 = vor.u32 %v1575, %v1578
        %v1580 = vsel %vm289, %v1570, %v1579
        %v1582 = vshrl.u32 %v1507, 16
        %v1584 = vrot.slane %v1582, 3
        %v1585 = vshll.u32 %v1507, 16
        %v1587 = vrot.slane %v1585, 4
        %v1588 = vor.u32 %v1584, %v1587
        %v1589 = vsel %vm289, %v1579, %v1588
        %v1591 = vshrl.u32 %v1508, 16
        %v1593 = vrot.slane %v1591, 3
        %v1594 = vshll.u32 %v1508, 16
        %v1596 = vrot.slane %v1594, 4
        %v1597 = vor.u32 %v1593, %v1596
        %v1598 = vsel %vm289, %v1588, %v1597
        %v1600 = vshrl.u32 %v1509, 16
        %v1602 = vrot.slane %v1600, 3
        %v1603 = vshll.u32 %v1509, 16
        %v1605 = vrot.slane %v1603, 4
        %v1606 = vor.u32 %v1602, %v1605
        %v1607 = vsel %vm289, %v1597, %v1606
        %v1609 = vshrl.u32 %v1510, 16
        %v1611 = vrot.slane %v1609, 3
        %v1612 = vshll.u32 %v1510, 16
        %v1614 = vrot.slane %v1612, 4
        %v1615 = vor.u32 %v1611, %v1614
        %v1616 = vsel %vm289, %v1606, %v1615
        %v1618 = vshrl.u32 %v1511, 16
        %v1620 = vrot.slane %v1618, 3
        %v1621 = vshll.u32 %v1511, 16
        %v1623 = vrot.slane %v1621, 4
        %v1624 = vor.u32 %v1620, %v1623
        %v1625 = vsel %vm289, %v1615, %v1624
        %v1627 = vshrl.u32 %v1512, 16
        %v1629 = vrot.slane %v1627, 3
        %v1630 = vshll.u32 %v1512, 16
        %v1632 = vrot.slane %v1630, 4
        %v1633 = vor.u32 %v1629, %v1632
        %v1634 = vsel %vm289, %v1624, %v1633
        %v1636 = vshrl.u32 %v1513, 16
        %v1638 = vrot.slane %v1636, 3
        %v1639 = vshll.u32 %v1513, 16
        %v1641 = vrot.slane %v1639, 4
        %v1642 = vor.u32 %v1638, %v1641
        %v1643 = vsel %vm289, %v1633, %v1642
        %v1645 = vshrl.u32 %v1514, 16
        %v1647 = vrot.slane %v1645, 3
        %v1648 = vshll.u32 %v1514, 16
        %v1650 = vrot.slane %v1648, 4
        %v1651 = vor.u32 %v1647, %v1650
        %v1652 = vsel %vm289, %v1642, %v1651
        %v1654 = vshrl.u32 %v1515, 16
        %v1656 = vrot.slane %v1654, 3
        %v1657 = vshll.u32 %v1515, 16
        %v1659 = vrot.slane %v1657, 4
        %v1660 = vor.u32 %v1656, %v1659
        %v1661 = vsel %vm289, %v1651, %v1660
        %v1663 = vshrl.u32 %v1516, 16
        %v1665 = vrot.slane %v1663, 3
        %v1666 = vshll.u32 %v1516, 16
        %v1668 = vrot.slane %v1666, 4
        %v1669 = vor.u32 %v1665, %v1668
        %v1670 = vsel %vm289, %v1660, %v1669
        %v1672 = vshrl.u32 %v1517, 16
        %v1674 = vrot.slane %v1672, 3
        %v1675 = vshll.u32 %v1517, 16
        %v1677 = vrot.slane %v1675, 4
        %v1678 = vor.u32 %v1674, %v1677
        %v1679 = vsel %vm289, %v1669, %v1678
        %v1681 = vshrl.u32 %v1518, 16
        %v1683 = vrot.slane %v1681, 3
        %v1684 = vshll.u32 %v1518, 16
        %v1686 = vrot.slane %v1684, 4
        %v1687 = vor.u32 %v1683, %v1686
        %v1688 = vsel %vm289, %v1678, %v1687
        %1689 = vrot.lane.b32.xlu0 %v1535, 48
        %v1690 = vpop.permute.xlu0 %1689
        %1691 = vrot.lane.b32.xlu0 %v1544, 48
        %v1692 = vpop.permute.xlu0 %1691
        %1693 = vrot.lane.b32.xlu0 %v1553, 48
        %v1694 = vpop.permute.xlu0 %1693
        %1695 = vrot.lane.b32.xlu0 %v1562, 48
        %v1696 = vpop.permute.xlu0 %1695
        %1697 = vrot.lane.b32.xlu0 %v1571, 48
        %v1698 = vpop.permute.xlu0 %1697
        %1699 = vrot.lane.b32.xlu0 %v1580, 48
        %v1700 = vpop.permute.xlu0 %1699
        %1701 = vrot.lane.b32.xlu0 %v1589, 48
        %v1702 = vpop.permute.xlu0 %1701
        %1703 = vrot.lane.b32.xlu0 %v1598, 48
        %v1704 = vpop.permute.xlu0 %1703
        %1705 = vrot.lane.b32.xlu0 %v1607, 48
        %v1706 = vpop.permute.xlu0 %1705
        %1707 = vrot.lane.b32.xlu0 %v1616, 48
        %v1708 = vpop.permute.xlu0 %1707
        %1709 = vrot.lane.b32.xlu0 %v1625, 48
        %v1710 = vpop.permute.xlu0 %1709
        %1711 = vrot.lane.b32.xlu0 %v1634, 48
        %v1712 = vpop.permute.xlu0 %1711
        %1713 = vrot.lane.b32.xlu0 %v1643, 48
        %v1714 = vpop.permute.xlu0 %1713
        %1715 = vrot.lane.b32.xlu0 %v1652, 48
        %v1716 = vpop.permute.xlu0 %1715
        %1717 = vrot.lane.b32.xlu0 %v1661, 48
        %v1718 = vpop.permute.xlu0 %1717
        %1719 = vrot.lane.b32.xlu0 %v1670, 48
        %v1720 = vpop.permute.xlu0 %1719
        %1721 = vrot.lane.b32.xlu0 %v1679, 48
        %v1722 = vpop.permute.xlu0 %1721
        %1723 = vrot.lane.b32.xlu0 %v1688, 48
        %v1724 = vpop.permute.xlu0 %1723
        %vm1743 = vcmask 458112
        %1744 = vst.msk [vmem:[#allocation3] sm:$0xff] %vm1743, %v1690
        %1745 = vst.msk [vmem:[#allocation3 + $0x8] sm:$0xff] %vm1743, %v1692
        %1746 = vst.msk [vmem:[#allocation3 + $0x10] sm:$0xff] %vm1743, %v1694
        %1747 = vst.msk [vmem:[#allocation3 + $0x18] sm:$0xff] %vm1743, %v1696
        %1748 = vst.msk [vmem:[#allocation3 + $0x20] sm:$0xff] %vm1743, %v1698
        %1749 = vst.msk [vmem:[#allocation3 + $0x28] sm:$0xff] %vm1743, %v1700
        %1750 = vst.msk [vmem:[#allocation3 + $0x30] sm:$0xff] %vm1743, %v1702
        %1751 = vst.msk [vmem:[#allocation3 + $0x38] sm:$0xff] %vm1743, %v1704
        %1752 = vst.msk [vmem:[#allocation3 + $0x40] sm:$0xff] %vm1743, %v1706
        %1753 = vst.msk [vmem:[#allocation3 + $0x48] sm:$0xff] %vm1743, %v1708
        %1754 = vst.msk [vmem:[#allocation3 + $0x50] sm:$0xff] %vm1743, %v1710
        %1755 = vst.msk [vmem:[#allocation3 + $0x58] sm:$0xff] %vm1743, %v1712
        %1756 = vst.msk [vmem:[#allocation3 + $0x60] sm:$0xff] %vm1743, %v1714
        %1757 = vst.msk [vmem:[#allocation3 + $0x68] sm:$0xff] %vm1743, %v1716
        %1758 = vst.msk [vmem:[#allocation3 + $0x70] sm:$0xff] %vm1743, %v1718
        %1759 = vst.msk [vmem:[#allocation3 + $0x78] sm:$0xff] %vm1743, %v1720
        %1760 = vst.msk [vmem:[#allocation3 + $0x80] sm:$0xff] %vm1743, %v1722
        %1761 = vst.msk [vmem:[#allocation3 + $0x88] sm:$0xff] %vm1743, %v1724
        %v1762 = vld [vmem:[#allocation2 + $0x20] sm:$0xf0]
        %v1763 = vld [vmem:[#allocation2 + $0x28] sm:$0xff]
        %v1764 = vld [vmem:[#allocation2 + $0x30] sm:$0xff]
        %v1765 = vld [vmem:[#allocation2 + $0x38] sm:$0xff]
        %v1766 = vld [vmem:[#allocation2 + $0x40] sm:$0xff]
        %v1767 = vld [vmem:[#allocation2 + $0x48] sm:$0xff]
        %v1768 = vld [vmem:[#allocation2 + $0x50] sm:$0xff]
        %v1769 = vld [vmem:[#allocation2 + $0x58] sm:$0xff]
        %v1770 = vld [vmem:[#allocation2 + $0x60] sm:$0xff]
        %v1771 = vld [vmem:[#allocation2 + $0x68] sm:$0xff]
        %v1772 = vld [vmem:[#allocation2 + $0x70] sm:$0xff]
        %v1773 = vld [vmem:[#allocation2 + $0x78] sm:$0xff]
        %v1774 = vld [vmem:[#allocation2 + $0x80] sm:$0xff]
        %v1775 = vld [vmem:[#allocation2 + $0x88] sm:$0xff]
        %v1776 = vld [vmem:[#allocation2 + $0x90] sm:$0xff]
        %v1777 = vld [vmem:[#allocation2 + $0x98] sm:$0xff]
        %v1778 = vld [vmem:[#allocation2 + $0xa0] sm:$0xff]
        %v1779 = vld [vmem:[#allocation2 + $0xa8] sm:$0xff]
        %v1780 = vld [vmem:[#allocation2 + $0xb0] sm:$0xf]
        %v1800 = vrot.slane %v1762, 4
        %v1801 = vrot.slane %v1763, 4
        %v1802 = vsel %vm535, %v1800, %v1801
        %v1803 = vrot.slane %v1764, 4
        %v1804 = vsel %vm535, %v1801, %v1803
        %v1805 = vrot.slane %v1765, 4
        %v1806 = vsel %vm535, %v1803, %v1805
        %v1807 = vrot.slane %v1766, 4
        %v1808 = vsel %vm535, %v1805, %v1807
        %v1809 = vrot.slane %v1767, 4
        %v1810 = vsel %vm535, %v1807, %v1809
        %v1811 = vrot.slane %v1768, 4
        %v1812 = vsel %vm535, %v1809, %v1811
        %v1813 = vrot.slane %v1769, 4
        %v1814 = vsel %vm535, %v1811, %v1813
        %v1815 = vrot.slane %v1770, 4
        %v1816 = vsel %vm535, %v1813, %v1815
        %v1817 = vrot.slane %v1771, 4
        %v1818 = vsel %vm535, %v1815, %v1817
        %v1819 = vrot.slane %v1772, 4
        %v1820 = vsel %vm535, %v1817, %v1819
        %v1821 = vrot.slane %v1773, 4
        %v1822 = vsel %vm535, %v1819, %v1821
        %v1823 = vrot.slane %v1774, 4
        %v1824 = vsel %vm535, %v1821, %v1823
        %v1825 = vrot.slane %v1775, 4
        %v1826 = vsel %vm535, %v1823, %v1825
        %v1827 = vrot.slane %v1776, 4
        %v1828 = vsel %vm535, %v1825, %v1827
        %v1829 = vrot.slane %v1777, 4
        %v1830 = vsel %vm535, %v1827, %v1829
        %v1831 = vrot.slane %v1778, 4
        %v1832 = vsel %vm535, %v1829, %v1831
        %v1833 = vrot.slane %v1779, 4
        %v1834 = vsel %vm535, %v1831, %v1833
        %v1835 = vrot.slane %v1780, 4
        %v1836 = vsel %vm535, %v1833, %v1835
        %1837 = vrot.lane.b32.xlu0 %v1802, 56
        %v1838 = vpop.permute.xlu0 %1837
        %1839 = vrot.lane.b32.xlu0 %v1804, 56
        %v1840 = vpop.permute.xlu0 %1839
        %1841 = vrot.lane.b32.xlu0 %v1806, 56
        %v1842 = vpop.permute.xlu0 %1841
        %1843 = vrot.lane.b32.xlu0 %v1808, 56
        %v1844 = vpop.permute.xlu0 %1843
        %1845 = vrot.lane.b32.xlu0 %v1810, 56
        %v1846 = vpop.permute.xlu0 %1845
        %1847 = vrot.lane.b32.xlu0 %v1812, 56
        %v1848 = vpop.permute.xlu0 %1847
        %1849 = vrot.lane.b32.xlu0 %v1814, 56
        %v1850 = vpop.permute.xlu0 %1849
        %1851 = vrot.lane.b32.xlu0 %v1816, 56
        %v1852 = vpop.permute.xlu0 %1851
        %1853 = vrot.lane.b32.xlu0 %v1818, 56
        %v1854 = vpop.permute.xlu0 %1853
        %1855 = vrot.lane.b32.xlu0 %v1820, 56
        %v1856 = vpop.permute.xlu0 %1855
        %1857 = vrot.lane.b32.xlu0 %v1822, 56
        %v1858 = vpop.permute.xlu0 %1857
        %1859 = vrot.lane.b32.xlu0 %v1824, 56
        %v1860 = vpop.permute.xlu0 %1859
        %1861 = vrot.lane.b32.xlu0 %v1826, 56
        %v1862 = vpop.permute.xlu0 %1861
        %1863 = vrot.lane.b32.xlu0 %v1828, 56
        %v1864 = vpop.permute.xlu0 %1863
        %1865 = vrot.lane.b32.xlu0 %v1830, 56
        %v1866 = vpop.permute.xlu0 %1865
        %1867 = vrot.lane.b32.xlu0 %v1832, 56
        %v1868 = vpop.permute.xlu0 %1867
        %1869 = vrot.lane.b32.xlu0 %v1834, 56
        %v1870 = vpop.permute.xlu0 %1869
        %1871 = vrot.lane.b32.xlu0 %v1836, 56
        %v1872 = vpop.permute.xlu0 %1871
        %vm1891 = vcmask 523712
        %1892 = vst.msk [vmem:[#allocation3] sm:$0xff] %vm1891, %v1838
        %1893 = vst.msk [vmem:[#allocation3 + $0x8] sm:$0xff] %vm1891, %v1840
        %1894 = vst.msk [vmem:[#allocation3 + $0x10] sm:$0xff] %vm1891, %v1842
        %1895 = vst.msk [vmem:[#allocation3 + $0x18] sm:$0xff] %vm1891, %v1844
        %1896 = vst.msk [vmem:[#allocation3 + $0x20] sm:$0xff] %vm1891, %v1846
        %1897 = vst.msk [vmem:[#allocation3 + $0x28] sm:$0xff] %vm1891, %v1848
        %1898 = vst.msk [vmem:[#allocation3 + $0x30] sm:$0xff] %vm1891, %v1850
        %1899 = vst.msk [vmem:[#allocation3 + $0x38] sm:$0xff] %vm1891, %v1852
        %1900 = vst.msk [vmem:[#allocation3 + $0x40] sm:$0xff] %vm1891, %v1854
        %1901 = vst.msk [vmem:[#allocation3 + $0x48] sm:$0xff] %vm1891, %v1856
        %1902 = vst.msk [vmem:[#allocation3 + $0x50] sm:$0xff] %vm1891, %v1858
        %1903 = vst.msk [vmem:[#allocation3 + $0x58] sm:$0xff] %vm1891, %v1860
        %1904 = vst.msk [vmem:[#allocation3 + $0x60] sm:$0xff] %vm1891, %v1862
        %1905 = vst.msk [vmem:[#allocation3 + $0x68] sm:$0xff] %vm1891, %v1864
        %1906 = vst.msk [vmem:[#allocation3 + $0x70] sm:$0xff] %vm1891, %v1866
        %1907 = vst.msk [vmem:[#allocation3 + $0x78] sm:$0xff] %vm1891, %v1868
        %1908 = vst.msk [vmem:[#allocation3 + $0x80] sm:$0xff] %vm1891, %v1870
        %1909 = vst.msk [vmem:[#allocation3 + $0x88] sm:$0xff] %vm1891, %v1872
        %v1910 = vld [vmem:[#allocation2 + $0x20] sm:$0xf0]
        %v1911 = vld [vmem:[#allocation2 + $0x28] sm:$0xff]
        %v1912 = vld [vmem:[#allocation2 + $0x30] sm:$0xff]
        %v1913 = vld [vmem:[#allocation2 + $0x38] sm:$0xff]
        %v1914 = vld [vmem:[#allocation2 + $0x40] sm:$0xff]
        %v1915 = vld [vmem:[#allocation2 + $0x48] sm:$0xff]
        %v1916 = vld [vmem:[#allocation2 + $0x50] sm:$0xff]
        %v1917 = vld [vmem:[#allocation2 + $0x58] sm:$0xff]
        %v1918 = vld [vmem:[#allocation2 + $0x60] sm:$0xff]
        %v1919 = vld [vmem:[#allocation2 + $0x68] sm:$0xff]
        %v1920 = vld [vmem:[#allocation2 + $0x70] sm:$0xff]
        %v1921 = vld [vmem:[#allocation2 + $0x78] sm:$0xff]
        %v1922 = vld [vmem:[#allocation2 + $0x80] sm:$0xff]
        %v1923 = vld [vmem:[#allocation2 + $0x88] sm:$0xff]
        %v1924 = vld [vmem:[#allocation2 + $0x90] sm:$0xff]
        %v1925 = vld [vmem:[#allocation2 + $0x98] sm:$0xff]
        %v1926 = vld [vmem:[#allocation2 + $0xa0] sm:$0xff]
        %v1927 = vld [vmem:[#allocation2 + $0xa8] sm:$0xff]
        %v1928 = vld [vmem:[#allocation2 + $0xb0] sm:$0x1f]
        %v1930 = vshrl.u32 %v1910, 16
        %v1932 = vrot.slane %v1930, 4
        %v1933 = vshll.u32 %v1910, 16
        %v1935 = vrot.slane %v1933, 5
        %v1936 = vor.u32 %v1932, %v1935
        %v1938 = vshrl.u32 %v1911, 16
        %v1940 = vrot.slane %v1938, 4
        %v1941 = vshll.u32 %v1911, 16
        %v1943 = vrot.slane %v1941, 5
        %v1944 = vor.u32 %v1940, %v1943
        %v1945 = vsel %vm665, %v1936, %v1944
        %v1947 = vshrl.u32 %v1912, 16
        %v1949 = vrot.slane %v1947, 4
        %v1950 = vshll.u32 %v1912, 16
        %v1952 = vrot.slane %v1950, 5
        %v1953 = vor.u32 %v1949, %v1952
        %v1954 = vsel %vm665, %v1944, %v1953
        %v1956 = vshrl.u32 %v1913, 16
        %v1958 = vrot.slane %v1956, 4
        %v1959 = vshll.u32 %v1913, 16
        %v1961 = vrot.slane %v1959, 5
        %v1962 = vor.u32 %v1958, %v1961
        %v1963 = vsel %vm665, %v1953, %v1962
        %v1965 = vshrl.u32 %v1914, 16
        %v1967 = vrot.slane %v1965, 4
        %v1968 = vshll.u32 %v1914, 16
        %v1970 = vrot.slane %v1968, 5
        %v1971 = vor.u32 %v1967, %v1970
        %v1972 = vsel %vm665, %v1962, %v1971
        %v1974 = vshrl.u32 %v1915, 16
        %v1976 = vrot.slane %v1974, 4
        %v1977 = vshll.u32 %v1915, 16
        %v1979 = vrot.slane %v1977, 5
        %v1980 = vor.u32 %v1976, %v1979
        %v1981 = vsel %vm665, %v1971, %v1980
        %v1983 = vshrl.u32 %v1916, 16
        %v1985 = vrot.slane %v1983, 4
        %v1986 = vshll.u32 %v1916, 16
        %v1988 = vrot.slane %v1986, 5
        %v1989 = vor.u32 %v1985, %v1988
        %v1990 = vsel %vm665, %v1980, %v1989
        %v1992 = vshrl.u32 %v1917, 16
        %v1994 = vrot.slane %v1992, 4
        %v1995 = vshll.u32 %v1917, 16
        %v1997 = vrot.slane %v1995, 5
        %v1998 = vor.u32 %v1994, %v1997
        %v1999 = vsel %vm665, %v1989, %v1998
        %v2001 = vshrl.u32 %v1918, 16
        %v2003 = vrot.slane %v2001, 4
        %v2004 = vshll.u32 %v1918, 16
        %v2006 = vrot.slane %v2004, 5
        %v2007 = vor.u32 %v2003, %v2006
        %v2008 = vsel %vm665, %v1998, %v2007
        %v2010 = vshrl.u32 %v1919, 16
        %v2012 = vrot.slane %v2010, 4
        %v2013 = vshll.u32 %v1919, 16
        %v2015 = vrot.slane %v2013, 5
        %v2016 = vor.u32 %v2012, %v2015
        %v2017 = vsel %vm665, %v2007, %v2016
        %v2019 = vshrl.u32 %v1920, 16
        %v2021 = vrot.slane %v2019, 4
        %v2022 = vshll.u32 %v1920, 16
        %v2024 = vrot.slane %v2022, 5
        %v2025 = vor.u32 %v2021, %v2024
        %v2026 = vsel %vm665, %v2016, %v2025
        %v2028 = vshrl.u32 %v1921, 16
        %v2030 = vrot.slane %v2028, 4
        %v2031 = vshll.u32 %v1921, 16
        %v2033 = vrot.slane %v2031, 5
        %v2034 = vor.u32 %v2030, %v2033
        %v2035 = vsel %vm665, %v2025, %v2034
        %v2037 = vshrl.u32 %v1922, 16
        %v2039 = vrot.slane %v2037, 4
        %v2040 = vshll.u32 %v1922, 16
        %v2042 = vrot.slane %v2040, 5
        %v2043 = vor.u32 %v2039, %v2042
        %v2044 = vsel %vm665, %v2034, %v2043
        %v2046 = vshrl.u32 %v1923, 16
        %v2048 = vrot.slane %v2046, 4
        %v2049 = vshll.u32 %v1923, 16
        %v2051 = vrot.slane %v2049, 5
        %v2052 = vor.u32 %v2048, %v2051
        %v2053 = vsel %vm665, %v2043, %v2052
        %v2055 = vshrl.u32 %v1924, 16
        %v2057 = vrot.slane %v2055, 4
        %v2058 = vshll.u32 %v1924, 16
        %v2060 = vrot.slane %v2058, 5
        %v2061 = vor.u32 %v2057, %v2060
        %v2062 = vsel %vm665, %v2052, %v2061
        %v2064 = vshrl.u32 %v1925, 16
        %v2066 = vrot.slane %v2064, 4
        %v2067 = vshll.u32 %v1925, 16
        %v2069 = vrot.slane %v2067, 5
        %v2070 = vor.u32 %v2066, %v2069
        %v2071 = vsel %vm665, %v2061, %v2070
        %v2073 = vshrl.u32 %v1926, 16
        %v2075 = vrot.slane %v2073, 4
        %v2076 = vshll.u32 %v1926, 16
        %v2078 = vrot.slane %v2076, 5
        %v2079 = vor.u32 %v2075, %v2078
        %v2080 = vsel %vm665, %v2070, %v2079
        %v2082 = vshrl.u32 %v1927, 16
        %v2084 = vrot.slane %v2082, 4
        %v2085 = vshll.u32 %v1927, 16
        %v2087 = vrot.slane %v2085, 5
        %v2088 = vor.u32 %v2084, %v2087
        %v2089 = vsel %vm665, %v2079, %v2088
        %v2091 = vshrl.u32 %v1928, 16
        %v2093 = vrot.slane %v2091, 4
        %v2094 = vshll.u32 %v1928, 16
        %v2096 = vrot.slane %v2094, 5
        %v2097 = vor.u32 %v2093, %v2096
        %v2098 = vsel %vm665, %v2088, %v2097
        %2099 = vrot.lane.b32.xlu0 %v1945, 64
        %v2100 = vpop.permute.xlu0 %2099
        %2101 = vrot.lane.b32.xlu0 %v1954, 64
        %v2102 = vpop.permute.xlu0 %2101
        %2103 = vrot.lane.b32.xlu0 %v1963, 64
        %v2104 = vpop.permute.xlu0 %2103
        %2105 = vrot.lane.b32.xlu0 %v1972, 64
        %v2106 = vpop.permute.xlu0 %2105
        %2107 = vrot.lane.b32.xlu0 %v1981, 64
        %v2108 = vpop.permute.xlu0 %2107
        %2109 = vrot.lane.b32.xlu0 %v1990, 64
        %v2110 = vpop.permute.xlu0 %2109
        %2111 = vrot.lane.b32.xlu0 %v1999, 64
        %v2112 = vpop.permute.xlu0 %2111
        %2113 = vrot.lane.b32.xlu0 %v2008, 64
        %v2114 = vpop.permute.xlu0 %2113
        %2115 = vrot.lane.b32.xlu0 %v2017, 64
        %v2116 = vpop.permute.xlu0 %2115
        %2117 = vrot.lane.b32.xlu0 %v2026, 64
        %v2118 = vpop.permute.xlu0 %2117
        %2119 = vrot.lane.b32.xlu0 %v2035, 64
        %v2120 = vpop.permute.xlu0 %2119
        %2121 = vrot.lane.b32.xlu0 %v2044, 64
        %v2122 = vpop.permute.xlu0 %2121
        %2123 = vrot.lane.b32.xlu0 %v2053, 64
        %v2124 = vpop.permute.xlu0 %2123
        %2125 = vrot.lane.b32.xlu0 %v2062, 64
        %v2126 = vpop.permute.xlu0 %2125
        %2127 = vrot.lane.b32.xlu0 %v2071, 64
        %v2128 = vpop.permute.xlu0 %2127
        %2129 = vrot.lane.b32.xlu0 %v2080, 64
        %v2130 = vpop.permute.xlu0 %2129
        %2131 = vrot.lane.b32.xlu0 %v2089, 64
        %v2132 = vpop.permute.xlu0 %2131
        %2133 = vrot.lane.b32.xlu0 %v2098, 64
        %v2134 = vpop.permute.xlu0 %2133
        %vm2153 = vcmask 589312
        %2154 = vst.msk [vmem:[#allocation3] sm:$0xff] %vm2153, %v2100
        %2155 = vst.msk [vmem:[#allocation3 + $0x8] sm:$0xff] %vm2153, %v2102
        %2156 = vst.msk [vmem:[#allocation3 + $0x10] sm:$0xff] %vm2153, %v2104
        %2157 = vst.msk [vmem:[#allocation3 + $0x18] sm:$0xff] %vm2153, %v2106
        %2158 = vst.msk [vmem:[#allocation3 + $0x20] sm:$0xff] %vm2153, %v2108
        %2159 = vst.msk [vmem:[#allocation3 + $0x28] sm:$0xff] %vm2153, %v2110
        %2160 = vst.msk [vmem:[#allocation3 + $0x30] sm:$0xff] %vm2153, %v2112
        %2161 = vst.msk [vmem:[#allocation3 + $0x38] sm:$0xff] %vm2153, %v2114
        %2162 = vst.msk [vmem:[#allocation3 + $0x40] sm:$0xff] %vm2153, %v2116
        %2163 = vst.msk [vmem:[#allocation3 + $0x48] sm:$0xff] %vm2153, %v2118
        %2164 = vst.msk [vmem:[#allocation3 + $0x50] sm:$0xff] %vm2153, %v2120
        %2165 = vst.msk [vmem:[#allocation3 + $0x58] sm:$0xff] %vm2153, %v2122
        %2166 = vst.msk [vmem:[#allocation3 + $0x60] sm:$0xff] %vm2153, %v2124
        %2167 = vst.msk [vmem:[#allocation3 + $0x68] sm:$0xff] %vm2153, %v2126
        %2168 = vst.msk [vmem:[#allocation3 + $0x70] sm:$0xff] %vm2153, %v2128
        %2169 = vst.msk [vmem:[#allocation3 + $0x78] sm:$0xff] %vm2153, %v2130
        %2170 = vst.msk [vmem:[#allocation3 + $0x80] sm:$0xff] %vm2153, %v2132
        %2171 = vst.msk [vmem:[#allocation3 + $0x88] sm:$0xff] %vm2153, %v2134
        %v2172 = vld [vmem:[#allocation3] sm:$0xff]
        %v2173 = vld [vmem:[#allocation3 + $0x8] sm:$0xff]
        %v2174 = vld [vmem:[#allocation3 + $0x10] sm:$0xff]
        %v2175 = vld [vmem:[#allocation3 + $0x18] sm:$0xff]
        %v2176 = vld [vmem:[#allocation3 + $0x20] sm:$0xff]
        %v2177 = vld [vmem:[#allocation3 + $0x28] sm:$0xff]
        %v2178 = vld [vmem:[#allocation3 + $0x30] sm:$0xff]
        %v2179 = vld [vmem:[#allocation3 + $0x38] sm:$0xff]
        %v2180 = vld [vmem:[#allocation3 + $0x40] sm:$0xff]
        %v2181 = vld [vmem:[#allocation3 + $0x48] sm:$0xff]
        %v2182 = vld [vmem:[#allocation3 + $0x50] sm:$0xff]
        %v2183 = vld [vmem:[#allocation3 + $0x58] sm:$0xff]
        %v2184 = vld [vmem:[#allocation3 + $0x60] sm:$0xff]
        %v2185 = vld [vmem:[#allocation3 + $0x68] sm:$0xff]
        %v2186 = vld [vmem:[#allocation3 + $0x70] sm:$0xff]
        %v2187 = vld [vmem:[#allocation3 + $0x78] sm:$0xff]
        %v2188 = vld [vmem:[#allocation3 + $0x80] sm:$0xff]
        %v2189 = vld [vmem:[#allocation3 + $0x88] sm:$0xff]
        %v2190 = vld [vmem:[#allocation7] sm:$0xf]
        %v2191 = vld [vmem:[#allocation7 + $0x4] sm:$0xf]
        %v2192 = vld [vmem:[#allocation7 + $0x8] sm:$0xf]
        %v2193 = vld [vmem:[#allocation7 + $0xc] sm:$0xf]
        %v2194 = vld [vmem:[#allocation7 + $0x10] sm:$0xf]
        %v2195 = vld [vmem:[#allocation7 + $0x14] sm:$0xf]
        %v2196 = vld [vmem:[#allocation7 + $0x18] sm:$0xf]
        %v2197 = vld [vmem:[#allocation7 + $0x1c] sm:$0xf]
        %v2198 = vld [vmem:[#allocation7 + $0x20] sm:$0xf]
        %v2199 = vld [vmem:[#allocation10] sm:$0x1]
        %v2201 = vlaneseq
        %v2202 = vshrl.u32 %v2201, 7
        %v2203 = vsub.s32 0, %v2202
        %v2204 = vrot.slane %v2199, %v2203
        %v2215 = vunpack.c.l.b16 %v2190
        %v2216 = vunpack.c.l.b16 %v2191
        %v2217 = vunpack.c.l.b16 %v2192
        %v2218 = vunpack.c.l.b16 %v2193
        %v2219 = vunpack.c.l.b16 %v2194
        %v2220 = vunpack.c.l.b16 %v2195
        %v2221 = vunpack.c.l.b16 %v2196
        %v2222 = vunpack.c.l.b16 %v2197
        %v2223 = vunpack.c.l.b16 %v2198
        %v2224 = vpack.c.b16 %v2216, %v2215
        %v2225 = vpack.c.b16 %v2218, %v2217
        %v2226 = vpack.c.b16 %v2220, %v2219
        %v2227 = vpack.c.b16 %v2222, %v2221
        %v2228 = vpack.c.b16 %v2223, %v2223
        %vm2233 = vcmask 588800
        %v2235 = vsel %vm2233, %v2172, 0
        %v2238 = vsel %vm2233, %v2173, 0
        %v2241 = vsel %vm2233, %v2174, 0
        %v2244 = vsel %vm2233, %v2175, 0
        %v2247 = vsel %vm2233, %v2176, 0
        %v2250 = vsel %vm2233, %v2177, 0
        %v2253 = vsel %vm2233, %v2178, 0
        %v2256 = vsel %vm2233, %v2179, 0
        %v2259 = vsel %vm2233, %v2180, 0
        %v2262 = vsel %vm2233, %v2181, 0
        %v2265 = vsel %vm2233, %v2182, 0
        %v2268 = vsel %vm2233, %v2183, 0
        %v2271 = vsel %vm2233, %v2184, 0
        %v2274 = vsel %vm2233, %v2185, 0
        %v2277 = vsel %vm2233, %v2186, 0
        %v2280 = vsel %vm2233, %v2187, 0
        %v2283 = vsel %vm2233, %v2188, 0
        %v2286 = vsel %vm2233, %v2189, 0
        %vm2288 = vcmask 1043456
        %v2290 = vsel %vm2288, %v2228, 0
        %2292 = vmatprep.subr.bf16.mxu0 0
        %2293 = vmatpush1.bf16.msra.mxu0 %v2224
        %2294 = vmatprep.subr.bf16.mxu0 0
        %2295 = vmatpush1.bf16.msra.mxu0 %v2225
        %2296 = vmatprep.subr.bf16.mxu0 0
        %2297 = vmatpush1.bf16.msra.mxu0 %v2226
        %2298 = vmatprep.subr.bf16.mxu0 0
        %2299 = vmatpush1.bf16.msra.mxu0 %v2227
        %2300 = vmatprep.subr.bf16.mxu0 0
        %2301 = vmatpush1.bf16.msra.mxu0 %v2290
        %2302 = vmatprep.subr.bf16.mxu0 0
        %2303 = vmatpush1.bf16.msra.mxu0 0
        %2304 = vmatprep.subr.bf16.mxu0 0
        %2305 = vmatpush1.bf16.msra.mxu0 0
        %2306 = vmatprep.subr.bf16.mxu0 0
        %2307 = vmatpush1.bf16.msra.mxu0 0
        %2308 = vmatprep.subr.bf16.mxu0 0
        %2309 = vmatpush1.bf16.msra.mxu0 0
        %2310 = vmatprep.subr.bf16.mxu0 0
        %2311 = vmatpush1.bf16.msra.mxu0 0
        %2312 = vmatprep.subr.bf16.mxu0 0
        %2313 = vmatpush1.bf16.msra.mxu0 0
        %2314 = vmatprep.subr.bf16.mxu0 0
        %2315 = vmatpush1.bf16.msra.mxu0 0
        %2316 = vmatprep.subr.bf16.mxu0 0
        %2317 = vmatpush1.bf16.msra.mxu0 0
        %2318 = vmatprep.subr.bf16.mxu0 0
        %2319 = vmatpush1.bf16.msra.mxu0 0
        %2320 = vmatprep.subr.bf16.mxu0 0
        %2321 = vmatpush1.bf16.msra.mxu0 0
        %2322 = vmatprep.subr.bf16.mxu0 0
        %2323 = vmatpush1.bf16.msra.mxu0 0
        %2324 = vmatprep.mubr.bf16.mxu0 0
        %2325 = vmatmul.mubr.bf16.gmra.mrb[0].mxu0 %v2235
        %v2326 = vpop.f32.mrb[0].mxu0
        %v2327 = vadd.f32 %v2204, %v2326
        %v2328 = vpop.f32.mrb[0].mxu0
        %v2329 = vpop.f32.mrb[0].mxu0
        %v2330 = vadd.f32 %v2204, %v2329
        %v2331 = vpop.f32.mrb[0].mxu0
        %2332 = vmatprep.mubr.bf16.mxu0 0
        %2333 = vmatmul.mubr.bf16.gmra.mrb[0].mxu0 %v2238
        %v2334 = vpop.f32.mrb[0].mxu0
        %v2335 = vadd.f32 %v2204, %v2334
        %v2336 = vpop.f32.mrb[0].mxu0
        %v2337 = vpop.f32.mrb[0].mxu0
        %v2338 = vadd.f32 %v2204, %v2337
        %v2339 = vpop.f32.mrb[0].mxu0
        %2340 = vmatprep.mubr.bf16.mxu0 0
        %2341 = vmatmul.mubr.bf16.gmra.mrb[0].mxu0 %v2241
        %v2342 = vpop.f32.mrb[0].mxu0
        %v2343 = vadd.f32 %v2204, %v2342
        %v2344 = vpop.f32.mrb[0].mxu0
        %v2345 = vpop.f32.mrb[0].mxu0
        %v2346 = vadd.f32 %v2204, %v2345
        %v2347 = vpop.f32.mrb[0].mxu0
        %2348 = vmatprep.mubr.bf16.mxu0 0
        %2349 = vmatmul.mubr.bf16.gmra.mrb[0].mxu0 %v2244
        %v2350 = vpop.f32.mrb[0].mxu0
        %v2351 = vadd.f32 %v2204, %v2350
        %v2352 = vpop.f32.mrb[0].mxu0
        %v2353 = vpop.f32.mrb[0].mxu0
        %v2354 = vadd.f32 %v2204, %v2353
        %v2355 = vpop.f32.mrb[0].mxu0
        %2356 = vmatprep.mubr.bf16.mxu0 0
        %2357 = vmatmul.mubr.bf16.gmra.mrb[0].mxu0 %v2247
        %v2358 = vpop.f32.mrb[0].mxu0
        %v2359 = vadd.f32 %v2204, %v2358
        %v2360 = vpop.f32.mrb[0].mxu0
        %v2361 = vpop.f32.mrb[0].mxu0
        %v2362 = vadd.f32 %v2204, %v2361
        %v2363 = vpop.f32.mrb[0].mxu0
        %2364 = vmatprep.mubr.bf16.mxu0 0
        %2365 = vmatmul.mubr.bf16.gmra.mrb[0].mxu0 %v2250
        %v2366 = vpop.f32.mrb[0].mxu0
        %v2367 = vadd.f32 %v2204, %v2366
        %v2368 = vpop.f32.mrb[0].mxu0
        %v2369 = vpop.f32.mrb[0].mxu0
        %v2370 = vadd.f32 %v2204, %v2369
        %v2371 = vpop.f32.mrb[0].mxu0
        %2372 = vmatprep.mubr.bf16.mxu0 0
        %2373 = vmatmul.mubr.bf16.gmra.mrb[0].mxu0 %v2253
        %v2374 = vpop.f32.mrb[0].mxu0
        %v2375 = vadd.f32 %v2204, %v2374
        %v2376 = vpop.f32.mrb[0].mxu0
        %v2377 = vpop.f32.mrb[0].mxu0
        %v2378 = vadd.f32 %v2204, %v2377
        %v2379 = vpop.f32.mrb[0].mxu0
        %2380 = vmatprep.mubr.bf16.mxu0 0
        %2381 = vmatmul.mubr.bf16.gmra.mrb[0].mxu0 %v2256
        %v2382 = vpop.f32.mrb[0].mxu0
        %v2383 = vadd.f32 %v2204, %v2382
        %v2384 = vpop.f32.mrb[0].mxu0
        %v2385 = vpop.f32.mrb[0].mxu0
        %v2386 = vadd.f32 %v2204, %v2385
        %v2387 = vpop.f32.mrb[0].mxu0
        %2388 = vmatprep.mubr.bf16.mxu0 0
        %2389 = vmatmul.mubr.bf16.gmra.mrb[0].mxu0 %v2259
        %v2390 = vpop.f32.mrb[0].mxu0
        %v2391 = vadd.f32 %v2204, %v2390
        %v2392 = vpop.f32.mrb[0].mxu0
        %v2393 = vpop.f32.mrb[0].mxu0
        %v2394 = vadd.f32 %v2204, %v2393
        %v2395 = vpop.f32.mrb[0].mxu0
        %2396 = vmatprep.mubr.bf16.mxu0 0
        %2397 = vmatmul.mubr.bf16.gmra.mrb[0].mxu0 %v2262
        %v2398 = vpop.f32.mrb[0].mxu0
        %v2399 = vadd.f32 %v2204, %v2398
        %v2400 = vpop.f32.mrb[0].mxu0
        %v2401 = vpop.f32.mrb[0].mxu0
        %v2402 = vadd.f32 %v2204, %v2401
        %v2403 = vpop.f32.mrb[0].mxu0
        %2404 = vmatprep.mubr.bf16.mxu0 0
        %2405 = vmatmul.mubr.bf16.gmra.mrb[0].mxu0 %v2265
        %v2406 = vpop.f32.mrb[0].mxu0
        %v2407 = vadd.f32 %v2204, %v2406
        %v2408 = vpop.f32.mrb[0].mxu0
        %v2409 = vpop.f32.mrb[0].mxu0
        %v2410 = vadd.f32 %v2204, %v2409
        %v2411 = vpop.f32.mrb[0].mxu0
        %2412 = vmatprep.mubr.bf16.mxu0 0
        %2413 = vmatmul.mubr.bf16.gmra.mrb[0].mxu0 %v2268
        %v2414 = vpop.f32.mrb[0].mxu0
        %v2415 = vadd.f32 %v2204, %v2414
        %v2416 = vpop.f32.mrb[0].mxu0
        %v2417 = vpop.f32.mrb[0].mxu0
        %v2418 = vadd.f32 %v2204, %v2417
        %v2419 = vpop.f32.mrb[0].mxu0
        %2420 = vmatprep.mubr.bf16.mxu0 0
        %2421 = vmatmul.mubr.bf16.gmra.mrb[0].mxu0 %v2271
        %v2422 = vpop.f32.mrb[0].mxu0
        %v2423 = vadd.f32 %v2204, %v2422
        %v2424 = vpop.f32.mrb[0].mxu0
        %v2425 = vpop.f32.mrb[0].mxu0
        %v2426 = vadd.f32 %v2204, %v2425
        %v2427 = vpop.f32.mrb[0].mxu0
        %2428 = vmatprep.mubr.bf16.mxu0 0
        %2429 = vmatmul.mubr.bf16.gmra.mrb[0].mxu0 %v2274
        %v2430 = vpop.f32.mrb[0].mxu0
        %v2431 = vadd.f32 %v2204, %v2430
        %v2432 = vpop.f32.mrb[0].mxu0
        %v2433 = vpop.f32.mrb[0].mxu0
        %v2434 = vadd.f32 %v2204, %v2433
        %v2435 = vpop.f32.mrb[0].mxu0
        %2436 = vmatprep.mubr.bf16.mxu0 0
        %2437 = vmatmul.mubr.bf16.gmra.mrb[0].mxu0 %v2277
        %v2438 = vpop.f32.mrb[0].mxu0
        %v2439 = vadd.f32 %v2204, %v2438
        %v2440 = vpop.f32.mrb[0].mxu0
        %v2441 = vpop.f32.mrb[0].mxu0
        %v2442 = vadd.f32 %v2204, %v2441
        %v2443 = vpop.f32.mrb[0].mxu0
        %2444 = vmatprep.mubr.bf16.mxu0 0
        %2445 = vmatmul.mubr.bf16.gmra.mrb[0].mxu0 %v2280
        %v2446 = vpop.f32.mrb[0].mxu0
        %v2447 = vadd.f32 %v2204, %v2446
        %v2448 = vpop.f32.mrb[0].mxu0
        %v2449 = vpop.f32.mrb[0].mxu0
        %v2450 = vadd.f32 %v2204, %v2449
        %v2451 = vpop.f32.mrb[0].mxu0
        %2452 = vmatprep.mubr.bf16.mxu0 0
        %2453 = vmatmul.mubr.bf16.gmra.mrb[0].mxu0 %v2283
        %v2454 = vpop.f32.mrb[0].mxu0
        %v2455 = vadd.f32 %v2204, %v2454
        %v2456 = vpop.f32.mrb[0].mxu0
        %v2457 = vpop.f32.mrb[0].mxu0
        %v2458 = vadd.f32 %v2204, %v2457
        %v2459 = vpop.f32.mrb[0].mxu0
        %2460 = vmatprep.mubr.bf16.mxu0 0
        %2461 = vmatmul.mubr.bf16.gmra.mrb[0].mxu0 %v2286
        %v2462 = vpop.f32.mrb[0].mxu0
        %v2463 = vadd.f32 %v2204, %v2462
        %v2464 = vpop.f32.mrb[0].mxu0
        %v2465 = vpop.f32.mrb[0].mxu0
        %v2466 = vadd.f32 %v2204, %v2465
        %v2467 = vpop.f32.mrb[0].mxu0
        %2468 = vdwg.mxu0
        %v2469 = vmax.f32 %v2327, 0.0
        %v2470 = vmax.f32 %v2330, 0.0
        %v2471 = vmax.f32 %v2335, 0.0
        %v2472 = vmax.f32 %v2338, 0.0
        %v2473 = vmax.f32 %v2343, 0.0
        %v2474 = vmax.f32 %v2346, 0.0
        %v2475 = vmax.f32 %v2351, 0.0
        %v2476 = vmax.f32 %v2354, 0.0
        %v2477 = vmax.f32 %v2359, 0.0
        %v2478 = vmax.f32 %v2362, 0.0
        %v2479 = vmax.f32 %v2367, 0.0
        %v2480 = vmax.f32 %v2370, 0.0
        %v2481 = vmax.f32 %v2375, 0.0
        %v2482 = vmax.f32 %v2378, 0.0
        %v2483 = vmax.f32 %v2383, 0.0
        %v2484 = vmax.f32 %v2386, 0.0
        %v2485 = vmax.f32 %v2391, 0.0
        %v2486 = vmax.f32 %v2394, 0.0
        %v2487 = vmax.f32 %v2399, 0.0
        %v2488 = vmax.f32 %v2402, 0.0
        %v2489 = vmax.f32 %v2407, 0.0
        %v2490 = vmax.f32 %v2410, 0.0
        %v2491 = vmax.f32 %v2415, 0.0
        %v2492 = vmax.f32 %v2418, 0.0
        %v2493 = vmax.f32 %v2423, 0.0
        %v2494 = vmax.f32 %v2426, 0.0
        %v2495 = vmax.f32 %v2431, 0.0
        %v2496 = vmax.f32 %v2434, 0.0
        %v2497 = vmax.f32 %v2439, 0.0
        %v2498 = vmax.f32 %v2442, 0.0
        %v2499 = vmax.f32 %v2447, 0.0
        %v2500 = vmax.f32 %v2450, 0.0
        %v2501 = vmax.f32 %v2455, 0.0
        %v2502 = vmax.f32 %v2458, 0.0
        %v2503 = vmax.f32 %v2463, 0.0
        %v2504 = vmax.f32 %v2466, 0.0
        %s2505 = smul.u32 %s27, 8
        %v2506 = vstv %s2505
        %v2507 = vadd.s32 %v2506, 1
        %v2508 = vadd.s32 %v2506, 2
        %v2509 = vadd.s32 %v2506, 3
        %v2510 = vadd.s32 %v2506, 4
        %v2511 = vadd.s32 %v2506, 5
        %v2512 = vadd.s32 %v2506, 6
        %v2513 = vadd.s32 %v2506, 7
        %v2514 = vadd.s32 %v2506, 8
        %v2515 = vadd.s32 %v2506, 9
        %v2516 = vadd.s32 %v2506, 10
        %v2517 = vadd.s32 %v2506, 11
        %v2518 = vlaneseq
        %v2519 = vshrl.u32 %v2518, 7
        %v2520 = vadd.s32 %v2519, 8
        %v2521 = vadd.s32 %v2519, 16
        %vm2522 = vcmp.ge.s32.totalorder %v2506, 2
        %vm2523 = vcmp.ge.s32.totalorder %v2507, 2
        %vm2524 = vcmp.ge.s32.totalorder %v2508, 2
        %vm2525 = vcmp.ge.s32.totalorder %v2509, 2
        %vm2526 = vcmp.ge.s32.totalorder %v2510, 2
        %vm2527 = vcmp.ge.s32.totalorder %v2511, 2
        %vm2528 = vcmp.ge.s32.totalorder %v2512, 2
        %vm2529 = vcmp.ge.s32.totalorder %v2513, 2
        %vm2530 = vcmp.ge.s32.totalorder %v2514, 2
        %vm2531 = vcmp.ge.s32.totalorder %v2515, 2
        %vm2532 = vcmp.ge.s32.totalorder %v2516, 2
        %vm2533 = vcmp.ge.s32.totalorder %v2517, 2
        %vm2534 = vcmp.lt.s32.totalorder %v2506, 18
        %vm2535 = vcmp.lt.s32.totalorder %v2507, 18
        %vm2536 = vcmp.lt.s32.totalorder %v2508, 18
        %vm2537 = vcmp.lt.s32.totalorder %v2509, 18
        %vm2538 = vcmp.lt.s32.totalorder %v2510, 18
        %vm2539 = vcmp.lt.s32.totalorder %v2511, 18
        %vm2540 = vcmp.lt.s32.totalorder %v2512, 18
        %vm2541 = vcmp.lt.s32.totalorder %v2513, 18
        %vm2542 = vcmp.lt.s32.totalorder %v2514, 18
        %vm2543 = vcmp.lt.s32.totalorder %v2515, 18
        %vm2544 = vcmp.lt.s32.totalorder %v2516, 18
        %vm2545 = vcmp.lt.s32.totalorder %v2517, 18
        %vm2546 = vmand %vm2522, %vm2534
        %vm2547 = vmand %vm2523, %vm2535
        %vm2548 = vmand %vm2524, %vm2536
        %vm2549 = vmand %vm2525, %vm2537
        %vm2550 = vmand %vm2526, %vm2538
        %vm2551 = vmand %vm2527, %vm2539
        %vm2552 = vmand %vm2528, %vm2540
        %vm2553 = vmand %vm2529, %vm2541
        %vm2554 = vmand %vm2530, %vm2542
        %vm2555 = vmand %vm2531, %vm2543
        %vm2556 = vmand %vm2532, %vm2544
        %vm2557 = vmand %vm2533, %vm2545
        %vm2558 = vcmp.ge.s32.totalorder %v2519, 2
        %vm2559 = vcmp.ge.s32.totalorder %v2520, 2
        %vm2560 = vcmp.ge.s32.totalorder %v2521, 2
        %vm2561 = vmand %vm2546, %vm2558
        %vm2562 = vmand %vm2546, %vm2559
        %vm2563 = vmand %vm2546, %vm2560
        %vm2564 = vmand %vm2547, %vm2558
        %vm2565 = vmand %vm2547, %vm2559
        %vm2566 = vmand %vm2547, %vm2560
        %vm2567 = vmand %vm2548, %vm2558
        %vm2568 = vmand %vm2548, %vm2559
        %vm2569 = vmand %vm2548, %vm2560
        %vm2570 = vmand %vm2549, %vm2558
        %vm2571 = vmand %vm2549, %vm2559
        %vm2572 = vmand %vm2549, %vm2560
        %vm2573 = vmand %vm2550, %vm2558
        %vm2574 = vmand %vm2550, %vm2559
        %vm2575 = vmand %vm2550, %vm2560
        %vm2576 = vmand %vm2551, %vm2558
        %vm2577 = vmand %vm2551, %vm2559
        %vm2578 = vmand %vm2551, %vm2560
        %vm2579 = vmand %vm2552, %vm2558
        %vm2580 = vmand %vm2552, %vm2559
        %vm2581 = vmand %vm2552, %vm2560
        %vm2582 = vmand %vm2553, %vm2558
        %vm2583 = vmand %vm2553, %vm2559
        %vm2584 = vmand %vm2553, %vm2560
        %vm2585 = vmand %vm2554, %vm2558
        %vm2586 = vmand %vm2554, %vm2559
        %vm2587 = vmand %vm2554, %vm2560
        %vm2588 = vmand %vm2555, %vm2558
        %vm2589 = vmand %vm2555, %vm2559
        %vm2590 = vmand %vm2555, %vm2560
        %vm2591 = vmand %vm2556, %vm2558
        %vm2592 = vmand %vm2556, %vm2559
        %vm2593 = vmand %vm2556, %vm2560
        %vm2594 = vmand %vm2557, %vm2558
        %vm2595 = vmand %vm2557, %vm2559
        %vm2596 = vmand %vm2557, %vm2560
        %vm2597 = vcmp.lt.s32.totalorder %v2519, 18
        %vm2598 = vcmp.lt.s32.totalorder %v2520, 18
        %vm2599 = vcmp.lt.s32.totalorder %v2521, 18
        %vm2600 = vmand %vm2561, %vm2597
        %vm2601 = vmand %vm2562, %vm2598
        %vm2602 = vmand %vm2563, %vm2599
        %vm2603 = vmand %vm2564, %vm2597
        %vm2604 = vmand %vm2565, %vm2598
        %vm2605 = vmand %vm2566, %vm2599
        %vm2606 = vmand %vm2567, %vm2597
        %vm2607 = vmand %vm2568, %vm2598
        %vm2608 = vmand %vm2569, %vm2599
        %vm2609 = vmand %vm2570, %vm2597
        %vm2610 = vmand %vm2571, %vm2598
        %vm2611 = vmand %vm2572, %vm2599
        %vm2612 = vmand %vm2573, %vm2597
        %vm2613 = vmand %vm2574, %vm2598
        %vm2614 = vmand %vm2575, %vm2599
        %vm2615 = vmand %vm2576, %vm2597
        %vm2616 = vmand %vm2577, %vm2598
        %vm2617 = vmand %vm2578, %vm2599
        %vm2618 = vmand %vm2579, %vm2597
        %vm2619 = vmand %vm2580, %vm2598
        %vm2620 = vmand %vm2581, %vm2599
        %vm2621 = vmand %vm2582, %vm2597
        %vm2622 = vmand %vm2583, %vm2598
        %vm2623 = vmand %vm2584, %vm2599
        %vm2624 = vmand %vm2585, %vm2597
        %vm2625 = vmand %vm2586, %vm2598
        %vm2626 = vmand %vm2587, %vm2599
        %vm2627 = vmand %vm2588, %vm2597
        %vm2628 = vmand %vm2589, %vm2598
        %vm2629 = vmand %vm2590, %vm2599
        %vm2630 = vmand %vm2591, %vm2597
        %vm2631 = vmand %vm2592, %vm2598
        %vm2632 = vmand %vm2593, %vm2599
        %vm2633 = vmand %vm2594, %vm2597
        %vm2634 = vmand %vm2595, %vm2598
        %vm2635 = vmand %vm2596, %vm2599
        %v2636 = vsel %vm2600, 1, 0
        %v2637 = vsel %vm2601, 1, 0
        %v2638 = vsel %vm2602, 1, 0
        %v2639 = vsel %vm2603, 1, 0
        %v2640 = vsel %vm2604, 1, 0
        %v2641 = vsel %vm2605, 1, 0
        %v2642 = vsel %vm2606, 1, 0
        %v2643 = vsel %vm2607, 1, 0
        %v2644 = vsel %vm2608, 1, 0
        %v2645 = vsel %vm2609, 1, 0
        %v2646 = vsel %vm2610, 1, 0
        %v2647 = vsel %vm2611, 1, 0
        %v2648 = vsel %vm2612, 1, 0
        %v2649 = vsel %vm2613, 1, 0
        %v2650 = vsel %vm2614, 1, 0
        %v2651 = vsel %vm2615, 1, 0
        %v2652 = vsel %vm2616, 1, 0
        %v2653 = vsel %vm2617, 1, 0
        %v2654 = vsel %vm2618, 1, 0
        %v2655 = vsel %vm2619, 1, 0
        %v2656 = vsel %vm2620, 1, 0
        %v2657 = vsel %vm2621, 1, 0
        %v2658 = vsel %vm2622, 1, 0
        %v2659 = vsel %vm2623, 1, 0
        %v2660 = vsel %vm2624, 1, 0
        %v2661 = vsel %vm2625, 1, 0
        %v2662 = vsel %vm2626, 1, 0
        %v2663 = vsel %vm2627, 1, 0
        %v2664 = vsel %vm2628, 1, 0
        %v2665 = vsel %vm2629, 1, 0
        %v2666 = vsel %vm2630, 1, 0
        %v2667 = vsel %vm2631, 1, 0
        %v2668 = vsel %vm2632, 1, 0
        %v2669 = vsel %vm2633, 1, 0
        %v2670 = vsel %vm2634, 1, 0
        %v2671 = vsel %vm2635, 1, 0
        %vm2672 = vcmp.eq.s32.totalorder %v2636, 1
        %vm2673 = vcmp.eq.s32.totalorder %v2637, 1
        %vm2674 = vcmp.eq.s32.totalorder %v2638, 1
        %vm2675 = vcmp.eq.s32.totalorder %v2639, 1
        %vm2676 = vcmp.eq.s32.totalorder %v2640, 1
        %vm2677 = vcmp.eq.s32.totalorder %v2641, 1
        %vm2678 = vcmp.eq.s32.totalorder %v2642, 1
        %vm2679 = vcmp.eq.s32.totalorder %v2643, 1
        %vm2680 = vcmp.eq.s32.totalorder %v2644, 1
        %vm2681 = vcmp.eq.s32.totalorder %v2645, 1
        %vm2682 = vcmp.eq.s32.totalorder %v2646, 1
        %vm2683 = vcmp.eq.s32.totalorder %v2647, 1
        %vm2684 = vcmp.eq.s32.totalorder %v2648, 1
        %vm2685 = vcmp.eq.s32.totalorder %v2649, 1
        %vm2686 = vcmp.eq.s32.totalorder %v2650, 1
        %vm2687 = vcmp.eq.s32.totalorder %v2651, 1
        %vm2688 = vcmp.eq.s32.totalorder %v2652, 1
        %vm2689 = vcmp.eq.s32.totalorder %v2653, 1
        %vm2690 = vcmp.eq.s32.totalorder %v2654, 1
        %vm2691 = vcmp.eq.s32.totalorder %v2655, 1
        %vm2692 = vcmp.eq.s32.totalorder %v2656, 1
        %vm2693 = vcmp.eq.s32.totalorder %v2657, 1
        %vm2694 = vcmp.eq.s32.totalorder %v2658, 1
        %vm2695 = vcmp.eq.s32.totalorder %v2659, 1
        %vm2696 = vcmp.eq.s32.totalorder %v2660, 1
        %vm2697 = vcmp.eq.s32.totalorder %v2661, 1
        %vm2698 = vcmp.eq.s32.totalorder %v2662, 1
        %vm2699 = vcmp.eq.s32.totalorder %v2663, 1
        %vm2700 = vcmp.eq.s32.totalorder %v2664, 1
        %vm2701 = vcmp.eq.s32.totalorder %v2665, 1
        %vm2702 = vcmp.eq.s32.totalorder %v2666, 1
        %vm2703 = vcmp.eq.s32.totalorder %v2667, 1
        %vm2704 = vcmp.eq.s32.totalorder %v2668, 1
        %vm2705 = vcmp.eq.s32.totalorder %v2669, 1
        %vm2706 = vcmp.eq.s32.totalorder %v2670, 1
        %vm2707 = vcmp.eq.s32.totalorder %v2671, 1
        %v2708 = vsel %vm2672, %v2469, 0.0
        %v2709 = vsel %vm2673, %v2470, 0.0
        %v2710 = vsel %vm2674, %v2471, 0.0
        %v2711 = vsel %vm2675, %v2472, 0.0
        %v2712 = vsel %vm2676, %v2473, 0.0
        %v2713 = vsel %vm2677, %v2474, 0.0
        %v2714 = vsel %vm2678, %v2475, 0.0
        %v2715 = vsel %vm2679, %v2476, 0.0
        %v2716 = vsel %vm2680, %v2477, 0.0
        %v2717 = vsel %vm2681, %v2478, 0.0
        %v2718 = vsel %vm2682, %v2479, 0.0
        %v2719 = vsel %vm2683, %v2480, 0.0
        %v2720 = vsel %vm2684, %v2481, 0.0
        %v2721 = vsel %vm2685, %v2482, 0.0
        %v2722 = vsel %vm2686, %v2483, 0.0
        %v2723 = vsel %vm2687, %v2484, 0.0
        %v2724 = vsel %vm2688, %v2485, 0.0
        %v2725 = vsel %vm2689, %v2486, 0.0
        %v2726 = vsel %vm2690, %v2487, 0.0
        %v2727 = vsel %vm2691, %v2488, 0.0
        %v2728 = vsel %vm2692, %v2489, 0.0
        %v2729 = vsel %vm2693, %v2490, 0.0
        %v2730 = vsel %vm2694, %v2491, 0.0
        %v2731 = vsel %vm2695, %v2492, 0.0
        %v2732 = vsel %vm2696, %v2493, 0.0
        %v2733 = vsel %vm2697, %v2494, 0.0
        %v2734 = vsel %vm2698, %v2495, 0.0
        %v2735 = vsel %vm2699, %v2496, 0.0
        %v2736 = vsel %vm2700, %v2497, 0.0
        %v2737 = vsel %vm2701, %v2498, 0.0
        %v2738 = vsel %vm2702, %v2499, 0.0
        %v2739 = vsel %vm2703, %v2500, 0.0
        %v2740 = vsel %vm2704, %v2501, 0.0
        %v2741 = vsel %vm2705, %v2502, 0.0
        %v2742 = vsel %vm2706, %v2503, 0.0
        %v2743 = vsel %vm2707, %v2504, 0.0
        %v2744 = vpack.c.bf16 %v2709, %v2708
        %v2745 = vpack.c.bf16 %v2711, %v2710
        %v2746 = vpack.c.bf16 %v2713, %v2712
        %v2747 = vpack.c.bf16 %v2715, %v2714
        %v2748 = vpack.c.bf16 %v2717, %v2716
        %v2749 = vpack.c.bf16 %v2719, %v2718
        %v2750 = vpack.c.bf16 %v2721, %v2720
        %v2751 = vpack.c.bf16 %v2723, %v2722
        %v2752 = vpack.c.bf16 %v2725, %v2724
        %v2753 = vpack.c.bf16 %v2727, %v2726
        %v2754 = vpack.c.bf16 %v2729, %v2728
        %v2755 = vpack.c.bf16 %v2731, %v2730
        %v2756 = vpack.c.bf16 %v2733, %v2732
        %v2757 = vpack.c.bf16 %v2735, %v2734
        %v2758 = vpack.c.bf16 %v2737, %v2736
        %v2759 = vpack.c.bf16 %v2739, %v2738
        %v2760 = vpack.c.bf16 %v2741, %v2740
        %v2761 = vpack.c.bf16 %v2743, %v2742
        %vm2762 = vcmask 261120
        %2763 = vst.msk [vmem:[#allocation4] sm:$0xff] %vm2762, %v2744
        %2764 = vst.msk [vmem:[#allocation4 + $0x8] sm:$0xff] %vm2762, %v2745
        %2765 = vst.msk [vmem:[#allocation4 + $0x10] sm:$0xff] %vm2762, %v2746
        %2766 = vst.msk [vmem:[#allocation4 + $0x18] sm:$0xff] %vm2762, %v2747
        %2767 = vst.msk [vmem:[#allocation4 + $0x20] sm:$0xff] %vm2762, %v2748
        %2768 = vst.msk [vmem:[#allocation4 + $0x28] sm:$0xff] %vm2762, %v2749
        %2769 = vst.msk [vmem:[#allocation4 + $0x30] sm:$0xff] %vm2762, %v2750
        %2770 = vst.msk [vmem:[#allocation4 + $0x38] sm:$0xff] %vm2762, %v2751
        %2771 = vst.msk [vmem:[#allocation4 + $0x40] sm:$0xff] %vm2762, %v2752
        %2772 = vst.msk [vmem:[#allocation4 + $0x48] sm:$0xff] %vm2762, %v2753
        %2773 = vst.msk [vmem:[#allocation4 + $0x50] sm:$0xff] %vm2762, %v2754
        %2774 = vst.msk [vmem:[#allocation4 + $0x58] sm:$0xff] %vm2762, %v2755
        %2775 = vst.msk [vmem:[#allocation4 + $0x60] sm:$0xff] %vm2762, %v2756
        %2776 = vst.msk [vmem:[#allocation4 + $0x68] sm:$0xff] %vm2762, %v2757
        %2777 = vst.msk [vmem:[#allocation4 + $0x70] sm:$0xff] %vm2762, %v2758
        %2778 = vst.msk [vmem:[#allocation4 + $0x78] sm:$0xff] %vm2762, %v2759
        %2779 = vst.msk [vmem:[#allocation4 + $0x80] sm:$0xff] %vm2762, %v2760
        %2780 = vst.msk [vmem:[#allocation4 + $0x88] sm:$0xff] %vm2762, %v2761
        %v2781 = vld [vmem:[#allocation4 + $0x8] sm:$0xf8]
        %v2782 = vld [vmem:[#allocation4 + $0x10] sm:$0xff]
        %v2783 = vld [vmem:[#allocation4 + $0x18] sm:$0xff]
        %v2784 = vld [vmem:[#allocation4 + $0x20] sm:$0xff]
        %v2785 = vld [vmem:[#allocation4 + $0x28] sm:$0xff]
        %v2786 = vld [vmem:[#allocation4 + $0x30] sm:$0xff]
        %v2787 = vld [vmem:[#allocation4 + $0x38] sm:$0xff]
        %v2788 = vld [vmem:[#allocation4 + $0x40] sm:$0xff]
        %v2789 = vld [vmem:[#allocation4 + $0x48] sm:$0xff]
        %v2790 = vld [vmem:[#allocation4 + $0x50] sm:$0xff]
        %v2791 = vld [vmem:[#allocation4 + $0x58] sm:$0xff]
        %v2792 = vld [vmem:[#allocation4 + $0x60] sm:$0xff]
        %v2793 = vld [vmem:[#allocation4 + $0x68] sm:$0xf]
        %v2795 = vshrl.u32 %v2781, 16
        %v2797 = vrot.slane %v2795, 3
        %v2798 = vshll.u32 %v2781, 16
        %v2800 = vrot.slane %v2798, 4
        %v2801 = vor.u32 %v2797, %v2800
        %v2803 = vshrl.u32 %v2782, 16
        %v2805 = vrot.slane %v2803, 3
        %v2806 = vshll.u32 %v2782, 16
        %v2808 = vrot.slane %v2806, 4
        %v2809 = vor.u32 %v2805, %v2808
        %v2810 = vsel %vm289, %v2801, %v2809
        %v2812 = vshrl.u32 %v2783, 16
        %v2814 = vrot.slane %v2812, 3
        %v2815 = vshll.u32 %v2783, 16
        %v2817 = vrot.slane %v2815, 4
        %v2818 = vor.u32 %v2814, %v2817
        %v2819 = vsel %vm289, %v2809, %v2818
        %v2821 = vshrl.u32 %v2784, 16
        %v2823 = vrot.slane %v2821, 3
        %v2824 = vshll.u32 %v2784, 16
        %v2826 = vrot.slane %v2824, 4
        %v2827 = vor.u32 %v2823, %v2826
        %v2828 = vsel %vm289, %v2818, %v2827
        %v2830 = vshrl.u32 %v2785, 16
        %v2832 = vrot.slane %v2830, 3
        %v2833 = vshll.u32 %v2785, 16
        %v2835 = vrot.slane %v2833, 4
        %v2836 = vor.u32 %v2832, %v2835
        %v2837 = vsel %vm289, %v2827, %v2836
        %v2839 = vshrl.u32 %v2786, 16
        %v2841 = vrot.slane %v2839, 3
        %v2842 = vshll.u32 %v2786, 16
        %v2844 = vrot.slane %v2842, 4
        %v2845 = vor.u32 %v2841, %v2844
        %v2846 = vsel %vm289, %v2836, %v2845
        %v2848 = vshrl.u32 %v2787, 16
        %v2850 = vrot.slane %v2848, 3
        %v2851 = vshll.u32 %v2787, 16
        %v2853 = vrot.slane %v2851, 4
        %v2854 = vor.u32 %v2850, %v2853
        %v2855 = vsel %vm289, %v2845, %v2854
        %v2857 = vshrl.u32 %v2788, 16
        %v2859 = vrot.slane %v2857, 3
        %v2860 = vshll.u32 %v2788, 16
        %v2862 = vrot.slane %v2860, 4
        %v2863 = vor.u32 %v2859, %v2862
        %v2864 = vsel %vm289, %v2854, %v2863
        %v2866 = vshrl.u32 %v2789, 16
        %v2868 = vrot.slane %v2866, 3
        %v2869 = vshll.u32 %v2789, 16
        %v2871 = vrot.slane %v2869, 4
        %v2872 = vor.u32 %v2868, %v2871
        %v2873 = vsel %vm289, %v2863, %v2872
        %v2875 = vshrl.u32 %v2790, 16
        %v2877 = vrot.slane %v2875, 3
        %v2878 = vshll.u32 %v2790, 16
        %v2880 = vrot.slane %v2878, 4
        %v2881 = vor.u32 %v2877, %v2880
        %v2882 = vsel %vm289, %v2872, %v2881
        %v2884 = vshrl.u32 %v2791, 16
        %v2886 = vrot.slane %v2884, 3
        %v2887 = vshll.u32 %v2791, 16
        %v2889 = vrot.slane %v2887, 4
        %v2890 = vor.u32 %v2886, %v2889
        %v2891 = vsel %vm289, %v2881, %v2890
        %v2893 = vshrl.u32 %v2792, 16
        %v2895 = vrot.slane %v2893, 3
        %v2896 = vshll.u32 %v2792, 16
        %v2898 = vrot.slane %v2896, 4
        %v2899 = vor.u32 %v2895, %v2898
        %v2900 = vsel %vm289, %v2890, %v2899
        %v2902 = vshrl.u32 %v2793, 16
        %v2904 = vrot.slane %v2902, 3
        %v2905 = vshll.u32 %v2793, 16
        %v2907 = vrot.slane %v2905, 4
        %v2908 = vor.u32 %v2904, %v2907
        %v2909 = vsel %vm289, %v2899, %v2908
        %2922 = vst.msk [vmem:[#allocation5] sm:$0xff] %vm2762, %v2810
        %2923 = vst.msk [vmem:[#allocation5 + $0x18] sm:$0xff] %vm2762, %v2819
        %2924 = vst.msk [vmem:[#allocation5 + $0x30] sm:$0xff] %vm2762, %v2828
        %2925 = vst.msk [vmem:[#allocation5 + $0x48] sm:$0xff] %vm2762, %v2837
        %2926 = vst.msk [vmem:[#allocation5 + $0x60] sm:$0xff] %vm2762, %v2846
        %2927 = vst.msk [vmem:[#allocation5 + $0x78] sm:$0xff] %vm2762, %v2855
        %2928 = vst.msk [vmem:[#allocation5 + $0x90] sm:$0xff] %vm2762, %v2864
        %2929 = vst.msk [vmem:[#allocation5 + $0xa8] sm:$0xff] %vm2762, %v2873
        %2930 = vst.msk [vmem:[#allocation5 + $0xc0] sm:$0xff] %vm2762, %v2882
        %2931 = vst.msk [vmem:[#allocation5 + $0xd8] sm:$0xff] %vm2762, %v2891
        %2932 = vst.msk [vmem:[#allocation5 + $0xf0] sm:$0xff] %vm2762, %v2900
        %2933 = vst.msk [vmem:[#allocation5 + $0x108] sm:$0xff] %vm2762, %v2909
        %v2934 = vld [vmem:[#allocation4 + $0x8] sm:$0xf0]
        %v2935 = vld [vmem:[#allocation4 + $0x10] sm:$0xff]
        %v2936 = vld [vmem:[#allocation4 + $0x18] sm:$0xff]
        %v2937 = vld [vmem:[#allocation4 + $0x20] sm:$0xff]
        %v2938 = vld [vmem:[#allocation4 + $0x28] sm:$0xff]
        %v2939 = vld [vmem:[#allocation4 + $0x30] sm:$0xff]
        %v2940 = vld [vmem:[#allocation4 + $0x38] sm:$0xff]
        %v2941 = vld [vmem:[#allocation4 + $0x40] sm:$0xff]
        %v2942 = vld [vmem:[#allocation4 + $0x48] sm:$0xff]
        %v2943 = vld [vmem:[#allocation4 + $0x50] sm:$0xff]
        %v2944 = vld [vmem:[#allocation4 + $0x58] sm:$0xff]
        %v2945 = vld [vmem:[#allocation4 + $0x60] sm:$0xff]
        %v2946 = vld [vmem:[#allocation4 + $0x68] sm:$0xf]
        %v2960 = vrot.slane %v2934, 4
        %v2961 = vrot.slane %v2935, 4
        %v2962 = vsel %vm535, %v2960, %v2961
        %v2963 = vrot.slane %v2936, 4
        %v2964 = vsel %vm535, %v2961, %v2963
        %v2965 = vrot.slane %v2937, 4
        %v2966 = vsel %vm535, %v2963, %v2965
        %v2967 = vrot.slane %v2938, 4
        %v2968 = vsel %vm535, %v2965, %v2967
        %v2969 = vrot.slane %v2939, 4
        %v2970 = vsel %vm535, %v2967, %v2969
        %v2971 = vrot.slane %v2940, 4
        %v2972 = vsel %vm535, %v2969, %v2971
        %v2973 = vrot.slane %v2941, 4
        %v2974 = vsel %vm535, %v2971, %v2973
        %v2975 = vrot.slane %v2942, 4
        %v2976 = vsel %vm535, %v2973, %v2975
        %v2977 = vrot.slane %v2943, 4
        %v2978 = vsel %vm535, %v2975, %v2977
        %v2979 = vrot.slane %v2944, 4
        %v2980 = vsel %vm535, %v2977, %v2979
        %v2981 = vrot.slane %v2945, 4
        %v2982 = vsel %vm535, %v2979, %v2981
        %v2983 = vrot.slane %v2946, 4
        %v2984 = vsel %vm535, %v2981, %v2983
        %2985 = vrot.lane.b32.xlu0 %v2962, 32
        %v2986 = vpop.permute.xlu0 %2985
        %2987 = vrot.lane.b32.xlu0 %v2964, 32
        %v2988 = vpop.permute.xlu0 %2987
        %2989 = vrot.lane.b32.xlu0 %v2966, 32
        %v2990 = vpop.permute.xlu0 %2989
        %2991 = vrot.lane.b32.xlu0 %v2968, 32
        %v2992 = vpop.permute.xlu0 %2991
        %2993 = vrot.lane.b32.xlu0 %v2970, 32
        %v2994 = vpop.permute.xlu0 %2993
        %2995 = vrot.lane.b32.xlu0 %v2972, 32
        %v2996 = vpop.permute.xlu0 %2995
        %2997 = vrot.lane.b32.xlu0 %v2974, 32
        %v2998 = vpop.permute.xlu0 %2997
        %2999 = vrot.lane.b32.xlu0 %v2976, 32
        %v3000 = vpop.permute.xlu0 %2999
        %3001 = vrot.lane.b32.xlu0 %v2978, 32
        %v3002 = vpop.permute.xlu0 %3001
        %3003 = vrot.lane.b32.xlu0 %v2980, 32
        %v3004 = vpop.permute.xlu0 %3003
        %3005 = vrot.lane.b32.xlu0 %v2982, 32
        %v3006 = vpop.permute.xlu0 %3005
        %3007 = vrot.lane.b32.xlu0 %v2984, 32
        %v3008 = vpop.permute.xlu0 %3007
        %vm3021 = vcmask 523520
        %3022 = vst.msk [vmem:[#allocation5] sm:$0xff] %vm3021, %v2986
        %3023 = vst.msk [vmem:[#allocation5 + $0x18] sm:$0xff] %vm3021, %v2988
        %3024 = vst.msk [vmem:[#allocation5 + $0x30] sm:$0xff] %vm3021, %v2990
        %3025 = vst.msk [vmem:[#allocation5 + $0x48] sm:$0xff] %vm3021, %v2992
        %3026 = vst.msk [vmem:[#allocation5 + $0x60] sm:$0xff] %vm3021, %v2994
        %3027 = vst.msk [vmem:[#allocation5 + $0x78] sm:$0xff] %vm3021, %v2996
        %3028 = vst.msk [vmem:[#allocation5 + $0x90] sm:$0xff] %vm3021, %v2998
        %3029 = vst.msk [vmem:[#allocation5 + $0xa8] sm:$0xff] %vm3021, %v3000
        %3030 = vst.msk [vmem:[#allocation5 + $0xc0] sm:$0xff] %vm3021, %v3002
        %3031 = vst.msk [vmem:[#allocation5 + $0xd8] sm:$0xff] %vm3021, %v3004
        %3032 = vst.msk [vmem:[#allocation5 + $0xf0] sm:$0xff] %vm3021, %v3006
        %3033 = vst.msk [vmem:[#allocation5 + $0x108] sm:$0xff] %vm3021, %v3008
        %v3034 = vld [vmem:[#allocation4 + $0x8] sm:$0xf0]
        %v3035 = vld [vmem:[#allocation4 + $0x10] sm:$0xff]
        %v3036 = vld [vmem:[#allocation4 + $0x18] sm:$0xff]
        %v3037 = vld [vmem:[#allocation4 + $0x20] sm:$0xff]
        %v3038 = vld [vmem:[#allocation4 + $0x28] sm:$0xff]
        %v3039 = vld [vmem:[#allocation4 + $0x30] sm:$0xff]
        %v3040 = vld [vmem:[#allocation4 + $0x38] sm:$0xff]
        %v3041 = vld [vmem:[#allocation4 + $0x40] sm:$0xff]
        %v3042 = vld [vmem:[#allocation4 + $0x48] sm:$0xff]
        %v3043 = vld [vmem:[#allocation4 + $0x50] sm:$0xff]
        %v3044 = vld [vmem:[#allocation4 + $0x58] sm:$0xff]
        %v3045 = vld [vmem:[#allocation4 + $0x60] sm:$0xff]
        %v3046 = vld [vmem:[#allocation4 + $0x68] sm:$0x1f]
        %v3048 = vshrl.u32 %v3034, 16
        %v3050 = vrot.slane %v3048, 4
        %v3051 = vshll.u32 %v3034, 16
        %v3053 = vrot.slane %v3051, 5
        %v3054 = vor.u32 %v3050, %v3053
        %v3056 = vshrl.u32 %v3035, 16
        %v3058 = vrot.slane %v3056, 4
        %v3059 = vshll.u32 %v3035, 16
        %v3061 = vrot.slane %v3059, 5
        %v3062 = vor.u32 %v3058, %v3061
        %v3063 = vsel %vm665, %v3054, %v3062
        %v3065 = vshrl.u32 %v3036, 16
        %v3067 = vrot.slane %v3065, 4
        %v3068 = vshll.u32 %v3036, 16
        %v3070 = vrot.slane %v3068, 5
        %v3071 = vor.u32 %v3067, %v3070
        %v3072 = vsel %vm665, %v3062, %v3071
        %v3074 = vshrl.u32 %v3037, 16
        %v3076 = vrot.slane %v3074, 4
        %v3077 = vshll.u32 %v3037, 16
        %v3079 = vrot.slane %v3077, 5
        %v3080 = vor.u32 %v3076, %v3079
        %v3081 = vsel %vm665, %v3071, %v3080
        %v3083 = vshrl.u32 %v3038, 16
        %v3085 = vrot.slane %v3083, 4
        %v3086 = vshll.u32 %v3038, 16
        %v3088 = vrot.slane %v3086, 5
        %v3089 = vor.u32 %v3085, %v3088
        %v3090 = vsel %vm665, %v3080, %v3089
        %v3092 = vshrl.u32 %v3039, 16
        %v3094 = vrot.slane %v3092, 4
        %v3095 = vshll.u32 %v3039, 16
        %v3097 = vrot.slane %v3095, 5
        %v3098 = vor.u32 %v3094, %v3097
        %v3099 = vsel %vm665, %v3089, %v3098
        %v3101 = vshrl.u32 %v3040, 16
        %v3103 = vrot.slane %v3101, 4
        %v3104 = vshll.u32 %v3040, 16
        %v3106 = vrot.slane %v3104, 5
        %v3107 = vor.u32 %v3103, %v3106
        %v3108 = vsel %vm665, %v3098, %v3107
        %v3110 = vshrl.u32 %v3041, 16
        %v3112 = vrot.slane %v3110, 4
        %v3113 = vshll.u32 %v3041, 16
        %v3115 = vrot.slane %v3113, 5
        %v3116 = vor.u32 %v3112, %v3115
        %v3117 = vsel %vm665, %v3107, %v3116
        %v3119 = vshrl.u32 %v3042, 16
        %v3121 = vrot.slane %v3119, 4
        %v3122 = vshll.u32 %v3042, 16
        %v3124 = vrot.slane %v3122, 5
        %v3125 = vor.u32 %v3121, %v3124
        %v3126 = vsel %vm665, %v3116, %v3125
        %v3128 = vshrl.u32 %v3043, 16
        %v3130 = vrot.slane %v3128, 4
        %v3131 = vshll.u32 %v3043, 16
        %v3133 = vrot.slane %v3131, 5
        %v3134 = vor.u32 %v3130, %v3133
        %v3135 = vsel %vm665, %v3125, %v3134
        %v3137 = vshrl.u32 %v3044, 16
        %v3139 = vrot.slane %v3137, 4
        %v3140 = vshll.u32 %v3044, 16
        %v3142 = vrot.slane %v3140, 5
        %v3143 = vor.u32 %v3139, %v3142
        %v3144 = vsel %vm665, %v3134, %v3143
        %v3146 = vshrl.u32 %v3045, 16
        %v3148 = vrot.slane %v3146, 4
        %v3149 = vshll.u32 %v3045, 16
        %v3151 = vrot.slane %v3149, 5
        %v3152 = vor.u32 %v3148, %v3151
        %v3153 = vsel %vm665, %v3143, %v3152
        %v3155 = vshrl.u32 %v3046, 16
        %v3157 = vrot.slane %v3155, 4
        %v3158 = vshll.u32 %v3046, 16
        %v3160 = vrot.slane %v3158, 5
        %v3161 = vor.u32 %v3157, %v3160
        %v3162 = vsel %vm665, %v3152, %v3161
        %3163 = vrot.lane.b32.xlu0 %v3063, 64
        %v3164 = vpop.permute.xlu0 %3163
        %3165 = vrot.lane.b32.xlu0 %v3072, 64
        %v3166 = vpop.permute.xlu0 %3165
        %3167 = vrot.lane.b32.xlu0 %v3081, 64
        %v3168 = vpop.permute.xlu0 %3167
        %3169 = vrot.lane.b32.xlu0 %v3090, 64
        %v3170 = vpop.permute.xlu0 %3169
        %3171 = vrot.lane.b32.xlu0 %v3099, 64
        %v3172 = vpop.permute.xlu0 %3171
        %3173 = vrot.lane.b32.xlu0 %v3108, 64
        %v3174 = vpop.permute.xlu0 %3173
        %3175 = vrot.lane.b32.xlu0 %v3117, 64
        %v3176 = vpop.permute.xlu0 %3175
        %3177 = vrot.lane.b32.xlu0 %v3126, 64
        %v3178 = vpop.permute.xlu0 %3177
        %3179 = vrot.lane.b32.xlu0 %v3135, 64
        %v3180 = vpop.permute.xlu0 %3179
        %3181 = vrot.lane.b32.xlu0 %v3144, 64
        %v3182 = vpop.permute.xlu0 %3181
        %3183 = vrot.lane.b32.xlu0 %v3153, 64
        %v3184 = vpop.permute.xlu0 %3183
        %3185 = vrot.lane.b32.xlu0 %v3162, 64
        %v3186 = vpop.permute.xlu0 %3185
        %vm3199 = vcmask 785920
        %3200 = vst.msk [vmem:[#allocation5] sm:$0xff] %vm3199, %v3164
        %3201 = vst.msk [vmem:[#allocation5 + $0x18] sm:$0xff] %vm3199, %v3166
        %3202 = vst.msk [vmem:[#allocation5 + $0x30] sm:$0xff] %vm3199, %v3168
        %3203 = vst.msk [vmem:[#allocation5 + $0x48] sm:$0xff] %vm3199, %v3170
        %3204 = vst.msk [vmem:[#allocation5 + $0x60] sm:$0xff] %vm3199, %v3172
        %3205 = vst.msk [vmem:[#allocation5 + $0x78] sm:$0xff] %vm3199, %v3174
        %3206 = vst.msk [vmem:[#allocation5 + $0x90] sm:$0xff] %vm3199, %v3176
        %3207 = vst.msk [vmem:[#allocation5 + $0xa8] sm:$0xff] %vm3199, %v3178
        %3208 = vst.msk [vmem:[#allocation5 + $0xc0] sm:$0xff] %vm3199, %v3180
        %3209 = vst.msk [vmem:[#allocation5 + $0xd8] sm:$0xff] %vm3199, %v3182
        %3210 = vst.msk [vmem:[#allocation5 + $0xf0] sm:$0xff] %vm3199, %v3184
        %3211 = vst.msk [vmem:[#allocation5 + $0x108] sm:$0xff] %vm3199, %v3186
        %v3212 = vld [vmem:[#allocation4 + $0x10] sm:$0x80]
        %v3213 = vld [vmem:[#allocation4 + $0x18] sm:$0xff]
        %v3214 = vld [vmem:[#allocation4 + $0x20] sm:$0xff]
        %v3215 = vld [vmem:[#allocation4 + $0x28] sm:$0xff]
        %v3216 = vld [vmem:[#allocation4 + $0x30] sm:$0xff]
        %v3217 = vld [vmem:[#allocation4 + $0x38] sm:$0xff]
        %v3218 = vld [vmem:[#allocation4 + $0x40] sm:$0xff]
        %v3219 = vld [vmem:[#allocation4 + $0x48] sm:$0xff]
        %v3220 = vld [vmem:[#allocation4 + $0x50] sm:$0xff]
        %v3221 = vld [vmem:[#allocation4 + $0x58] sm:$0xff]
        %v3222 = vld [vmem:[#allocation4 + $0x60] sm:$0xff]
        %v3223 = vld [vmem:[#allocation4 + $0x68] sm:$0xff]
        %v3224 = vld [vmem:[#allocation4 + $0x70] sm:$0xff]
        %v3226 = vshrl.u32 %v3212, 16
        %v3228 = vrot.slane %v3226, 7
        %v3230 = vshrl.u32 %v3213, 16
        %v3232 = vrot.slane %v3230, 7
        %v3233 = vshll.u32 %v3213, 16
        %v3235 = vor.u32 %v3232, %v3233
        %v3236 = vsel %vm928, %v3228, %v3235
        %v3238 = vshrl.u32 %v3214, 16
        %v3240 = vrot.slane %v3238, 7
        %v3241 = vshll.u32 %v3214, 16
        %v3243 = vor.u32 %v3240, %v3241
        %v3244 = vsel %vm928, %v3232, %v3243
        %v3246 = vshrl.u32 %v3215, 16
        %v3248 = vrot.slane %v3246, 7
        %v3249 = vshll.u32 %v3215, 16
        %v3251 = vor.u32 %v3248, %v3249
        %v3252 = vsel %vm928, %v3240, %v3251
        %v3254 = vshrl.u32 %v3216, 16
        %v3256 = vrot.slane %v3254, 7
        %v3257 = vshll.u32 %v3216, 16
        %v3259 = vor.u32 %v3256, %v3257
        %v3260 = vsel %vm928, %v3248, %v3259
        %v3262 = vshrl.u32 %v3217, 16
        %v3264 = vrot.slane %v3262, 7
        %v3265 = vshll.u32 %v3217, 16
        %v3267 = vor.u32 %v3264, %v3265
        %v3268 = vsel %vm928, %v3256, %v3267
        %v3270 = vshrl.u32 %v3218, 16
        %v3272 = vrot.slane %v3270, 7
        %v3273 = vshll.u32 %v3218, 16
        %v3275 = vor.u32 %v3272, %v3273
        %v3276 = vsel %vm928, %v3264, %v3275
        %v3278 = vshrl.u32 %v3219, 16
        %v3280 = vrot.slane %v3278, 7
        %v3281 = vshll.u32 %v3219, 16
        %v3283 = vor.u32 %v3280, %v3281
        %v3284 = vsel %vm928, %v3272, %v3283
        %v3286 = vshrl.u32 %v3220, 16
        %v3288 = vrot.slane %v3286, 7
        %v3289 = vshll.u32 %v3220, 16
        %v3291 = vor.u32 %v3288, %v3289
        %v3292 = vsel %vm928, %v3280, %v3291
        %v3294 = vshrl.u32 %v3221, 16
        %v3296 = vrot.slane %v3294, 7
        %v3297 = vshll.u32 %v3221, 16
        %v3299 = vor.u32 %v3296, %v3297
        %v3300 = vsel %vm928, %v3288, %v3299
        %v3302 = vshrl.u32 %v3222, 16
        %v3304 = vrot.slane %v3302, 7
        %v3305 = vshll.u32 %v3222, 16
        %v3307 = vor.u32 %v3304, %v3305
        %v3308 = vsel %vm928, %v3296, %v3307
        %v3310 = vshrl.u32 %v3223, 16
        %v3312 = vrot.slane %v3310, 7
        %v3313 = vshll.u32 %v3223, 16
        %v3315 = vor.u32 %v3312, %v3313
        %v3316 = vsel %vm928, %v3304, %v3315
        %v3318 = vshrl.u32 %v3224, 16
        %v3320 = vrot.slane %v3318, 7
        %v3321 = vshll.u32 %v3224, 16
        %v3323 = vor.u32 %v3320, %v3321
        %v3324 = vsel %vm928, %v3312, %v3323
        %3325 = vrot.lane.b32.xlu0 %v3236, 96
        %v3326 = vpop.permute.xlu0 %3325
        %3327 = vrot.lane.b32.xlu0 %v3244, 96
        %v3328 = vpop.permute.xlu0 %3327
        %3329 = vrot.lane.b32.xlu0 %v3252, 96
        %v3330 = vpop.permute.xlu0 %3329
        %3331 = vrot.lane.b32.xlu0 %v3260, 96
        %v3332 = vpop.permute.xlu0 %3331
        %3333 = vrot.lane.b32.xlu0 %v3268, 96
        %v3334 = vpop.permute.xlu0 %3333
        %3335 = vrot.lane.b32.xlu0 %v3276, 96
        %v3336 = vpop.permute.xlu0 %3335
        %3337 = vrot.lane.b32.xlu0 %v3284, 96
        %v3338 = vpop.permute.xlu0 %3337
        %3339 = vrot.lane.b32.xlu0 %v3292, 96
        %v3340 = vpop.permute.xlu0 %3339
        %3341 = vrot.lane.b32.xlu0 %v3300, 96
        %v3342 = vpop.permute.xlu0 %3341
        %3343 = vrot.lane.b32.xlu0 %v3308, 96
        %v3344 = vpop.permute.xlu0 %3343
        %3345 = vrot.lane.b32.xlu0 %v3316, 96
        %v3346 = vpop.permute.xlu0 %3345
        %3347 = vrot.lane.b32.xlu0 %v3324, 96
        %v3348 = vpop.permute.xlu0 %3347
        %vm3361 = vcmask 1048320
        %3362 = vst.msk [vmem:[#allocation5] sm:$0xff] %vm3361, %v3326
        %3363 = vst.msk [vmem:[#allocation5 + $0x18] sm:$0xff] %vm3361, %v3328
        %3364 = vst.msk [vmem:[#allocation5 + $0x30] sm:$0xff] %vm3361, %v3330
        %3365 = vst.msk [vmem:[#allocation5 + $0x48] sm:$0xff] %vm3361, %v3332
        %3366 = vst.msk [vmem:[#allocation5 + $0x60] sm:$0xff] %vm3361, %v3334
        %3367 = vst.msk [vmem:[#allocation5 + $0x78] sm:$0xff] %vm3361, %v3336
        %3368 = vst.msk [vmem:[#allocation5 + $0x90] sm:$0xff] %vm3361, %v3338
        %3369 = vst.msk [vmem:[#allocation5 + $0xa8] sm:$0xff] %vm3361, %v3340
        %3370 = vst.msk [vmem:[#allocation5 + $0xc0] sm:$0xff] %vm3361, %v3342
        %3371 = vst.msk [vmem:[#allocation5 + $0xd8] sm:$0xff] %vm3361, %v3344
        %3372 = vst.msk [vmem:[#allocation5 + $0xf0] sm:$0xff] %vm3361, %v3346
        %3373 = vst.msk [vmem:[#allocation5 + $0x108] sm:$0xff] %vm3361, %v3348
        %v3374 = vld [vmem:[#allocation4 + $0x18] sm:$0xff]
        %v3375 = vld [vmem:[#allocation4 + $0x20] sm:$0xff]
        %v3376 = vld [vmem:[#allocation4 + $0x28] sm:$0xff]
        %v3377 = vld [vmem:[#allocation4 + $0x30] sm:$0xff]
        %v3378 = vld [vmem:[#allocation4 + $0x38] sm:$0xff]
        %v3379 = vld [vmem:[#allocation4 + $0x40] sm:$0xff]
        %v3380 = vld [vmem:[#allocation4 + $0x48] sm:$0xff]
        %v3381 = vld [vmem:[#allocation4 + $0x50] sm:$0xff]
        %v3382 = vld [vmem:[#allocation4 + $0x58] sm:$0xff]
        %v3383 = vld [vmem:[#allocation4 + $0x60] sm:$0xff]
        %v3384 = vld [vmem:[#allocation4 + $0x68] sm:$0xff]
        %v3385 = vld [vmem:[#allocation4 + $0x70] sm:$0xff]
        %3386 = vst.msk [vmem:[#allocation5 + $0x8] sm:$0xff] %vm2762, %v3374
        %3387 = vst.msk [vmem:[#allocation5 + $0x20] sm:$0xff] %vm2762, %v3375
        %3388 = vst.msk [vmem:[#allocation5 + $0x38] sm:$0xff] %vm2762, %v3376
        %3389 = vst.msk [vmem:[#allocation5 + $0x50] sm:$0xff] %vm2762, %v3377
        %3390 = vst.msk [vmem:[#allocation5 + $0x68] sm:$0xff] %vm2762, %v3378
        %3391 = vst.msk [vmem:[#allocation5 + $0x80] sm:$0xff] %vm2762, %v3379
        %3392 = vst.msk [vmem:[#allocation5 + $0x98] sm:$0xff] %vm2762, %v3380
        %3393 = vst.msk [vmem:[#allocation5 + $0xb0] sm:$0xff] %vm2762, %v3381
        %3394 = vst.msk [vmem:[#allocation5 + $0xc8] sm:$0xff] %vm2762, %v3382
        %3395 = vst.msk [vmem:[#allocation5 + $0xe0] sm:$0xff] %vm2762, %v3383
        %3396 = vst.msk [vmem:[#allocation5 + $0xf8] sm:$0xff] %vm2762, %v3384
        %3397 = vst.msk [vmem:[#allocation5 + $0x110] sm:$0xff] %vm2762, %v3385
        %v3398 = vld [vmem:[#allocation4 + $0x18] sm:$0xff]
        %v3399 = vld [vmem:[#allocation4 + $0x20] sm:$0xff]
        %v3400 = vld [vmem:[#allocation4 + $0x28] sm:$0xff]
        %v3401 = vld [vmem:[#allocation4 + $0x30] sm:$0xff]
        %v3402 = vld [vmem:[#allocation4 + $0x38] sm:$0xff]
        %v3403 = vld [vmem:[#allocation4 + $0x40] sm:$0xff]
        %v3404 = vld [vmem:[#allocation4 + $0x48] sm:$0xff]
        %v3405 = vld [vmem:[#allocation4 + $0x50] sm:$0xff]
        %v3406 = vld [vmem:[#allocation4 + $0x58] sm:$0xff]
        %v3407 = vld [vmem:[#allocation4 + $0x60] sm:$0xff]
        %v3408 = vld [vmem:[#allocation4 + $0x68] sm:$0xff]
        %v3409 = vld [vmem:[#allocation4 + $0x70] sm:$0xff]
        %v3410 = vld [vmem:[#allocation4 + $0x78] sm:$0x1]
        %v3412 = vshrl.u32 %v3398, 16
        %v3414 = vshll.u32 %v3398, 16
        %v3416 = vrot.slane %v3414, 1
        %v3417 = vor.u32 %v3412, %v3416
        %v3419 = vshll.u32 %v3399, 16
        %v3421 = vrot.slane %v3419, 1
        %v3422 = vsel %vm1278, %v3417, %v3421
        %v3423 = vshrl.u32 %v3399, 16
        %v3425 = vor.u32 %v3423, %v3421
        %v3427 = vshll.u32 %v3400, 16
        %v3429 = vrot.slane %v3427, 1
        %v3430 = vsel %vm1278, %v3425, %v3429
        %v3431 = vshrl.u32 %v3400, 16
        %v3433 = vor.u32 %v3431, %v3429
        %v3435 = vshll.u32 %v3401, 16
        %v3437 = vrot.slane %v3435, 1
        %v3438 = vsel %vm1278, %v3433, %v3437
        %v3439 = vshrl.u32 %v3401, 16
        %v3441 = vor.u32 %v3439, %v3437
        %v3443 = vshll.u32 %v3402, 16
        %v3445 = vrot.slane %v3443, 1
        %v3446 = vsel %vm1278, %v3441, %v3445
        %v3447 = vshrl.u32 %v3402, 16
        %v3449 = vor.u32 %v3447, %v3445
        %v3451 = vshll.u32 %v3403, 16
        %v3453 = vrot.slane %v3451, 1
        %v3454 = vsel %vm1278, %v3449, %v3453
        %v3455 = vshrl.u32 %v3403, 16
        %v3457 = vor.u32 %v3455, %v3453
        %v3459 = vshll.u32 %v3404, 16
        %v3461 = vrot.slane %v3459, 1
        %v3462 = vsel %vm1278, %v3457, %v3461
        %v3463 = vshrl.u32 %v3404, 16
        %v3465 = vor.u32 %v3463, %v3461
        %v3467 = vshll.u32 %v3405, 16
        %v3469 = vrot.slane %v3467, 1
        %v3470 = vsel %vm1278, %v3465, %v3469
        %v3471 = vshrl.u32 %v3405, 16
        %v3473 = vor.u32 %v3471, %v3469
        %v3475 = vshll.u32 %v3406, 16
        %v3477 = vrot.slane %v3475, 1
        %v3478 = vsel %vm1278, %v3473, %v3477
        %v3479 = vshrl.u32 %v3406, 16
        %v3481 = vor.u32 %v3479, %v3477
        %v3483 = vshll.u32 %v3407, 16
        %v3485 = vrot.slane %v3483, 1
        %v3486 = vsel %vm1278, %v3481, %v3485
        %v3487 = vshrl.u32 %v3407, 16
        %v3489 = vor.u32 %v3487, %v3485
        %v3491 = vshll.u32 %v3408, 16
        %v3493 = vrot.slane %v3491, 1
        %v3494 = vsel %vm1278, %v3489, %v3493
        %v3495 = vshrl.u32 %v3408, 16
        %v3497 = vor.u32 %v3495, %v3493
        %v3499 = vshll.u32 %v3409, 16
        %v3501 = vrot.slane %v3499, 1
        %v3502 = vsel %vm1278, %v3497, %v3501
        %v3503 = vshrl.u32 %v3409, 16
        %v3505 = vor.u32 %v3503, %v3501
        %v3507 = vshll.u32 %v3410, 16
        %v3509 = vrot.slane %v3507, 1
        %v3510 = vsel %vm1278, %v3505, %v3509
        %3511 = vrot.lane.b32.xlu0 %v3422, 32
        %v3512 = vpop.permute.xlu0 %3511
        %3513 = vrot.lane.b32.xlu0 %v3430, 32
        %v3514 = vpop.permute.xlu0 %3513
        %3515 = vrot.lane.b32.xlu0 %v3438, 32
        %v3516 = vpop.permute.xlu0 %3515
        %3517 = vrot.lane.b32.xlu0 %v3446, 32
        %v3518 = vpop.permute.xlu0 %3517
        %3519 = vrot.lane.b32.xlu0 %v3454, 32
        %v3520 = vpop.permute.xlu0 %3519
        %3521 = vrot.lane.b32.xlu0 %v3462, 32
        %v3522 = vpop.permute.xlu0 %3521
        %3523 = vrot.lane.b32.xlu0 %v3470, 32
        %v3524 = vpop.permute.xlu0 %3523
        %3525 = vrot.lane.b32.xlu0 %v3478, 32
        %v3526 = vpop.permute.xlu0 %3525
        %3527 = vrot.lane.b32.xlu0 %v3486, 32
        %v3528 = vpop.permute.xlu0 %3527
        %3529 = vrot.lane.b32.xlu0 %v3494, 32
        %v3530 = vpop.permute.xlu0 %3529
        %3531 = vrot.lane.b32.xlu0 %v3502, 32
        %v3532 = vpop.permute.xlu0 %3531
        %3533 = vrot.lane.b32.xlu0 %v3510, 32
        %v3534 = vpop.permute.xlu0 %3533
        %3547 = vst.msk [vmem:[#allocation5 + $0x8] sm:$0xff] %vm3021, %v3512
        %3548 = vst.msk [vmem:[#allocation5 + $0x20] sm:$0xff] %vm3021, %v3514
        %3549 = vst.msk [vmem:[#allocation5 + $0x38] sm:$0xff] %vm3021, %v3516
        %3550 = vst.msk [vmem:[#allocation5 + $0x50] sm:$0xff] %vm3021, %v3518
        %3551 = vst.msk [vmem:[#allocation5 + $0x68] sm:$0xff] %vm3021, %v3520
        %3552 = vst.msk [vmem:[#allocation5 + $0x80] sm:$0xff] %vm3021, %v3522
        %3553 = vst.msk [vmem:[#allocation5 + $0x98] sm:$0xff] %vm3021, %v3524
        %3554 = vst.msk [vmem:[#allocation5 + $0xb0] sm:$0xff] %vm3021, %v3526
        %3555 = vst.msk [vmem:[#allocation5 + $0xc8] sm:$0xff] %vm3021, %v3528
        %3556 = vst.msk [vmem:[#allocation5 + $0xe0] sm:$0xff] %vm3021, %v3530
        %3557 = vst.msk [vmem:[#allocation5 + $0xf8] sm:$0xff] %vm3021, %v3532
        %3558 = vst.msk [vmem:[#allocation5 + $0x110] sm:$0xff] %vm3021, %v3534
        %v3559 = vld [vmem:[#allocation4 + $0x20] sm:$0xf8]
        %v3560 = vld [vmem:[#allocation4 + $0x28] sm:$0xff]
        %v3561 = vld [vmem:[#allocation4 + $0x30] sm:$0xff]
        %v3562 = vld [vmem:[#allocation4 + $0x38] sm:$0xff]
        %v3563 = vld [vmem:[#allocation4 + $0x40] sm:$0xff]
        %v3564 = vld [vmem:[#allocation4 + $0x48] sm:$0xff]
        %v3565 = vld [vmem:[#allocation4 + $0x50] sm:$0xff]
        %v3566 = vld [vmem:[#allocation4 + $0x58] sm:$0xff]
        %v3567 = vld [vmem:[#allocation4 + $0x60] sm:$0xff]
        %v3568 = vld [vmem:[#allocation4 + $0x68] sm:$0xff]
        %v3569 = vld [vmem:[#allocation4 + $0x70] sm:$0xff]
        %v3570 = vld [vmem:[#allocation4 + $0x78] sm:$0xff]
        %v3571 = vld [vmem:[#allocation4 + $0x80] sm:$0xf]
        %v3573 = vshrl.u32 %v3559, 16
        %v3575 = vrot.slane %v3573, 3
        %v3576 = vshll.u32 %v3559, 16
        %v3578 = vrot.slane %v3576, 4
        %v3579 = vor.u32 %v3575, %v3578
        %v3581 = vshrl.u32 %v3560, 16
        %v3583 = vrot.slane %v3581, 3
        %v3584 = vshll.u32 %v3560, 16
        %v3586 = vrot.slane %v3584, 4
        %v3587 = vor.u32 %v3583, %v3586
        %v3588 = vsel %vm289, %v3579, %v3587
        %v3590 = vshrl.u32 %v3561, 16
        %v3592 = vrot.slane %v3590, 3
        %v3593 = vshll.u32 %v3561, 16
        %v3595 = vrot.slane %v3593, 4
        %v3596 = vor.u32 %v3592, %v3595
        %v3597 = vsel %vm289, %v3587, %v3596
        %v3599 = vshrl.u32 %v3562, 16
        %v3601 = vrot.slane %v3599, 3
        %v3602 = vshll.u32 %v3562, 16
        %v3604 = vrot.slane %v3602, 4
        %v3605 = vor.u32 %v3601, %v3604
        %v3606 = vsel %vm289, %v3596, %v3605
        %v3608 = vshrl.u32 %v3563, 16
        %v3610 = vrot.slane %v3608, 3
        %v3611 = vshll.u32 %v3563, 16
        %v3613 = vrot.slane %v3611, 4
        %v3614 = vor.u32 %v3610, %v3613
        %v3615 = vsel %vm289, %v3605, %v3614
        %v3617 = vshrl.u32 %v3564, 16
        %v3619 = vrot.slane %v3617, 3
        %v3620 = vshll.u32 %v3564, 16
        %v3622 = vrot.slane %v3620, 4
        %v3623 = vor.u32 %v3619, %v3622
        %v3624 = vsel %vm289, %v3614, %v3623
        %v3626 = vshrl.u32 %v3565, 16
        %v3628 = vrot.slane %v3626, 3
        %v3629 = vshll.u32 %v3565, 16
        %v3631 = vrot.slane %v3629, 4
        %v3632 = vor.u32 %v3628, %v3631
        %v3633 = vsel %vm289, %v3623, %v3632
        %v3635 = vshrl.u32 %v3566, 16
        %v3637 = vrot.slane %v3635, 3
        %v3638 = vshll.u32 %v3566, 16
        %v3640 = vrot.slane %v3638, 4
        %v3641 = vor.u32 %v3637, %v3640
        %v3642 = vsel %vm289, %v3632, %v3641
        %v3644 = vshrl.u32 %v3567, 16
        %v3646 = vrot.slane %v3644, 3
        %v3647 = vshll.u32 %v3567, 16
        %v3649 = vrot.slane %v3647, 4
        %v3650 = vor.u32 %v3646, %v3649
        %v3651 = vsel %vm289, %v3641, %v3650
        %v3653 = vshrl.u32 %v3568, 16
        %v3655 = vrot.slane %v3653, 3
        %v3656 = vshll.u32 %v3568, 16
        %v3658 = vrot.slane %v3656, 4
        %v3659 = vor.u32 %v3655, %v3658
        %v3660 = vsel %vm289, %v3650, %v3659
        %v3662 = vshrl.u32 %v3569, 16
        %v3664 = vrot.slane %v3662, 3
        %v3665 = vshll.u32 %v3569, 16
        %v3667 = vrot.slane %v3665, 4
        %v3668 = vor.u32 %v3664, %v3667
        %v3669 = vsel %vm289, %v3659, %v3668
        %v3671 = vshrl.u32 %v3570, 16
        %v3673 = vrot.slane %v3671, 3
        %v3674 = vshll.u32 %v3570, 16
        %v3676 = vrot.slane %v3674, 4
        %v3677 = vor.u32 %v3673, %v3676
        %v3678 = vsel %vm289, %v3668, %v3677
        %v3680 = vshrl.u32 %v3571, 16
        %v3682 = vrot.slane %v3680, 3
        %v3683 = vshll.u32 %v3571, 16
        %v3685 = vrot.slane %v3683, 4
        %v3686 = vor.u32 %v3682, %v3685
        %v3687 = vsel %vm289, %v3677, %v3686
        %3688 = vrot.lane.b32.xlu0 %v3588, 64
        %v3689 = vpop.permute.xlu0 %3688
        %3690 = vrot.lane.b32.xlu0 %v3597, 64
        %v3691 = vpop.permute.xlu0 %3690
        %3692 = vrot.lane.b32.xlu0 %v3606, 64
        %v3693 = vpop.permute.xlu0 %3692
        %3694 = vrot.lane.b32.xlu0 %v3615, 64
        %v3695 = vpop.permute.xlu0 %3694
        %3696 = vrot.lane.b32.xlu0 %v3624, 64
        %v3697 = vpop.permute.xlu0 %3696
        %3698 = vrot.lane.b32.xlu0 %v3633, 64
        %v3699 = vpop.permute.xlu0 %3698
        %3700 = vrot.lane.b32.xlu0 %v3642, 64
        %v3701 = vpop.permute.xlu0 %3700
        %3702 = vrot.lane.b32.xlu0 %v3651, 64
        %v3703 = vpop.permute.xlu0 %3702
        %3704 = vrot.lane.b32.xlu0 %v3660, 64
        %v3705 = vpop.permute.xlu0 %3704
        %3706 = vrot.lane.b32.xlu0 %v3669, 64
        %v3707 = vpop.permute.xlu0 %3706
        %3708 = vrot.lane.b32.xlu0 %v3678, 64
        %v3709 = vpop.permute.xlu0 %3708
        %3710 = vrot.lane.b32.xlu0 %v3687, 64
        %v3711 = vpop.permute.xlu0 %3710
        %3724 = vst.msk [vmem:[#allocation5 + $0x8] sm:$0xff] %vm3199, %v3689
        %3725 = vst.msk [vmem:[#allocation5 + $0x20] sm:$0xff] %vm3199, %v3691
        %3726 = vst.msk [vmem:[#allocation5 + $0x38] sm:$0xff] %vm3199, %v3693
        %3727 = vst.msk [vmem:[#allocation5 + $0x50] sm:$0xff] %vm3199, %v3695
        %3728 = vst.msk [vmem:[#allocation5 + $0x68] sm:$0xff] %vm3199, %v3697
        %3729 = vst.msk [vmem:[#allocation5 + $0x80] sm:$0xff] %vm3199, %v3699
        %3730 = vst.msk [vmem:[#allocation5 + $0x98] sm:$0xff] %vm3199, %v3701
        %3731 = vst.msk [vmem:[#allocation5 + $0xb0] sm:$0xff] %vm3199, %v3703
        %3732 = vst.msk [vmem:[#allocation5 + $0xc8] sm:$0xff] %vm3199, %v3705
        %3733 = vst.msk [vmem:[#allocation5 + $0xe0] sm:$0xff] %vm3199, %v3707
        %3734 = vst.msk [vmem:[#allocation5 + $0xf8] sm:$0xff] %vm3199, %v3709
        %3735 = vst.msk [vmem:[#allocation5 + $0x110] sm:$0xff] %vm3199, %v3711
        %v3736 = vld [vmem:[#allocation4 + $0x20] sm:$0xf0]
        %v3737 = vld [vmem:[#allocation4 + $0x28] sm:$0xff]
        %v3738 = vld [vmem:[#allocation4 + $0x30] sm:$0xff]
        %v3739 = vld [vmem:[#allocation4 + $0x38] sm:$0xff]
        %v3740 = vld [vmem:[#allocation4 + $0x40] sm:$0xff]
        %v3741 = vld [vmem:[#allocation4 + $0x48] sm:$0xff]
        %v3742 = vld [vmem:[#allocation4 + $0x50] sm:$0xff]
        %v3743 = vld [vmem:[#allocation4 + $0x58] sm:$0xff]
        %v3744 = vld [vmem:[#allocation4 + $0x60] sm:$0xff]
        %v3745 = vld [vmem:[#allocation4 + $0x68] sm:$0xff]
        %v3746 = vld [vmem:[#allocation4 + $0x70] sm:$0xff]
        %v3747 = vld [vmem:[#allocation4 + $0x78] sm:$0xff]
        %v3748 = vld [vmem:[#allocation4 + $0x80] sm:$0xf]
        %v3762 = vrot.slane %v3736, 4
        %v3763 = vrot.slane %v3737, 4
        %v3764 = vsel %vm535, %v3762, %v3763
        %v3765 = vrot.slane %v3738, 4
        %v3766 = vsel %vm535, %v3763, %v3765
        %v3767 = vrot.slane %v3739, 4
        %v3768 = vsel %vm535, %v3765, %v3767
        %v3769 = vrot.slane %v3740, 4
        %v3770 = vsel %vm535, %v3767, %v3769
        %v3771 = vrot.slane %v3741, 4
        %v3772 = vsel %vm535, %v3769, %v3771
        %v3773 = vrot.slane %v3742, 4
        %v3774 = vsel %vm535, %v3771, %v3773
        %v3775 = vrot.slane %v3743, 4
        %v3776 = vsel %vm535, %v3773, %v3775
        %v3777 = vrot.slane %v3744, 4
        %v3778 = vsel %vm535, %v3775, %v3777
        %v3779 = vrot.slane %v3745, 4
        %v3780 = vsel %vm535, %v3777, %v3779
        %v3781 = vrot.slane %v3746, 4
        %v3782 = vsel %vm535, %v3779, %v3781
        %v3783 = vrot.slane %v3747, 4
        %v3784 = vsel %vm535, %v3781, %v3783
        %v3785 = vrot.slane %v3748, 4
        %v3786 = vsel %vm535, %v3783, %v3785
        %3787 = vrot.lane.b32.xlu0 %v3764, 96
        %v3788 = vpop.permute.xlu0 %3787
        %3789 = vrot.lane.b32.xlu0 %v3766, 96
        %v3790 = vpop.permute.xlu0 %3789
        %3791 = vrot.lane.b32.xlu0 %v3768, 96
        %v3792 = vpop.permute.xlu0 %3791
        %3793 = vrot.lane.b32.xlu0 %v3770, 96
        %v3794 = vpop.permute.xlu0 %3793
        %3795 = vrot.lane.b32.xlu0 %v3772, 96
        %v3796 = vpop.permute.xlu0 %3795
        %3797 = vrot.lane.b32.xlu0 %v3774, 96
        %v3798 = vpop.permute.xlu0 %3797
        %3799 = vrot.lane.b32.xlu0 %v3776, 96
        %v3800 = vpop.permute.xlu0 %3799
        %3801 = vrot.lane.b32.xlu0 %v3778, 96
        %v3802 = vpop.permute.xlu0 %3801
        %3803 = vrot.lane.b32.xlu0 %v3780, 96
        %v3804 = vpop.permute.xlu0 %3803
        %3805 = vrot.lane.b32.xlu0 %v3782, 96
        %v3806 = vpop.permute.xlu0 %3805
        %3807 = vrot.lane.b32.xlu0 %v3784, 96
        %v3808 = vpop.permute.xlu0 %3807
        %3809 = vrot.lane.b32.xlu0 %v3786, 96
        %v3810 = vpop.permute.xlu0 %3809
        %3823 = vst.msk [vmem:[#allocation5 + $0x8] sm:$0xff] %vm3361, %v3788
        %3824 = vst.msk [vmem:[#allocation5 + $0x20] sm:$0xff] %vm3361, %v3790
        %3825 = vst.msk [vmem:[#allocation5 + $0x38] sm:$0xff] %vm3361, %v3792
        %3826 = vst.msk [vmem:[#allocation5 + $0x50] sm:$0xff] %vm3361, %v3794
        %3827 = vst.msk [vmem:[#allocation5 + $0x68] sm:$0xff] %vm3361, %v3796
        %3828 = vst.msk [vmem:[#allocation5 + $0x80] sm:$0xff] %vm3361, %v3798
        %3829 = vst.msk [vmem:[#allocation5 + $0x98] sm:$0xff] %vm3361, %v3800
        %3830 = vst.msk [vmem:[#allocation5 + $0xb0] sm:$0xff] %vm3361, %v3802
        %3831 = vst.msk [vmem:[#allocation5 + $0xc8] sm:$0xff] %vm3361, %v3804
        %3832 = vst.msk [vmem:[#allocation5 + $0xe0] sm:$0xff] %vm3361, %v3806
        %3833 = vst.msk [vmem:[#allocation5 + $0xf8] sm:$0xff] %vm3361, %v3808
        %3834 = vst.msk [vmem:[#allocation5 + $0x110] sm:$0xff] %vm3361, %v3810
        %v3835 = vld [vmem:[#allocation4 + $0x20] sm:$0xf0]
        %v3836 = vld [vmem:[#allocation4 + $0x28] sm:$0xff]
        %v3837 = vld [vmem:[#allocation4 + $0x30] sm:$0xff]
        %v3838 = vld [vmem:[#allocation4 + $0x38] sm:$0xff]
        %v3839 = vld [vmem:[#allocation4 + $0x40] sm:$0xff]
        %v3840 = vld [vmem:[#allocation4 + $0x48] sm:$0xff]
        %v3841 = vld [vmem:[#allocation4 + $0x50] sm:$0xff]
        %v3842 = vld [vmem:[#allocation4 + $0x58] sm:$0xff]
        %v3843 = vld [vmem:[#allocation4 + $0x60] sm:$0xff]
        %v3844 = vld [vmem:[#allocation4 + $0x68] sm:$0xff]
        %v3845 = vld [vmem:[#allocation4 + $0x70] sm:$0xff]
        %v3846 = vld [vmem:[#allocation4 + $0x78] sm:$0xff]
        %v3847 = vld [vmem:[#allocation4 + $0x80] sm:$0x1f]
        %v3849 = vshrl.u32 %v3835, 16
        %v3851 = vrot.slane %v3849, 4
        %v3852 = vshll.u32 %v3835, 16
        %v3854 = vrot.slane %v3852, 5
        %v3855 = vor.u32 %v3851, %v3854
        %v3857 = vshrl.u32 %v3836, 16
        %v3859 = vrot.slane %v3857, 4
        %v3860 = vshll.u32 %v3836, 16
        %v3862 = vrot.slane %v3860, 5
        %v3863 = vor.u32 %v3859, %v3862
        %v3864 = vsel %vm665, %v3855, %v3863
        %v3866 = vshrl.u32 %v3837, 16
        %v3868 = vrot.slane %v3866, 4
        %v3869 = vshll.u32 %v3837, 16
        %v3871 = vrot.slane %v3869, 5
        %v3872 = vor.u32 %v3868, %v3871
        %v3873 = vsel %vm665, %v3863, %v3872
        %v3875 = vshrl.u32 %v3838, 16
        %v3877 = vrot.slane %v3875, 4
        %v3878 = vshll.u32 %v3838, 16
        %v3880 = vrot.slane %v3878, 5
        %v3881 = vor.u32 %v3877, %v3880
        %v3882 = vsel %vm665, %v3872, %v3881
        %v3884 = vshrl.u32 %v3839, 16
        %v3886 = vrot.slane %v3884, 4
        %v3887 = vshll.u32 %v3839, 16
        %v3889 = vrot.slane %v3887, 5
        %v3890 = vor.u32 %v3886, %v3889
        %v3891 = vsel %vm665, %v3881, %v3890
        %v3893 = vshrl.u32 %v3840, 16
        %v3895 = vrot.slane %v3893, 4
        %v3896 = vshll.u32 %v3840, 16
        %v3898 = vrot.slane %v3896, 5
        %v3899 = vor.u32 %v3895, %v3898
        %v3900 = vsel %vm665, %v3890, %v3899
        %v3902 = vshrl.u32 %v3841, 16
        %v3904 = vrot.slane %v3902, 4
        %v3905 = vshll.u32 %v3841, 16
        %v3907 = vrot.slane %v3905, 5
        %v3908 = vor.u32 %v3904, %v3907
        %v3909 = vsel %vm665, %v3899, %v3908
        %v3911 = vshrl.u32 %v3842, 16
        %v3913 = vrot.slane %v3911, 4
        %v3914 = vshll.u32 %v3842, 16
        %v3916 = vrot.slane %v3914, 5
        %v3917 = vor.u32 %v3913, %v3916
        %v3918 = vsel %vm665, %v3908, %v3917
        %v3920 = vshrl.u32 %v3843, 16
        %v3922 = vrot.slane %v3920, 4
        %v3923 = vshll.u32 %v3843, 16
        %v3925 = vrot.slane %v3923, 5
        %v3926 = vor.u32 %v3922, %v3925
        %v3927 = vsel %vm665, %v3917, %v3926
        %v3929 = vshrl.u32 %v3844, 16
        %v3931 = vrot.slane %v3929, 4
        %v3932 = vshll.u32 %v3844, 16
        %v3934 = vrot.slane %v3932, 5
        %v3935 = vor.u32 %v3931, %v3934
        %v3936 = vsel %vm665, %v3926, %v3935
        %v3938 = vshrl.u32 %v3845, 16
        %v3940 = vrot.slane %v3938, 4
        %v3941 = vshll.u32 %v3845, 16
        %v3943 = vrot.slane %v3941, 5
        %v3944 = vor.u32 %v3940, %v3943
        %v3945 = vsel %vm665, %v3935, %v3944
        %v3947 = vshrl.u32 %v3846, 16
        %v3949 = vrot.slane %v3947, 4
        %v3950 = vshll.u32 %v3846, 16
        %v3952 = vrot.slane %v3950, 5
        %v3953 = vor.u32 %v3949, %v3952
        %v3954 = vsel %vm665, %v3944, %v3953
        %v3956 = vshrl.u32 %v3847, 16
        %v3958 = vrot.slane %v3956, 4
        %v3959 = vshll.u32 %v3847, 16
        %v3961 = vrot.slane %v3959, 5
        %v3962 = vor.u32 %v3958, %v3961
        %v3963 = vsel %vm665, %v3953, %v3962
        %3976 = vst.msk [vmem:[#allocation5 + $0x10] sm:$0xff] %vm2762, %v3864
        %3977 = vst.msk [vmem:[#allocation5 + $0x28] sm:$0xff] %vm2762, %v3873
        %3978 = vst.msk [vmem:[#allocation5 + $0x40] sm:$0xff] %vm2762, %v3882
        %3979 = vst.msk [vmem:[#allocation5 + $0x58] sm:$0xff] %vm2762, %v3891
        %3980 = vst.msk [vmem:[#allocation5 + $0x70] sm:$0xff] %vm2762, %v3900
        %3981 = vst.msk [vmem:[#allocation5 + $0x88] sm:$0xff] %vm2762, %v3909
        %3982 = vst.msk [vmem:[#allocation5 + $0xa0] sm:$0xff] %vm2762, %v3918
        %3983 = vst.msk [vmem:[#allocation5 + $0xb8] sm:$0xff] %vm2762, %v3927
        %3984 = vst.msk [vmem:[#allocation5 + $0xd0] sm:$0xff] %vm2762, %v3936
        %3985 = vst.msk [vmem:[#allocation5 + $0xe8] sm:$0xff] %vm2762, %v3945
        %3986 = vst.msk [vmem:[#allocation5 + $0x100] sm:$0xff] %vm2762, %v3954
        %3987 = vst.msk [vmem:[#allocation5 + $0x118] sm:$0xff] %vm2762, %v3963
        %v3988 = vld [vmem:[#allocation5] sm:$0xff]
        %v3989 = vld [vmem:[#allocation5 + $0x8] sm:$0xff]
        %v3990 = vld [vmem:[#allocation5 + $0x10] sm:$0xff]
        %v3991 = vld [vmem:[#allocation5 + $0x18] sm:$0xff]
        %v3992 = vld [vmem:[#allocation5 + $0x20] sm:$0xff]
        %v3993 = vld [vmem:[#allocation5 + $0x28] sm:$0xff]
        %v3994 = vld [vmem:[#allocation5 + $0x30] sm:$0xff]
        %v3995 = vld [vmem:[#allocation5 + $0x38] sm:$0xff]
        %v3996 = vld [vmem:[#allocation5 + $0x40] sm:$0xff]
        %v3997 = vld [vmem:[#allocation5 + $0x48] sm:$0xff]
        %v3998 = vld [vmem:[#allocation5 + $0x50] sm:$0xff]
        %v3999 = vld [vmem:[#allocation5 + $0x58] sm:$0xff]
        %v4000 = vld [vmem:[#allocation5 + $0x60] sm:$0xff]
        %v4001 = vld [vmem:[#allocation5 + $0x68] sm:$0xff]
        %v4002 = vld [vmem:[#allocation5 + $0x70] sm:$0xff]
        %v4003 = vld [vmem:[#allocation5 + $0x78] sm:$0xff]
        %v4004 = vld [vmem:[#allocation5 + $0x80] sm:$0xff]
        %v4005 = vld [vmem:[#allocation5 + $0x88] sm:$0xff]
        %v4006 = vld [vmem:[#allocation5 + $0x90] sm:$0xff]
        %v4007 = vld [vmem:[#allocation5 + $0x98] sm:$0xff]
        %v4008 = vld [vmem:[#allocation5 + $0xa0] sm:$0xff]
        %v4009 = vld [vmem:[#allocation5 + $0xa8] sm:$0xff]
        %v4010 = vld [vmem:[#allocation5 + $0xb0] sm:$0xff]
        %v4011 = vld [vmem:[#allocation5 + $0xb8] sm:$0xff]
        %v4012 = vld [vmem:[#allocation5 + $0xc0] sm:$0xff]
        %v4013 = vld [vmem:[#allocation5 + $0xc8] sm:$0xff]
        %v4014 = vld [vmem:[#allocation5 + $0xd0] sm:$0xff]
        %v4015 = vld [vmem:[#allocation5 + $0xd8] sm:$0xff]
        %v4016 = vld [vmem:[#allocation5 + $0xe0] sm:$0xff]
        %v4017 = vld [vmem:[#allocation5 + $0xe8] sm:$0xff]
        %v4018 = vld [vmem:[#allocation5 + $0xf0] sm:$0xff]
        %v4019 = vld [vmem:[#allocation5 + $0xf8] sm:$0xff]
        %v4020 = vld [vmem:[#allocation5 + $0x100] sm:$0xff]
        %v4021 = vld [vmem:[#allocation5 + $0x108] sm:$0xff]
        %v4022 = vld [vmem:[#allocation5 + $0x110] sm:$0xff]
        %v4023 = vld [vmem:[#allocation5 + $0x118] sm:$0xff]
        %v4024 = vld [vmem:[#allocation12] sm:$0xf]
        %v4025 = vld [vmem:[#allocation12 + $0x4] sm:$0xf]
        %v4026 = vld [vmem:[#allocation12 + $0x8] sm:$0xf]
        %v4027 = vld [vmem:[#allocation12 + $0xc] sm:$0xf]
        %v4028 = vld [vmem:[#allocation12 + $0x10] sm:$0xf]
        %v4029 = vld [vmem:[#allocation12 + $0x14] sm:$0xf]
        %v4030 = vld [vmem:[#allocation12 + $0x18] sm:$0xf]
        %v4031 = vld [vmem:[#allocation12 + $0x1c] sm:$0xf]
        %v4032 = vld [vmem:[#allocation12 + $0x20] sm:$0xf]
        %v4033 = vld [vmem:[#allocation12 + $0x24] sm:$0xf]
        %v4034 = vld [vmem:[#allocation12 + $0x28] sm:$0xf]
        %v4035 = vld [vmem:[#allocation12 + $0x2c] sm:$0xf]
        %v4036 = vld [vmem:[#allocation12 + $0x30] sm:$0xf]
        %v4037 = vld [vmem:[#allocation12 + $0x34] sm:$0xf]
        %v4038 = vld [vmem:[#allocation12 + $0x38] sm:$0xf]
        %v4039 = vld [vmem:[#allocation12 + $0x3c] sm:$0xf]
        %v4040 = vld [vmem:[#allocation12 + $0x40] sm:$0xf]
        %v4041 = vld [vmem:[#allocation12 + $0x44] sm:$0xf]
        %v4042 = vld [vmem:[#allocation12 + $0x48] sm:$0xf]
        %v4043 = vld [vmem:[#allocation12 + $0x4c] sm:$0xf]
        %v4044 = vld [vmem:[#allocation12 + $0x50] sm:$0xf]
        %v4045 = vld [vmem:[#allocation12 + $0x54] sm:$0xf]
        %v4046 = vld [vmem:[#allocation12 + $0x58] sm:$0xf]
        %v4047 = vld [vmem:[#allocation12 + $0x5c] sm:$0xf]
        %v4048 = vld [vmem:[#allocation12 + $0x60] sm:$0xf]
        %v4049 = vld [vmem:[#allocation12 + $0x64] sm:$0xf]
        %v4050 = vld [vmem:[#allocation12 + $0x68] sm:$0xf]
        %v4051 = vld [vmem:[#allocation12 + $0x6c] sm:$0xf]
        %v4052 = vld [vmem:[#allocation12 + $0x70] sm:$0xf]
        %v4053 = vld [vmem:[#allocation12 + $0x74] sm:$0xf]
        %v4054 = vld [vmem:[#allocation12 + $0x78] sm:$0xf]
        %v4055 = vld [vmem:[#allocation12 + $0x7c] sm:$0xf]
        %v4056 = vld [vmem:[#allocation12 + $0x80] sm:$0xf]
        %v4057 = vld [vmem:[#allocation12 + $0x84] sm:$0xf]
        %v4058 = vld [vmem:[#allocation12 + $0x88] sm:$0xf]
        %v4059 = vld [vmem:[#allocation12 + $0x8c] sm:$0xf]
        %v4060 = vld [vmem:[#allocation13] sm:$0x1]
        %v4062 = vlaneseq
        %v4063 = vshrl.u32 %v4062, 7
        %v4064 = vsub.s32 0, %v4063
        %v4065 = vrot.slane %v4060, %v4064
        %v4103 = vunpack.c.l.b16 %v4024
        %v4104 = vunpack.c.l.b16 %v4025
        %v4105 = vunpack.c.l.b16 %v4026
        %v4106 = vunpack.c.l.b16 %v4027
        %v4107 = vunpack.c.l.b16 %v4028
        %v4108 = vunpack.c.l.b16 %v4029
        %v4109 = vunpack.c.l.b16 %v4030
        %v4110 = vunpack.c.l.b16 %v4031
        %v4111 = vunpack.c.l.b16 %v4032
        %v4112 = vunpack.c.l.b16 %v4033
        %v4113 = vunpack.c.l.b16 %v4034
        %v4114 = vunpack.c.l.b16 %v4035
        %v4115 = vunpack.c.l.b16 %v4036
        %v4116 = vunpack.c.l.b16 %v4037
        %v4117 = vunpack.c.l.b16 %v4038
        %v4118 = vunpack.c.l.b16 %v4039
        %v4119 = vunpack.c.l.b16 %v4040
        %v4120 = vunpack.c.l.b16 %v4041
        %v4121 = vunpack.c.l.b16 %v4042
        %v4122 = vunpack.c.l.b16 %v4043
        %v4123 = vunpack.c.l.b16 %v4044
        %v4124 = vunpack.c.l.b16 %v4045
        %v4125 = vunpack.c.l.b16 %v4046
        %v4126 = vunpack.c.l.b16 %v4047
        %v4127 = vunpack.c.l.b16 %v4048
        %v4128 = vunpack.c.l.b16 %v4049
        %v4129 = vunpack.c.l.b16 %v4050
        %v4130 = vunpack.c.l.b16 %v4051
        %v4131 = vunpack.c.l.b16 %v4052
        %v4132 = vunpack.c.l.b16 %v4053
        %v4133 = vunpack.c.l.b16 %v4054
        %v4134 = vunpack.c.l.b16 %v4055
        %v4135 = vunpack.c.l.b16 %v4056
        %v4136 = vunpack.c.l.b16 %v4057
        %v4137 = vunpack.c.l.b16 %v4058
        %v4138 = vunpack.c.l.b16 %v4059
        %v4139 = vpack.c.b16 %v4104, %v4103
        %v4140 = vpack.c.b16 %v4106, %v4105
        %v4141 = vpack.c.b16 %v4108, %v4107
        %v4142 = vpack.c.b16 %v4110, %v4109
        %v4143 = vpack.c.b16 %v4112, %v4111
        %v4144 = vpack.c.b16 %v4114, %v4113
        %v4145 = vpack.c.b16 %v4116, %v4115
        %v4146 = vpack.c.b16 %v4118, %v4117
        %v4147 = vpack.c.b16 %v4120, %v4119
        %v4148 = vpack.c.b16 %v4122, %v4121
        %v4149 = vpack.c.b16 %v4124, %v4123
        %v4150 = vpack.c.b16 %v4126, %v4125
        %v4151 = vpack.c.b16 %v4128, %v4127
        %v4152 = vpack.c.b16 %v4130, %v4129
        %v4153 = vpack.c.b16 %v4132, %v4131
        %v4154 = vpack.c.b16 %v4134, %v4133
        %v4155 = vpack.c.b16 %v4136, %v4135
        %v4156 = vpack.c.b16 %v4138, %v4137
        %v4176 = vsel %vm2762, %v3990, 0
        %v4179 = vsel %vm2762, %v3993, 0
        %v4182 = vsel %vm2762, %v3996, 0
        %v4185 = vsel %vm2762, %v3999, 0
        %v4188 = vsel %vm2762, %v4002, 0
        %v4191 = vsel %vm2762, %v4005, 0
        %v4194 = vsel %vm2762, %v4008, 0
        %v4197 = vsel %vm2762, %v4011, 0
        %v4200 = vsel %vm2762, %v4014, 0
        %v4203 = vsel %vm2762, %v4017, 0
        %v4206 = vsel %vm2762, %v4020, 0
        %v4209 = vsel %vm2762, %v4023, 0
        %4211 = vmatprep.subr.bf16.mxu0 0
        %4212 = vmatpush1.bf16.msra.mxu0 %v4139
        %4213 = vmatprep.subr.bf16.mxu0 0
        %4214 = vmatpush1.bf16.msra.mxu0 %v4140
        %4215 = vmatprep.subr.bf16.mxu0 0
        %4216 = vmatpush1.bf16.msra.mxu0 %v4141
        %4217 = vmatprep.subr.bf16.mxu0 0
        %4218 = vmatpush1.bf16.msra.mxu0 %v4142
        %4219 = vmatprep.subr.bf16.mxu0 0
        %4220 = vmatpush1.bf16.msra.mxu0 %v4143
        %4221 = vmatprep.subr.bf16.mxu0 0
        %4222 = vmatpush1.bf16.msra.mxu0 %v4144
        %4223 = vmatprep.subr.bf16.mxu0 0
        %4224 = vmatpush1.bf16.msra.mxu0 %v4145
        %4225 = vmatprep.subr.bf16.mxu0 0
        %4226 = vmatpush1.bf16.msra.mxu0 %v4146
        %4227 = vmatprep.subr.bf16.mxu0 0
        %4228 = vmatpush1.bf16.msra.mxu0 %v4147
        %4229 = vmatprep.subr.bf16.mxu0 0
        %4230 = vmatpush1.bf16.msra.mxu0 %v4148
        %4231 = vmatprep.subr.bf16.mxu0 0
        %4232 = vmatpush1.bf16.msra.mxu0 %v4149
        %4233 = vmatprep.subr.bf16.mxu0 0
        %4234 = vmatpush1.bf16.msra.mxu0 %v4150
        %4235 = vmatprep.subr.bf16.mxu0 0
        %4236 = vmatpush1.bf16.msra.mxu0 %v4151
        %4237 = vmatprep.subr.bf16.mxu0 0
        %4238 = vmatpush1.bf16.msra.mxu0 %v4152
        %4239 = vmatprep.subr.bf16.mxu0 0
        %4240 = vmatpush1.bf16.msra.mxu0 %v4153
        %4241 = vmatprep.subr.bf16.mxu0 0
        %4242 = vmatpush1.bf16.msra.mxu0 %v4154
        %4243 = vmatprep.mubr.bf16.mxu0 %v3989
        %4244 = vmatmul.mubr.bf16.gmra.mrb[0].mxu0 %v3988
        %v4245 = vpop.f32.mrb[0].mxu0
        %v4246 = vadd.f32 %v4065, %v4245
        %v4247 = vpop.f32.mrb[0].mxu0
        %v4248 = vpop.f32.mrb[0].mxu0
        %v4249 = vadd.f32 %v4065, %v4248
        %v4250 = vpop.f32.mrb[0].mxu0
        %4251 = vmatprep.mubr.bf16.mxu0 %v3992
        %4252 = vmatmul.mubr.bf16.gmra.mrb[0].mxu0 %v3991
        %v4253 = vpop.f32.mrb[0].mxu0
        %v4254 = vadd.f32 %v4065, %v4253
        %v4255 = vpop.f32.mrb[0].mxu0
        %v4256 = vpop.f32.mrb[0].mxu0
        %v4257 = vadd.f32 %v4065, %v4256
        %v4258 = vpop.f32.mrb[0].mxu0
        %4259 = vmatprep.mubr.bf16.mxu0 %v3995
        %4260 = vmatmul.mubr.bf16.gmra.mrb[0].mxu0 %v3994
        %v4261 = vpop.f32.mrb[0].mxu0
        %v4262 = vadd.f32 %v4065, %v4261
        %v4263 = vpop.f32.mrb[0].mxu0
        %v4264 = vpop.f32.mrb[0].mxu0
        %v4265 = vadd.f32 %v4065, %v4264
        %v4266 = vpop.f32.mrb[0].mxu0
        %4267 = vmatprep.mubr.bf16.mxu0 %v3998
        %4268 = vmatmul.mubr.bf16.gmra.mrb[0].mxu0 %v3997
        %v4269 = vpop.f32.mrb[0].mxu0
        %v4270 = vadd.f32 %v4065, %v4269
        %v4271 = vpop.f32.mrb[0].mxu0
        %v4272 = vpop.f32.mrb[0].mxu0
        %v4273 = vadd.f32 %v4065, %v4272
        %v4274 = vpop.f32.mrb[0].mxu0
        %4275 = vmatprep.mubr.bf16.mxu0 %v4001
        %4276 = vmatmul.mubr.bf16.gmra.mrb[0].mxu0 %v4000
        %v4277 = vpop.f32.mrb[0].mxu0
        %v4278 = vadd.f32 %v4065, %v4277
        %v4279 = vpop.f32.mrb[0].mxu0
        %v4280 = vpop.f32.mrb[0].mxu0
        %v4281 = vadd.f32 %v4065, %v4280
        %v4282 = vpop.f32.mrb[0].mxu0
        %4283 = vmatprep.mubr.bf16.mxu0 %v4004
        %4284 = vmatmul.mubr.bf16.gmra.mrb[0].mxu0 %v4003
        %v4285 = vpop.f32.mrb[0].mxu0
        %v4286 = vadd.f32 %v4065, %v4285
        %v4287 = vpop.f32.mrb[0].mxu0
        %v4288 = vpop.f32.mrb[0].mxu0
        %v4289 = vadd.f32 %v4065, %v4288
        %v4290 = vpop.f32.mrb[0].mxu0
        %4291 = vmatprep.mubr.bf16.mxu0 %v4007
        %4292 = vmatmul.mubr.bf16.gmra.mrb[0].mxu0 %v4006
        %v4293 = vpop.f32.mrb[0].mxu0
        %v4294 = vadd.f32 %v4065, %v4293
        %v4295 = vpop.f32.mrb[0].mxu0
        %v4296 = vpop.f32.mrb[0].mxu0
        %v4297 = vadd.f32 %v4065, %v4296
        %v4298 = vpop.f32.mrb[0].mxu0
        %4299 = vmatprep.mubr.bf16.mxu0 %v4010
        %4300 = vmatmul.mubr.bf16.gmra.mrb[0].mxu0 %v4009
        %v4301 = vpop.f32.mrb[0].mxu0
        %v4302 = vadd.f32 %v4065, %v4301
        %v4303 = vpop.f32.mrb[0].mxu0
        %v4304 = vpop.f32.mrb[0].mxu0
        %v4305 = vadd.f32 %v4065, %v4304
        %v4306 = vpop.f32.mrb[0].mxu0
        %4307 = vmatprep.mubr.bf16.mxu0 %v4013
        %4308 = vmatmul.mubr.bf16.gmra.mrb[0].mxu0 %v4012
        %v4309 = vpop.f32.mrb[0].mxu0
        %v4310 = vadd.f32 %v4065, %v4309
        %v4311 = vpop.f32.mrb[0].mxu0
        %v4312 = vpop.f32.mrb[0].mxu0
        %v4313 = vadd.f32 %v4065, %v4312
        %v4314 = vpop.f32.mrb[0].mxu0
        %4315 = vmatprep.mubr.bf16.mxu0 %v4016
        %4316 = vmatmul.mubr.bf16.gmra.mrb[0].mxu0 %v4015
        %v4317 = vpop.f32.mrb[0].mxu0
        %v4318 = vadd.f32 %v4065, %v4317
        %v4319 = vpop.f32.mrb[0].mxu0
        %v4320 = vpop.f32.mrb[0].mxu0
        %v4321 = vadd.f32 %v4065, %v4320
        %v4322 = vpop.f32.mrb[0].mxu0
        %4323 = vmatprep.mubr.bf16.mxu0 %v4019
        %4324 = vmatmul.mubr.bf16.gmra.mrb[0].mxu0 %v4018
        %v4325 = vpop.f32.mrb[0].mxu0
        %v4326 = vadd.f32 %v4065, %v4325
        %v4327 = vpop.f32.mrb[0].mxu0
        %v4328 = vpop.f32.mrb[0].mxu0
        %v4329 = vadd.f32 %v4065, %v4328
        %v4330 = vpop.f32.mrb[0].mxu0
        %4331 = vmatprep.mubr.bf16.mxu0 %v4022
        %4332 = vmatmul.mubr.bf16.gmra.mrb[0].mxu0 %v4021
        %v4333 = vpop.f32.mrb[0].mxu0
        %v4334 = vadd.f32 %v4065, %v4333
        %v4335 = vpop.f32.mrb[0].mxu0
        %v4336 = vpop.f32.mrb[0].mxu0
        %v4337 = vadd.f32 %v4065, %v4336
        %v4338 = vpop.f32.mrb[0].mxu0
        %4339 = vdwg.mxu0
        %4340 = vmatprep.subr.bf16.mxu0 0
        %4341 = vmatpush1.bf16.msra.mxu0 %v4155
        %4342 = vmatprep.subr.bf16.mxu0 0
        %4343 = vmatpush1.bf16.msra.mxu0 %v4156
        %4344 = vmatprep.subr.bf16.mxu0 0
        %4345 = vmatpush1.bf16.msra.mxu0 0
        %4346 = vmatprep.subr.bf16.mxu0 0
        %4347 = vmatpush1.bf16.msra.mxu0 0
        %4348 = vmatprep.subr.bf16.mxu0 0
        %4349 = vmatpush1.bf16.msra.mxu0 0
        %4350 = vmatprep.subr.bf16.mxu0 0
        %4351 = vmatpush1.bf16.msra.mxu0 0
        %4352 = vmatprep.subr.bf16.mxu0 0
        %4353 = vmatpush1.bf16.msra.mxu0 0
        %4354 = vmatprep.subr.bf16.mxu0 0
        %4355 = vmatpush1.bf16.msra.mxu0 0
        %4356 = vmatprep.subr.bf16.mxu0 0
        %4357 = vmatpush1.bf16.msra.mxu0 0
        %4358 = vmatprep.subr.bf16.mxu0 0
        %4359 = vmatpush1.bf16.msra.mxu0 0
        %4360 = vmatprep.subr.bf16.mxu0 0
        %4361 = vmatpush1.bf16.msra.mxu0 0
        %4362 = vmatprep.subr.bf16.mxu0 0
        %4363 = vmatpush1.bf16.msra.mxu0 0
        %4364 = vmatprep.subr.bf16.mxu0 0
        %4365 = vmatpush1.bf16.msra.mxu0 0
        %4366 = vmatprep.subr.bf16.mxu0 0
        %4367 = vmatpush1.bf16.msra.mxu0 0
        %4368 = vmatprep.subr.bf16.mxu0 0
        %4369 = vmatpush1.bf16.msra.mxu0 0
        %4370 = vmatprep.subr.bf16.mxu0 0
        %4371 = vmatpush1.bf16.msra.mxu0 0
        %4372 = vmatprep.mubr.bf16.mxu0 0
        %4373 = vmatmul.mubr.bf16.gmra.mrb[0].mxu0 %v4176
        %v4374 = vpop.f32.mrb[0].mxu0
        %v4375 = vadd.f32 %v4246, %v4374
        %v4376 = vpop.f32.mrb[0].mxu0
        %v4377 = vpop.f32.mrb[0].mxu0
        %v4378 = vadd.f32 %v4249, %v4377
        %v4379 = vpop.f32.mrb[0].mxu0
        %4380 = vmatprep.mubr.bf16.mxu0 0
        %4381 = vmatmul.mubr.bf16.gmra.mrb[0].mxu0 %v4179
        %v4382 = vpop.f32.mrb[0].mxu0
        %v4383 = vadd.f32 %v4254, %v4382
        %v4384 = vpop.f32.mrb[0].mxu0
        %v4385 = vpop.f32.mrb[0].mxu0
        %v4386 = vadd.f32 %v4257, %v4385
        %v4387 = vpop.f32.mrb[0].mxu0
        %4388 = vmatprep.mubr.bf16.mxu0 0
        %4389 = vmatmul.mubr.bf16.gmra.mrb[0].mxu0 %v4182
        %v4390 = vpop.f32.mrb[0].mxu0
        %v4391 = vadd.f32 %v4262, %v4390
        %v4392 = vpop.f32.mrb[0].mxu0
        %v4393 = vpop.f32.mrb[0].mxu0
        %v4394 = vadd.f32 %v4265, %v4393
        %v4395 = vpop.f32.mrb[0].mxu0
        %4396 = vmatprep.mubr.bf16.mxu0 0
        %4397 = vmatmul.mubr.bf16.gmra.mrb[0].mxu0 %v4185
        %v4398 = vpop.f32.mrb[0].mxu0
        %v4399 = vadd.f32 %v4270, %v4398
        %v4400 = vpop.f32.mrb[0].mxu0
        %v4401 = vpop.f32.mrb[0].mxu0
        %v4402 = vadd.f32 %v4273, %v4401
        %v4403 = vpop.f32.mrb[0].mxu0
        %4404 = vmatprep.mubr.bf16.mxu0 0
        %4405 = vmatmul.mubr.bf16.gmra.mrb[0].mxu0 %v4188
        %v4406 = vpop.f32.mrb[0].mxu0
        %v4407 = vadd.f32 %v4278, %v4406
        %v4408 = vpop.f32.mrb[0].mxu0
        %v4409 = vpop.f32.mrb[0].mxu0
        %v4410 = vadd.f32 %v4281, %v4409
        %v4411 = vpop.f32.mrb[0].mxu0
        %4412 = vmatprep.mubr.bf16.mxu0 0
        %4413 = vmatmul.mubr.bf16.gmra.mrb[0].mxu0 %v4191
        %v4414 = vpop.f32.mrb[0].mxu0
        %v4415 = vadd.f32 %v4286, %v4414
        %v4416 = vpop.f32.mrb[0].mxu0
        %v4417 = vpop.f32.mrb[0].mxu0
        %v4418 = vadd.f32 %v4289, %v4417
        %v4419 = vpop.f32.mrb[0].mxu0
        %4420 = vmatprep.mubr.bf16.mxu0 0
        %4421 = vmatmul.mubr.bf16.gmra.mrb[0].mxu0 %v4194
        %v4422 = vpop.f32.mrb[0].mxu0
        %v4423 = vadd.f32 %v4294, %v4422
        %v4424 = vpop.f32.mrb[0].mxu0
        %v4425 = vpop.f32.mrb[0].mxu0
        %v4426 = vadd.f32 %v4297, %v4425
        %v4427 = vpop.f32.mrb[0].mxu0
        %4428 = vmatprep.mubr.bf16.mxu0 0
        %4429 = vmatmul.mubr.bf16.gmra.mrb[0].mxu0 %v4197
        %v4430 = vpop.f32.mrb[0].mxu0
        %v4431 = vadd.f32 %v4302, %v4430
        %v4432 = vpop.f32.mrb[0].mxu0
        %v4433 = vpop.f32.mrb[0].mxu0
        %v4434 = vadd.f32 %v4305, %v4433
        %v4435 = vpop.f32.mrb[0].mxu0
        %4436 = vmatprep.mubr.bf16.mxu0 0
        %4437 = vmatmul.mubr.bf16.gmra.mrb[0].mxu0 %v4200
        %v4438 = vpop.f32.mrb[0].mxu0
        %v4439 = vadd.f32 %v4310, %v4438
        %v4440 = vpop.f32.mrb[0].mxu0
        %v4441 = vpop.f32.mrb[0].mxu0
        %v4442 = vadd.f32 %v4313, %v4441
        %v4443 = vpop.f32.mrb[0].mxu0
        %4444 = vmatprep.mubr.bf16.mxu0 0
        %4445 = vmatmul.mubr.bf16.gmra.mrb[0].mxu0 %v4203
        %v4446 = vpop.f32.mrb[0].mxu0
        %v4447 = vadd.f32 %v4318, %v4446
        %v4448 = vpop.f32.mrb[0].mxu0
        %v4449 = vpop.f32.mrb[0].mxu0
        %v4450 = vadd.f32 %v4321, %v4449
        %v4451 = vpop.f32.mrb[0].mxu0
        %4452 = vmatprep.mubr.bf16.mxu0 0
        %4453 = vmatmul.mubr.bf16.gmra.mrb[0].mxu0 %v4206
        %v4454 = vpop.f32.mrb[0].mxu0
        %v4455 = vadd.f32 %v4326, %v4454
        %v4456 = vpop.f32.mrb[0].mxu0
        %v4457 = vpop.f32.mrb[0].mxu0
        %v4458 = vadd.f32 %v4329, %v4457
        %v4459 = vpop.f32.mrb[0].mxu0
        %4460 = vmatprep.mubr.bf16.mxu0 0
        %4461 = vmatmul.mubr.bf16.gmra.mrb[0].mxu0 %v4209
        %v4462 = vpop.f32.mrb[0].mxu0
        %v4463 = vadd.f32 %v4334, %v4462
        %v4464 = vpop.f32.mrb[0].mxu0
        %v4465 = vpop.f32.mrb[0].mxu0
        %v4466 = vadd.f32 %v4337, %v4465
        %v4467 = vpop.f32.mrb[0].mxu0
        %4468 = vdwg.mxu0
        %v4469 = vmax.f32 %v4375, 0.0
        %v4470 = vmax.f32 %v4378, 0.0
        %v4471 = vmax.f32 %v4383, 0.0
        %v4472 = vmax.f32 %v4386, 0.0
        %v4473 = vmax.f32 %v4391, 0.0
        %v4474 = vmax.f32 %v4394, 0.0
        %v4475 = vmax.f32 %v4399, 0.0
        %v4476 = vmax.f32 %v4402, 0.0
        %v4477 = vmax.f32 %v4407, 0.0
        %v4478 = vmax.f32 %v4410, 0.0
        %v4479 = vmax.f32 %v4415, 0.0
        %v4480 = vmax.f32 %v4418, 0.0
        %v4481 = vmax.f32 %v4423, 0.0
        %v4482 = vmax.f32 %v4426, 0.0
        %v4483 = vmax.f32 %v4431, 0.0
        %v4484 = vmax.f32 %v4434, 0.0
        %v4485 = vmax.f32 %v4439, 0.0
        %v4486 = vmax.f32 %v4442, 0.0
        %v4487 = vmax.f32 %v4447, 0.0
        %v4488 = vmax.f32 %v4450, 0.0
        %v4489 = vmax.f32 %v4455, 0.0
        %v4490 = vmax.f32 %v4458, 0.0
        %v4491 = vmax.f32 %v4463, 0.0
        %v4492 = vmax.f32 %v4466, 0.0
        %vm4493 = vcmask 261122
        %4494 = vst.msk [vmem:[%s245 - $0x2] sm:$0xfc] %vm4493, %v4469
        %4495 = vst.msk [vmem:[%s245 + $0x6] sm:$0xff] %vm2762, %v4470
        %vm4496 = vcmask 254976
        %4497 = vst.msk [vmem:[%s245 + $0xe] sm:$0x3] %vm4496, %v4471
        %4498 = vst.msk [vmem:[%s245 + $0xe] sm:$0xfc] %vm4493, %v4472
        %4499 = vst.msk [vmem:[%s245 + $0x16] sm:$0xff] %vm2762, %v4473
        %4500 = vst.msk [vmem:[%s245 + $0x1e] sm:$0x3] %vm4496, %v4474
        %4501 = vst.msk [vmem:[%s245 + $0x1e] sm:$0xfc] %vm4493, %v4475
        %4502 = vst.msk [vmem:[%s245 + $0x26] sm:$0xff] %vm2762, %v4476
        %4503 = vst.msk [vmem:[%s245 + $0x2e] sm:$0x3] %vm4496, %v4477
        %4504 = vst.msk [vmem:[%s245 + $0x2e] sm:$0xfc] %vm4493, %v4478
        %4505 = vst.msk [vmem:[%s245 + $0x36] sm:$0xff] %vm2762, %v4479
        %4506 = vst.msk [vmem:[%s245 + $0x3e] sm:$0x3] %vm4496, %v4480
        %4507 = vst.msk [vmem:[%s245 + $0x3e] sm:$0xfc] %vm4493, %v4481
        %4508 = vst.msk [vmem:[%s245 + $0x46] sm:$0xff] %vm2762, %v4482
        %4509 = vst.msk [vmem:[%s245 + $0x4e] sm:$0x3] %vm4496, %v4483
        %4510 = vst.msk [vmem:[%s245 + $0x4e] sm:$0xfc] %vm4493, %v4484
        %4511 = vst.msk [vmem:[%s245 + $0x56] sm:$0xff] %vm2762, %v4485
        %4512 = vst.msk [vmem:[%s245 + $0x5e] sm:$0x3] %vm4496, %v4486
        %4513 = vst.msk [vmem:[%s245 + $0x5e] sm:$0xfc] %vm4493, %v4487
        %4514 = vst.msk [vmem:[%s245 + $0x66] sm:$0xff] %vm2762, %v4488
        %4515 = vst.msk [vmem:[%s245 + $0x6e] sm:$0x3] %vm4496, %v4489
        %4516 = vst.msk [vmem:[%s245 + $0x6e] sm:$0xfc] %vm4493, %v4490
        %4517 = vst.msk [vmem:[%s245 + $0x76] sm:$0xff] %vm2762, %v4491
        %4518 = vst.msk [vmem:[%s245 + $0x7e] sm:$0x3] %vm4496, %v4492
        %s4519 = sand.u32 %s128, 1
        %s4520 = scalar_lea.sflag [#allocation9], %s4519
        %s4521 = sand.u32 %s128, 1
        %s4522 = smul.addr %s4521, 128
        %s4523 = scalar_lea.vmem [#allocation15], %s4522
        // Predicated region
        $region57: #{unet_block_forward.3} parent=35 // pred_check
          %p4524 = pneg %p138
        $region58: #{unet_block_forward.3} parent=35 // pred_check_branch
          %4526 = sbr.rel (%p4524) target = $region60
        $region59: #{unet_block_forward.3} parent=35 // pred_region
          %s4527 = smul.u32 8, %s27
          %s4529 = ssub.s32 2048, 2048
          %4530 = vsyncadd %s4520, %s4529
          %s4531 = smul.addr %s4527, 2
          %s4532 = smul.addr %s26, 32
          %s4533 = sadd.s32 %s4531, %s4532
          %s4534 = smul.addr %s4533, 128
          %s4535 = scalar_lea.hbm %s5, %s4534
          %s4536 = sshll.u32 %s4523, 4
          %s4537 = int_to_ptr.vmem [resolvable:$true] %s4536
          %4542 = dma.vmem_to_hbm [thread:$0]  %s4537, 2048, %s4535, %s4520, 128, 128, 8
        $region60: #{unet_block_forward.3} parent=35 // pred_fallthru
          _
      $region36: #{unet_block_forward.3} parent=5 // pred_fallthru
        _
      %p4543 = scmp.le.s32.totalorder 2, %s17
      // Predicated region
      $region61: #{unet_block_forward.3} parent=5 // pred_check
        %p4544 = pneg %p4543
      $region62: #{unet_block_forward.3} parent=5 // pred_check_branch
        %4546 = sbr.rel (%p4544) target = $region64
      $region63: #{unet_block_forward.3} parent=5 // pred_region
        %s4547 = ssub.s32 %s17, 2
        // Predicated region
        $region65: #{unet_block_forward.3} parent=63 // pred_check
          %p4548 = pneg %p144
        $region66: #{unet_block_forward.3} parent=63 // pred_check_branch
          %4550 = sbr.rel (%p4548) target = $region68
        $region67: #{unet_block_forward.3} parent=63 // pred_region
          %s4551 = sand.u32 %s129, 1
          %s4552 = scalar_lea.sflag [#allocation9], %s4551
          %s4553 = sand.u32 %s129, 1
          %s4554 = smul.addr %s4553, 128
          %s4555 = scalar_lea.vmem [#allocation15], %s4554
          %4556 = dma.done %s4552, 2048
        $region68: #{unet_block_forward.3} parent=63 // pred_fallthru
          _
      $region64: #{unet_block_forward.3} parent=5 // pred_fallthru
        _
    $region6: #{unet_block_forward.3} parent=1 // loop_footer
      %s21 = sadd.s32 1, %s17
    $region7: #{unet_block_forward.3} parent=1 // loop_footer_branch
      %16 = sbr.rel target = $region3
    $region8: #{unet_block_forward.3} parent=1 // loop_exit
      _
    %4557 = vsyncpa [#allocation8], 1
    %s4558 = scalar_lea.sflag [#allocation8], 1
    %4559 = vsyncpa %s4558, 1
    %4560 = vsyncpa [#allocation11], 1
    %4561 = vsyncpa [#allocation14], 1
    %4562 = vsyncpa [#allocation9], 1
    %s4563 = scalar_lea.sflag [#allocation9], 1
    %4564 = vsyncpa %s4563, 1
  %4565 = vsyncmov [#allocation6]
  %s4566 = vpop.sfrf %4565
  %p4567 = scmp.eq.s32.totalorder %s4566, 0
  %p4568 = pneg %p4567
  %4570 = shalt.err (%p4568)

</llo_original>
